<compile_context>
chip_gen: v7x
topology: tpu7x:2x2x1
jax: 0.10.0
libtpu: 0.0.40
codegen_flags: <defaults>
</compile_context>

<pallas_src>
import jax
import jax.numpy as jnp
import numpy as np
from jax.experimental import pallas as pl
from jax.experimental.pallas import tpu as pltpu


# --------------------------------------------------------------------------------
# Host-side: express `conv2d(in=1ch, out=1ch, k=7, pad=3, no bias)` as a matmul.
# conv_out_flat[p] = sum_q in_flat[q] * T[q, p]  (zero padding -> missing taps = 0).
# --------------------------------------------------------------------------------
def _conv7x7_as_matmul(kc, H, W):
    kc = np.asarray(kc, dtype=np.float32)                  # (7, 7)
    HW = H * W
    T = np.zeros((HW, HW), dtype=np.float32)
    hp, wp = np.meshgrid(np.arange(H), np.arange(W), indexing="ij")  # output coords
    for i in range(7):
        for j in range(7):
            hq = hp + i - 3
            wq = wp + j - 3
            valid = (hq >= 0) & (hq < H) & (wq >= 0) & (wq < W)
            p_idx = (hp * W + wp)[valid]
            q_idx = (hq * W + wq)[valid]
            T[q_idx, p_idx] = kc[i, j]
    return T


# --------------------------------------------------------------------------------
# Fused Gate kernel: one grid step == Nb samples. Everything stays in VMEM/vregs.
# --------------------------------------------------------------------------------
def gate_kernel(x_ref, w1t_ref, b1_ref, w2_ref, b2_ref, tcomb_ref, bnb_ref,
                o_ref, comp_ref):
    nb, _, hw = x_ref.shape
    inv_hw = 1.0 / float(hw)

    w1t = w1t_ref[...]                                     # (C, Cr) = W1^T
    b1 = b1_ref[...]                                       # (1, Cr)
    w2 = w2_ref[...]                                       # (C, Cr)
    b2 = b2_ref[...]                                       # (C, 1)

    # ---------- Pass 1 (per sample): ChannelGate on the VPU ----------
    # Stash y = x*sigmoid(att) into the output VMEM block and the pooled spatial
    # stats into the comp scratch; nothing per-sample stays live across iterations.
    for i in range(nb):                                    # static, fully unrolled
        x = x_ref[i].astype(jnp.float32)                   # (C, HW), HW on lanes
        x_max = jnp.max(x, axis=1, keepdims=True)          # (C, 1)  lane reduce
        x_mean = jnp.sum(x, axis=1, keepdims=True) * inv_hw
        # layer 1: (C,Cr)*(C,1) broadcast -> sublane reduce -> (1,Cr)
        h_max = jnp.maximum(jnp.sum(w1t * x_max, axis=0, keepdims=True) + b1, 0.0)
        h_mean = jnp.maximum(jnp.sum(w1t * x_mean, axis=0, keepdims=True) + b1, 0.0)
        # layer 2: W2 @ (h_max + h_mean) + 2*b2 -> (C,1); lane reduce over Cr
        att = jnp.sum(w2 * (h_max + h_mean), axis=1, keepdims=True) + 2.0 * b2
        y = x * jax.nn.sigmoid(att)                        # (C, HW)
        o_ref[i] = y.astype(o_ref.dtype)                   # stash channel-gated act.
        c_max = jnp.max(y, axis=0, keepdims=True)          # (1, HW) sublane reduce
        c_sum = jnp.sum(y, axis=0, keepdims=True)          # (1, HW); 1/C folded in T
        comp_ref[pl.ds(i, 1), 0:hw] = c_max
        comp_ref[pl.ds(i, 1), hw:2 * hw] = c_sum

    # ---------- One merged spatial-conv matmul on the MXU ----------
    # (Nb, 2*HW) x (2*HW, HW) in bf16, f32 accumulate. BN scale + 1/C are folded
    # into the combined Toeplitz matrix; BN shift added here.
    comp = comp_ref[...].astype(jnp.bfloat16)
    z = jnp.dot(comp, tcomb_ref[...],
                preferred_element_type=jnp.float32) + bnb_ref[0]   # (Nb, HW)
    s = jax.nn.sigmoid(z)

    # ---------- Pass 2 (per sample): apply the SpatialGate scale ----------
    for i in range(nb):
        o_ref[i] = (o_ref[i].astype(jnp.float32) * s[i:i + 1, :]).astype(o_ref.dtype)


# --------------------------------------------------------------------------------
# Wrappers
# --------------------------------------------------------------------------------
def prepare_gate_params(params, H, W):
    """One-time host-side weight preprocessing."""
    w1 = jnp.asarray(params["w1"], jnp.float32)            # (Cr, C) PyTorch layout
    b1 = jnp.asarray(params["b1"], jnp.float32)            # (Cr,)
    w2 = jnp.asarray(params["w2"], jnp.float32)            # (C, Cr)
    b2 = jnp.asarray(params["b2"], jnp.float32)            # (C,)
    conv_w = np.asarray(params["conv_w"], np.float32)      # (1, 2, 7, 7)
    bn_a = float(params["bn_a"])
    bn_b = float(params["bn_b"])
    Cr, C = w1.shape
    # Combined Toeplitz matrix: [max-channel ; mean-channel] stacked on the K axis.
    # BN scale folded into both halves, 1/C (channel mean) folded into the mean half.
    t_max = bn_a * _conv7x7_as_matmul(conv_w[0, 0], H, W)              # (HW, HW)
    t_mean = (bn_a / float(C)) * _conv7x7_as_matmul(conv_w[0, 1], H, W)
    t_comb = jnp.asarray(np.vstack([t_max, t_mean]), jnp.bfloat16)     # (2*HW, HW)
    return dict(
        w1t=jnp.transpose(w1),                             # (C, Cr)
        b1=b1.reshape(1, Cr),
        w2=w2,                                             # (C, Cr)
        b2=b2.reshape(C, 1),
        t_comb=t_comb,
        bnb=jnp.array([bn_b], dtype=jnp.float32),
    )


def _make_gate_call(n_pad, C, HW, Cr, Nb, dtype, single_buffer_weights):
    def wspec(shape):
        zero_map = lambda g, _s=shape: (0,) * len(_s)
        if single_buffer_weights:
            # Grid-invariant inputs: single-buffer to halve their VMEM footprint.
            return pl.BlockSpec(shape, zero_map, pipeline_mode=pl.Buffered(1))
        return pl.BlockSpec(shape, zero_map)

    return pl.pallas_call(
        gate_kernel,
        out_shape=jax.ShapeDtypeStruct((n_pad, C, HW), dtype),
        grid=(n_pad // Nb,),
        in_specs=[
            pl.BlockSpec((Nb, C, HW), lambda g: (g, 0, 0)),     # x (Nb samples/step)
            wspec((C, Cr)),                                      # W1^T
            wspec((1, Cr)),                                      # b1
            wspec((C, Cr)),                                      # W2
            wspec((C, 1)),                                       # b2
            wspec((2 * HW, HW)),                                 # combined Toeplitz
            pl.BlockSpec(memory_space=pltpu.MemorySpace.SMEM),   # BN shift scalar
        ],
        out_specs=pl.BlockSpec((Nb, C, HW), lambda g: (g, 0, 0)),
        scratch_shapes=[pltpu.VMEM((Nb, 2 * HW), jnp.float32)],  # pooled rows
        compiler_params=pltpu.CompilerParams(
            dimension_semantics=("parallel",),
            vmem_limit_bytes=16 * 1024 * 1024,   # explicit, safe on v5e/v6e/v7x
        ),
    )


def gate_forward(x, prep, block_n=8):
    N, C, H, W = x.shape
    HW = H * W
    Cr = prep["w1t"].shape[1]
    Nb = int(max(1, min(block_n, N)))
    n_pad = ((N + Nb - 1) // Nb) * Nb
    xr = x.reshape(N, C, HW)                               # layout glue only
    if n_pad != N:
        xr = jnp.concatenate([xr, jnp.zeros((n_pad - N, C, HW), x.dtype)], axis=0)
    args = (xr, prep["w1t"], prep["b1"], prep["w2"], prep["b2"],
            prep["t_comb"], prep["bnb"])
    try:
        out = _make_gate_call(n_pad, C, HW, Cr, Nb, x.dtype,
                              single_buffer_weights=True)(*args)
    except Exception:
        # pipeline_mode=pl.Buffered(1) unsupported on this jax build -> default bufs.
        out = _make_gate_call(n_pad, C, HW, Cr, Nb, x.dtype,
                              single_buffer_weights=False)(*args)
    return out[:N].reshape(N, C, H, W)


# --------------------------------------------------------------------------------
# Pure-JAX reference (matches the PyTorch module semantics)
# --------------------------------------------------------------------------------
def gate_reference(x, params):
    w1, b1, w2, b2 = params["w1"], params["b1"], params["w2"], params["b2"]
    x_max = jnp.max(x, axis=(2, 3))
    x_mean = jnp.mean(x, axis=(2, 3))

    def mlp(v):
        h = jnp.maximum(v @ w1.T + b1, 0.0)
        return h @ w2.T + b2

    att = mlp(x_max) + mlp(x_mean)
    y = x * jax.nn.sigmoid(att)[:, :, None, None]

    c_max = jnp.max(y, axis=1, keepdims=True)
    c_mean = jnp.mean(y, axis=1, keepdims=True)
    comp = jnp.concatenate([c_max, c_mean], axis=1)
    conv = jax.lax.conv_general_dilated(
        comp, params["conv_w"], window_strides=(1, 1), padding=((3, 3), (3, 3)),
        dimension_numbers=("NCHW", "OIHW", "NCHW"))
    z = params["bn_a"] * conv + params["bn_b"]
    return y * jax.nn.sigmoid(z)


if __name__ == "__main__":
    key = jax.random.PRNGKey(0)
    N, C, H, W = 4, 32, 16, 16          # gate_channels=32 (module default), reduction=4
    Cr = C // 4
    ks = jax.random.split(key, 6)
    x = jax.random.normal(ks[0], (N, C, H, W), dtype=jnp.float32)

    # ChannelGate MLP params: nn.Linear(C, C//4), nn.Linear(C//4, C) (PyTorch layout)
    w1 = 0.1 * jax.random.normal(ks[1], (Cr, C), dtype=jnp.float32)
    b1 = 0.1 * jax.random.normal(ks[2], (Cr,), dtype=jnp.float32)
    w2 = 0.1 * jax.random.normal(ks[3], (C, Cr), dtype=jnp.float32)
    b2 = 0.1 * jax.random.normal(ks[4], (C,), dtype=jnp.float32)
    # SpatialGate conv: nn.Conv2d(2, 1, 7, padding=3, bias=False) -> weight (1, 2, 7, 7)
    conv_w = 0.1 * jax.random.normal(ks[5], (1, 2, 7, 7), dtype=jnp.float32)
    # TODO(synk): original code applies nn.BatchNorm2d(2) to a 1-channel conv output
    # (shape bug, errors at runtime in PyTorch); implemented as a 1-channel BatchNorm
    # in eval mode with PyTorch-default init (gamma=1, beta=0, mean=0, var=1, eps=1e-5).
    gamma, beta, rmean, rvar, eps = 1.0, 0.0, 0.0, 1.0, 1e-5
    bn_a = float(gamma / np.sqrt(rvar + eps))
    bn_b = float(beta - rmean * bn_a)

    params = dict(w1=w1, b1=b1, w2=w2, b2=b2, conv_w=conv_w, bn_a=bn_a, bn_b=bn_b)

    prep = prepare_gate_params(params, H, W)
    out = jax.block_until_ready(gate_forward(x, prep, block_n=2))   # grid = 2 steps

    ref = jax.block_until_ready(gate_reference(x, params))
    if not np.allclose(np.asarray(out), np.asarray(ref), rtol=2e-2, atol=5e-3):
        err = float(np.max(np.abs(np.asarray(out) - np.asarray(ref))))
        raise AssertionError(f"Pallas Gate output mismatch vs reference (max err {err})")
    print("KERNEL_OK")
</pallas_src>

<mosaic_0001>
module attributes {stable_mosaic.version = 11 : i64} {
  func.func @gate_kernel(%arg0: i32, %arg1: memref<2x32x256xf32, #tpu.memory_space<vmem>>, %arg2: memref<32x8xf32, #tpu.memory_space<vmem>>, %arg3: memref<1x8xf32, #tpu.memory_space<vmem>>, %arg4: memref<32x8xf32, #tpu.memory_space<vmem>>, %arg5: memref<32x1xf32, #tpu.memory_space<vmem>>, %arg6: memref<512x256xbf16, #tpu.memory_space<vmem>>, %arg7: memref<1xf32, #tpu.memory_space<smem>>, %arg8: memref<2x32x256xf32, #tpu.memory_space<vmem>>, %arg9: memref<2x512xf32, #tpu.memory_space<vmem>>) attributes {dimension_semantics = [#tpu.dimension_semantics<parallel>], iteration_bounds = array<i64: 2>, scalar_prefetch = 0 : i64, scratch_operands = 1 : i64, tpu.core_type = #tpu.core_type<tc>, window_params = [{transform_indices = @transform_0, window_bounds = array<i64: 2, 32, 256>}, {pipeline_mode = #tpu.pipeline_mode<synchronous>, transform_indices = @transform_1, window_bounds = array<i64: 32, 8>}, {pipeline_mode = #tpu.pipeline_mode<synchronous>, transform_indices = @transform_2, window_bounds = array<i64: 1, 8>}, {pipeline_mode = #tpu.pipeline_mode<synchronous>, transform_indices = @transform_3, window_bounds = array<i64: 32, 8>}, {pipeline_mode = #tpu.pipeline_mode<synchronous>, transform_indices = @transform_4, window_bounds = array<i64: 32, 1>}, {pipeline_mode = #tpu.pipeline_mode<synchronous>, transform_indices = @transform_5, window_bounds = array<i64: 512, 256>}, {transform_indices = @transform_6, window_bounds = array<i64: 1>}, {transform_indices = @transform_7, window_bounds = array<i64: 2, 32, 256>}]} {
    %c0 = arith.constant 0 : index
    %c0_0 = arith.constant 0 : index
    %0 = vector.load %arg2[%c0, %c0_0] : memref<32x8xf32, #tpu.memory_space<vmem>>, vector<32x8xf32>
    %c0_1 = arith.constant 0 : index
    %c0_2 = arith.constant 0 : index
    %1 = vector.load %arg3[%c0_1, %c0_2] : memref<1x8xf32, #tpu.memory_space<vmem>>, vector<1x8xf32>
    %c0_3 = arith.constant 0 : index
    %c0_4 = arith.constant 0 : index
    %2 = vector.load %arg4[%c0_3, %c0_4] : memref<32x8xf32, #tpu.memory_space<vmem>>, vector<32x8xf32>
    %c0_5 = arith.constant 0 : index
    %c0_6 = arith.constant 0 : index
    %3 = vector.load %arg5[%c0_5, %c0_6] : memref<32x1xf32, #tpu.memory_space<vmem>>, vector<32x1xf32>
    %c0_7 = arith.constant 0 : index
    %c0_8 = arith.constant 0 : index
    %c0_9 = arith.constant 0 : index
    %4 = vector.load %arg1[%c0_7, %c0_8, %c0_9] : memref<2x32x256xf32, #tpu.memory_space<vmem>>, vector<1x32x256xf32>
    %5 = vector.shape_cast %4 : vector<1x32x256xf32> to vector<32x256xf32>
    %cst = arith.constant dense<0xFF800000> : vector<32xf32>
    %6 = vector.multi_reduction <maximumf>, %5, %cst [1] : vector<32x256xf32> to vector<32xf32>
    %7 = vector.shape_cast %6 : vector<32xf32> to vector<32x1xf32>
    %cst_10 = arith.constant dense<0.000000e+00> : vector<32xf32>
    %8 = vector.multi_reduction <add>, %5, %cst_10 [1] : vector<32x256xf32> to vector<32xf32>
    %9 = vector.shape_cast %8 : vector<32xf32> to vector<32x1xf32>
    %cst_11 = arith.constant 3.906250e-03 : f32
    %10 = vector.broadcast %cst_11 : f32 to vector<32x1xf32>
    %11 = arith.mulf %9, %10 : vector<32x1xf32>
    %12 = vector.broadcast %7 : vector<32x1xf32> to vector<32x8xf32>
    %13 = arith.mulf %0, %12 : vector<32x8xf32>
    %cst_12 = arith.constant dense<0.000000e+00> : vector<8xf32>
    %14 = vector.multi_reduction <add>, %13, %cst_12 [0] : vector<32x8xf32> to vector<8xf32>
    %15 = vector.shape_cast %14 : vector<8xf32> to vector<1x8xf32>
    %16 = arith.addf %15, %1 : vector<1x8xf32>
    %cst_13 = arith.constant 0.000000e+00 : f32
    %17 = vector.broadcast %cst_13 : f32 to vector<1x8xf32>
    %18 = arith.maximumf %16, %17 : vector<1x8xf32>
    %19 = vector.broadcast %11 : vector<32x1xf32> to vector<32x8xf32>
    %20 = arith.mulf %0, %19 : vector<32x8xf32>
    %cst_14 = arith.constant dense<0.000000e+00> : vector<8xf32>
    %21 = vector.multi_reduction <add>, %20, %cst_14 [0] : vector<32x8xf32> to vector<8xf32>
    %22 = vector.shape_cast %21 : vector<8xf32> to vector<1x8xf32>
    %23 = arith.addf %22, %1 : vector<1x8xf32>
    %cst_15 = arith.constant 0.000000e+00 : f32
    %24 = vector.broadcast %cst_15 : f32 to vector<1x8xf32>
    %25 = arith.maximumf %23, %24 : vector<1x8xf32>
    %26 = arith.addf %18, %25 : vector<1x8xf32>
    %27 = vector.broadcast %26 : vector<1x8xf32> to vector<32x8xf32>
    %28 = arith.mulf %2, %27 : vector<32x8xf32>
    %cst_16 = arith.constant dense<0.000000e+00> : vector<32xf32>
    %29 = vector.multi_reduction <add>, %28, %cst_16 [1] : vector<32x8xf32> to vector<32xf32>
    %30 = vector.shape_cast %29 : vector<32xf32> to vector<32x1xf32>
    %cst_17 = arith.constant 2.000000e+00 : f32
    %31 = vector.broadcast %cst_17 : f32 to vector<32x1xf32>
    %32 = arith.mulf %31, %3 : vector<32x1xf32>
    %33 = arith.addf %30, %32 : vector<32x1xf32>
    %34 = arith.negf %33 : vector<32x1xf32>
    %35 = math.exp %34 : vector<32x1xf32>
    %cst_18 = arith.constant 1.000000e+00 : f32
    %36 = vector.broadcast %cst_18 : f32 to vector<32x1xf32>
    %37 = arith.addf %36, %35 : vector<32x1xf32>
    %38 = arith.divf %36, %37 : vector<32x1xf32>
    %39 = vector.broadcast %38 : vector<32x1xf32> to vector<32x256xf32>
    %40 = arith.mulf %5, %39 : vector<32x256xf32>
    %c0_19 = arith.constant 0 : index
    %c0_20 = arith.constant 0 : index
    %c0_21 = arith.constant 0 : index
    %41 = vector.load %arg8[%c0_19, %c0_20, %c0_21] : memref<2x32x256xf32, #tpu.memory_space<vmem>>, vector<1x32x256xf32>
    %42 = vector.shape_cast %41 : vector<1x32x256xf32> to vector<32x256xf32>
    %43 = vector.shape_cast %40 : vector<32x256xf32> to vector<1x32x256xf32>
    tpu.vector_store %arg8[%c0_19, %c0_20, %c0_21], %43 {strides = array<i32>} : memref<2x32x256xf32, #tpu.memory_space<vmem>>, vector<1x32x256xf32>,
    %cst_22 = arith.constant dense<0xFF800000> : vector<256xf32>
    %44 = vector.multi_reduction <maximumf>, %40, %cst_22 [0] : vector<32x256xf32> to vector<256xf32>
    %45 = vector.shape_cast %44 : vector<256xf32> to vector<1x256xf32>
    %cst_23 = arith.constant dense<0.000000e+00> : vector<256xf32>
    %46 = vector.multi_reduction <add>, %40, %cst_23 [0] : vector<32x256xf32> to vector<256xf32>
    %47 = vector.shape_cast %46 : vector<256xf32> to vector<1x256xf32>
    %c0_24 = arith.constant 0 : index
    %c0_25 = arith.constant 0 : index
    %48 = vector.load %arg9[%c0_24, %c0_25] : memref<2x512xf32, #tpu.memory_space<vmem>>, vector<1x256xf32>
    tpu.vector_store %arg9[%c0_24, %c0_25], %45 {strides = array<i32>} : memref<2x512xf32, #tpu.memory_space<vmem>>, vector<1x256xf32>,
    %c0_26 = arith.constant 0 : index
    %c256 = arith.constant 256 : index
    %49 = vector.load %arg9[%c0_26, %c256] : memref<2x512xf32, #tpu.memory_space<vmem>>, vector<1x256xf32>
    tpu.vector_store %arg9[%c0_26, %c256], %47 {strides = array<i32>} : memref<2x512xf32, #tpu.memory_space<vmem>>, vector<1x256xf32>,
    %c1 = arith.constant 1 : index
    %c0_27 = arith.constant 0 : index
    %c0_28 = arith.constant 0 : index
    %50 = vector.load %arg1[%c1, %c0_27, %c0_28] : memref<2x32x256xf32, #tpu.memory_space<vmem>>, vector<1x32x256xf32>
    %51 = vector.shape_cast %50 : vector<1x32x256xf32> to vector<32x256xf32>
    %cst_29 = arith.constant dense<0xFF800000> : vector<32xf32>
    %52 = vector.multi_reduction <maximumf>, %51, %cst_29 [1] : vector<32x256xf32> to vector<32xf32>
    %53 = vector.shape_cast %52 : vector<32xf32> to vector<32x1xf32>
    %cst_30 = arith.constant dense<0.000000e+00> : vector<32xf32>
    %54 = vector.multi_reduction <add>, %51, %cst_30 [1] : vector<32x256xf32> to vector<32xf32>
    %55 = vector.shape_cast %54 : vector<32xf32> to vector<32x1xf32>
    %cst_31 = arith.constant 3.906250e-03 : f32
    %56 = vector.broadcast %cst_31 : f32 to vector<32x1xf32>
    %57 = arith.mulf %55, %56 : vector<32x1xf32>
    %58 = vector.broadcast %53 : vector<32x1xf32> to vector<32x8xf32>
    %59 = arith.mulf %0, %58 : vector<32x8xf32>
    %cst_32 = arith.constant dense<0.000000e+00> : vector<8xf32>
    %60 = vector.multi_reduction <add>, %59, %cst_32 [0] : vector<32x8xf32> to vector<8xf32>
    %61 = vector.shape_cast %60 : vector<8xf32> to vector<1x8xf32>
    %62 = arith.addf %61, %1 : vector<1x8xf32>
    %cst_33 = arith.constant 0.000000e+00 : f32
    %63 = vector.broadcast %cst_33 : f32 to vector<1x8xf32>
    %64 = arith.maximumf %62, %63 : vector<1x8xf32>
    %65 = vector.broadcast %57 : vector<32x1xf32> to vector<32x8xf32>
    %66 = arith.mulf %0, %65 : vector<32x8xf32>
    %cst_34 = arith.constant dense<0.000000e+00> : vector<8xf32>
    %67 = vector.multi_reduction <add>, %66, %cst_34 [0] : vector<32x8xf32> to vector<8xf32>
    %68 = vector.shape_cast %67 : vector<8xf32> to vector<1x8xf32>
    %69 = arith.addf %68, %1 : vector<1x8xf32>
    %cst_35 = arith.constant 0.000000e+00 : f32
    %70 = vector.broadcast %cst_35 : f32 to vector<1x8xf32>
    %71 = arith.maximumf %69, %70 : vector<1x8xf32>
    %72 = arith.addf %64, %71 : vector<1x8xf32>
    %73 = vector.broadcast %72 : vector<1x8xf32> to vector<32x8xf32>
    %74 = arith.mulf %2, %73 : vector<32x8xf32>
    %cst_36 = arith.constant dense<0.000000e+00> : vector<32xf32>
    %75 = vector.multi_reduction <add>, %74, %cst_36 [1] : vector<32x8xf32> to vector<32xf32>
    %76 = vector.shape_cast %75 : vector<32xf32> to vector<32x1xf32>
    %cst_37 = arith.constant 2.000000e+00 : f32
    %77 = vector.broadcast %cst_37 : f32 to vector<32x1xf32>
    %78 = arith.mulf %77, %3 : vector<32x1xf32>
    %79 = arith.addf %76, %78 : vector<32x1xf32>
    %80 = arith.negf %79 : vector<32x1xf32>
    %81 = math.exp %80 : vector<32x1xf32>
    %cst_38 = arith.constant 1.000000e+00 : f32
    %82 = vector.broadcast %cst_38 : f32 to vector<32x1xf32>
    %83 = arith.addf %82, %81 : vector<32x1xf32>
    %84 = arith.divf %82, %83 : vector<32x1xf32>
    %85 = vector.broadcast %84 : vector<32x1xf32> to vector<32x256xf32>
    %86 = arith.mulf %51, %85 : vector<32x256xf32>
    %c1_39 = arith.constant 1 : index
    %c0_40 = arith.constant 0 : index
    %c0_41 = arith.constant 0 : index
    %87 = vector.load %arg8[%c1_39, %c0_40, %c0_41] : memref<2x32x256xf32, #tpu.memory_space<vmem>>, vector<1x32x256xf32>
    %88 = vector.shape_cast %87 : vector<1x32x256xf32> to vector<32x256xf32>
    %89 = vector.shape_cast %86 : vector<32x256xf32> to vector<1x32x256xf32>
    tpu.vector_store %arg8[%c1_39, %c0_40, %c0_41], %89 {strides = array<i32>} : memref<2x32x256xf32, #tpu.memory_space<vmem>>, vector<1x32x256xf32>,
    %cst_42 = arith.constant dense<0xFF800000> : vector<256xf32>
    %90 = vector.multi_reduction <maximumf>, %86, %cst_42 [0] : vector<32x256xf32> to vector<256xf32>
    %91 = vector.shape_cast %90 : vector<256xf32> to vector<1x256xf32>
    %cst_43 = arith.constant dense<0.000000e+00> : vector<256xf32>
    %92 = vector.multi_reduction <add>, %86, %cst_43 [0] : vector<32x256xf32> to vector<256xf32>
    %93 = vector.shape_cast %92 : vector<256xf32> to vector<1x256xf32>
    %c1_44 = arith.constant 1 : index
    %c0_45 = arith.constant 0 : index
    %94 = vector.load %arg9[%c1_44, %c0_45] : memref<2x512xf32, #tpu.memory_space<vmem>>, vector<1x256xf32>
    tpu.vector_store %arg9[%c1_44, %c0_45], %91 {strides = array<i32>} : memref<2x512xf32, #tpu.memory_space<vmem>>, vector<1x256xf32>,
    %c1_46 = arith.constant 1 : index
    %c256_47 = arith.constant 256 : index
    %95 = vector.load %arg9[%c1_46, %c256_47] : memref<2x512xf32, #tpu.memory_space<vmem>>, vector<1x256xf32>
    tpu.vector_store %arg9[%c1_46, %c256_47], %93 {strides = array<i32>} : memref<2x512xf32, #tpu.memory_space<vmem>>, vector<1x256xf32>,
    %c0_48 = arith.constant 0 : index
    %c0_49 = arith.constant 0 : index
    %96 = vector.load %arg9[%c0_48, %c0_49] : memref<2x512xf32, #tpu.memory_space<vmem>>, vector<2x512xf32>
    %97 = arith.truncf %96 : vector<2x512xf32> to vector<2x512xbf16>
    %c0_50 = arith.constant 0 : index
    %c0_51 = arith.constant 0 : index
    %98 = vector.load %arg6[%c0_50, %c0_51] : memref<512x256xbf16, #tpu.memory_space<vmem>>, vector<512x256xbf16>
    %cst_52 = arith.constant dense<0.000000e+00> : vector<2x256xf32>
    %99 = tpu.matmul %97, %98, %cst_52 {dimension_numbers = #tpu.dot_dimension_numbers<[1], [0], [0], [1], [0, 0, 1, 1], [], []>} : vector<2x512xbf16>, vector<512x256xbf16>, vector<2x256xf32> -> vector<2x256xf32>
    %c0_53 = arith.constant 0 : index
    %100 = memref.load %arg7[%c0_53] : memref<1xf32, #tpu.memory_space<smem>>
    %101 = vector.broadcast %100 : f32 to vector<2x256xf32>
    %102 = arith.addf %99, %101 : vector<2x256xf32>
    %103 = arith.negf %102 : vector<2x256xf32>
    %104 = math.exp %103 : vector<2x256xf32>
    %cst_54 = arith.constant 1.000000e+00 : f32
    %105 = vector.broadcast %cst_54 : f32 to vector<2x256xf32>
    %106 = arith.addf %105, %104 : vector<2x256xf32>
    %107 = arith.divf %105, %106 : vector<2x256xf32>
    %c0_55 = arith.constant 0 : index
    %c0_56 = arith.constant 0 : index
    %c0_57 = arith.constant 0 : index
    %108 = vector.load %arg8[%c0_55, %c0_56, %c0_57] : memref<2x32x256xf32, #tpu.memory_space<vmem>>, vector<1x32x256xf32>
    %109 = vector.shape_cast %108 : vector<1x32x256xf32> to vector<32x256xf32>
    %110 = vector.extract_strided_slice %107 {offsets = [0, 0], sizes = [1, 256], strides = [1, 1]} : vector<2x256xf32> to vector<1x256xf32>
    %111 = vector.broadcast %110 : vector<1x256xf32> to vector<32x256xf32>
    %112 = arith.mulf %109, %111 : vector<32x256xf32>
    %c0_58 = arith.constant 0 : index
    %c0_59 = arith.constant 0 : index
    %c0_60 = arith.constant 0 : index
    %113 = vector.load %arg8[%c0_58, %c0_59, %c0_60] : memref<2x32x256xf32, #tpu.memory_space<vmem>>, vector<1x32x256xf32>
    %114 = vector.shape_cast %113 : vector<1x32x256xf32> to vector<32x256xf32>
    %115 = vector.shape_cast %112 : vector<32x256xf32> to vector<1x32x256xf32>
    tpu.vector_store %arg8[%c0_58, %c0_59, %c0_60], %115 {strides = array<i32>} : memref<2x32x256xf32, #tpu.memory_space<vmem>>, vector<1x32x256xf32>,
    %c1_61 = arith.constant 1 : index
    %c0_62 = arith.constant 0 : index
    %c0_63 = arith.constant 0 : index
    %116 = vector.load %arg8[%c1_61, %c0_62, %c0_63] : memref<2x32x256xf32, #tpu.memory_space<vmem>>, vector<1x32x256xf32>
    %117 = vector.shape_cast %116 : vector<1x32x256xf32> to vector<32x256xf32>
    %118 = vector.extract_strided_slice %107 {offsets = [1, 0], sizes = [1, 256], strides = [1, 1]} : vector<2x256xf32> to vector<1x256xf32>
    %119 = vector.broadcast %118 : vector<1x256xf32> to vector<32x256xf32>
    %120 = arith.mulf %117, %119 : vector<32x256xf32>
    %c1_64 = arith.constant 1 : index
    %c0_65 = arith.constant 0 : index
    %c0_66 = arith.constant 0 : index
    %121 = vector.load %arg8[%c1_64, %c0_65, %c0_66] : memref<2x32x256xf32, #tpu.memory_space<vmem>>, vector<1x32x256xf32>
    %122 = vector.shape_cast %121 : vector<1x32x256xf32> to vector<32x256xf32>
    %123 = vector.shape_cast %120 : vector<32x256xf32> to vector<1x32x256xf32>
    tpu.vector_store %arg8[%c1_64, %c0_65, %c0_66], %123 {strides = array<i32>} : memref<2x32x256xf32, #tpu.memory_space<vmem>>, vector<1x32x256xf32>,
    return
  }
  func.func @transform_0(%arg0: i32) -> (i32, i32, i32) {
    %c0_i32 = arith.constant 0 : i32
    %c0_i32_0 = arith.constant 0 : i32
    %c0_i32_1 = arith.constant 0 : i32
    return %arg0, %c0_i32, %c0_i32_0 : i32, i32, i32
  }
  func.func @transform_1(%arg0: i32) -> (i32, i32) {
    %c0_i32 = arith.constant 0 : i32
    %c0_i32_0 = arith.constant 0 : i32
    %c0_i32_1 = arith.constant 0 : i32
    return %c0_i32, %c0_i32_0 : i32, i32
  }
  func.func @transform_2(%arg0: i32) -> (i32, i32) {
    %c0_i32 = arith.constant 0 : i32
    %c0_i32_0 = arith.constant 0 : i32
    %c0_i32_1 = arith.constant 0 : i32
    return %c0_i32, %c0_i32_0 : i32, i32
  }
  func.func @transform_3(%arg0: i32) -> (i32, i32) {
    %c0_i32 = arith.constant 0 : i32
    %c0_i32_0 = arith.constant 0 : i32
    %c0_i32_1 = arith.constant 0 : i32
    return %c0_i32, %c0_i32_0 : i32, i32
  }
  func.func @transform_4(%arg0: i32) -> (i32, i32) {
    %c0_i32 = arith.constant 0 : i32
    %c0_i32_0 = arith.constant 0 : i32
    %c0_i32_1 = arith.constant 0 : i32
    return %c0_i32, %c0_i32_0 : i32, i32
  }
  func.func @transform_5(%arg0: i32) -> (i32, i32) {
    %c0_i32 = arith.constant 0 : i32
    %c0_i32_0 = arith.constant 0 : i32
    %c0_i32_1 = arith.constant 0 : i32
    return %c0_i32, %c0_i32_0 : i32, i32
  }
  func.func @transform_6(%arg0: i32) -> i32 {
    %c0_i32 = arith.constant 0 : i32
    %c0_i32_0 = arith.constant 0 : i32
    return %c0_i32 : i32
  }
  func.func @transform_7(%arg0: i32) -> (i32, i32, i32) {
    %c0_i32 = arith.constant 0 : i32
    %c0_i32_0 = arith.constant 0 : i32
    %c0_i32_1 = arith.constant 0 : i32
    return %arg0, %c0_i32, %c0_i32_0 : i32, i32, i32
  }
}

module attributes {stable_mosaic.version = 11 : i64} {
  func.func @gate_kernel(%arg0: i32, %arg1: memref<2x32x256xf32, #tpu.memory_space<vmem>>, %arg2: memref<32x8xf32, #tpu.memory_space<vmem>>, %arg3: memref<1x8xf32, #tpu.memory_space<vmem>>, %arg4: memref<32x8xf32, #tpu.memory_space<vmem>>, %arg5: memref<32x1xf32, #tpu.memory_space<vmem>>, %arg6: memref<512x256xbf16, #tpu.memory_space<vmem>>, %arg7: memref<1xf32, #tpu.memory_space<smem>>, %arg8: memref<2x32x256xf32, #tpu.memory_space<vmem>>, %arg9: memref<2x512xf32, #tpu.memory_space<vmem>>) attributes {dimension_semantics = [#tpu.dimension_semantics<parallel>], iteration_bounds = array<i64: 2>, scalar_prefetch = 0 : i64, scratch_operands = 1 : i64, tpu.core_type = #tpu.core_type<tc>, window_params = [{transform_indices = @transform_0, window_bounds = array<i64: 2, 32, 256>}, {pipeline_mode = #tpu.pipeline_mode<synchronous>, transform_indices = @transform_1, window_bounds = array<i64: 32, 8>}, {pipeline_mode = #tpu.pipeline_mode<synchronous>, transform_indices = @transform_2, window_bounds = array<i64: 1, 8>}, {pipeline_mode = #tpu.pipeline_mode<synchronous>, transform_indices = @transform_3, window_bounds = array<i64: 32, 8>}, {pipeline_mode = #tpu.pipeline_mode<synchronous>, transform_indices = @transform_4, window_bounds = array<i64: 32, 1>}, {pipeline_mode = #tpu.pipeline_mode<synchronous>, transform_indices = @transform_5, window_bounds = array<i64: 512, 256>}, {transform_indices = @transform_6, window_bounds = array<i64: 1>}, {transform_indices = @transform_7, window_bounds = array<i64: 2, 32, 256>}]} {
    %c0 = arith.constant 0 : index
    %c0_0 = arith.constant 0 : index
    %0 = vector.load %arg2[%c0, %c0_0] : memref<32x8xf32, #tpu.memory_space<vmem>>, vector<32x8xf32>
    %c0_1 = arith.constant 0 : index
    %c0_2 = arith.constant 0 : index
    %1 = vector.load %arg3[%c0_1, %c0_2] : memref<1x8xf32, #tpu.memory_space<vmem>>, vector<1x8xf32>
    %c0_3 = arith.constant 0 : index
    %c0_4 = arith.constant 0 : index
    %2 = vector.load %arg4[%c0_3, %c0_4] : memref<32x8xf32, #tpu.memory_space<vmem>>, vector<32x8xf32>
    %c0_5 = arith.constant 0 : index
    %c0_6 = arith.constant 0 : index
    %3 = vector.load %arg5[%c0_5, %c0_6] : memref<32x1xf32, #tpu.memory_space<vmem>>, vector<32x1xf32>
    %c0_7 = arith.constant 0 : index
    %c0_8 = arith.constant 0 : index
    %c0_9 = arith.constant 0 : index
    %4 = vector.load %arg1[%c0_7, %c0_8, %c0_9] : memref<2x32x256xf32, #tpu.memory_space<vmem>>, vector<1x32x256xf32>
    %5 = vector.shape_cast %4 : vector<1x32x256xf32> to vector<32x256xf32>
    %cst = arith.constant dense<0xFF800000> : vector<32xf32>
    %6 = vector.multi_reduction <maximumf>, %5, %cst [1] : vector<32x256xf32> to vector<32xf32>
    %7 = vector.shape_cast %6 : vector<32xf32> to vector<32x1xf32>
    %cst_10 = arith.constant dense<0.000000e+00> : vector<32xf32>
    %8 = vector.multi_reduction <add>, %5, %cst_10 [1] : vector<32x256xf32> to vector<32xf32>
    %9 = vector.shape_cast %8 : vector<32xf32> to vector<32x1xf32>
    %cst_11 = arith.constant 3.906250e-03 : f32
    %10 = vector.broadcast %cst_11 : f32 to vector<32x1xf32>
    %11 = arith.mulf %9, %10 : vector<32x1xf32>
    %12 = vector.broadcast %7 : vector<32x1xf32> to vector<32x8xf32>
    %13 = arith.mulf %0, %12 : vector<32x8xf32>
    %cst_12 = arith.constant dense<0.000000e+00> : vector<8xf32>
    %14 = vector.multi_reduction <add>, %13, %cst_12 [0] : vector<32x8xf32> to vector<8xf32>
    %15 = vector.shape_cast %14 : vector<8xf32> to vector<1x8xf32>
    %16 = arith.addf %15, %1 : vector<1x8xf32>
    %cst_13 = arith.constant 0.000000e+00 : f32
    %17 = vector.broadcast %cst_13 : f32 to vector<1x8xf32>
    %18 = arith.maximumf %16, %17 : vector<1x8xf32>
    %19 = vector.broadcast %11 : vector<32x1xf32> to vector<32x8xf32>
    %20 = arith.mulf %0, %19 : vector<32x8xf32>
    %cst_14 = arith.constant dense<0.000000e+00> : vector<8xf32>
    %21 = vector.multi_reduction <add>, %20, %cst_14 [0] : vector<32x8xf32> to vector<8xf32>
    %22 = vector.shape_cast %21 : vector<8xf32> to vector<1x8xf32>
    %23 = arith.addf %22, %1 : vector<1x8xf32>
    %cst_15 = arith.constant 0.000000e+00 : f32
    %24 = vector.broadcast %cst_15 : f32 to vector<1x8xf32>
    %25 = arith.maximumf %23, %24 : vector<1x8xf32>
    %26 = arith.addf %18, %25 : vector<1x8xf32>
    %27 = vector.broadcast %26 : vector<1x8xf32> to vector<32x8xf32>
    %28 = arith.mulf %2, %27 : vector<32x8xf32>
    %cst_16 = arith.constant dense<0.000000e+00> : vector<32xf32>
    %29 = vector.multi_reduction <add>, %28, %cst_16 [1] : vector<32x8xf32> to vector<32xf32>
    %30 = vector.shape_cast %29 : vector<32xf32> to vector<32x1xf32>
    %cst_17 = arith.constant 2.000000e+00 : f32
    %31 = vector.broadcast %cst_17 : f32 to vector<32x1xf32>
    %32 = arith.mulf %31, %3 : vector<32x1xf32>
    %33 = arith.addf %30, %32 : vector<32x1xf32>
    %34 = arith.negf %33 : vector<32x1xf32>
    %35 = math.exp %34 : vector<32x1xf32>
    %cst_18 = arith.constant 1.000000e+00 : f32
    %36 = vector.broadcast %cst_18 : f32 to vector<32x1xf32>
    %37 = arith.addf %36, %35 : vector<32x1xf32>
    %38 = arith.divf %36, %37 : vector<32x1xf32>
    %39 = vector.broadcast %38 : vector<32x1xf32> to vector<32x256xf32>
    %40 = arith.mulf %5, %39 : vector<32x256xf32>
    %c0_19 = arith.constant 0 : index
    %c0_20 = arith.constant 0 : index
    %c0_21 = arith.constant 0 : index
    %41 = vector.load %arg8[%c0_19, %c0_20, %c0_21] : memref<2x32x256xf32, #tpu.memory_space<vmem>>, vector<1x32x256xf32>
    %42 = vector.shape_cast %41 : vector<1x32x256xf32> to vector<32x256xf32>
    %43 = vector.shape_cast %40 : vector<32x256xf32> to vector<1x32x256xf32>
    tpu.vector_store %arg8[%c0_19, %c0_20, %c0_21], %43 {strides = array<i32>} : memref<2x32x256xf32, #tpu.memory_space<vmem>>, vector<1x32x256xf32>,
    %cst_22 = arith.constant dense<0xFF800000> : vector<256xf32>
    %44 = vector.multi_reduction <maximumf>, %40, %cst_22 [0] : vector<32x256xf32> to vector<256xf32>
    %45 = vector.shape_cast %44 : vector<256xf32> to vector<1x256xf32>
    %cst_23 = arith.constant dense<0.000000e+00> : vector<256xf32>
    %46 = vector.multi_reduction <add>, %40, %cst_23 [0] : vector<32x256xf32> to vector<256xf32>
    %47 = vector.shape_cast %46 : vector<256xf32> to vector<1x256xf32>
    %c0_24 = arith.constant 0 : index
    %c0_25 = arith.constant 0 : index
    %48 = vector.load %arg9[%c0_24, %c0_25] : memref<2x512xf32, #tpu.memory_space<vmem>>, vector<1x256xf32>
    tpu.vector_store %arg9[%c0_24, %c0_25], %45 {strides = array<i32>} : memref<2x512xf32, #tpu.memory_space<vmem>>, vector<1x256xf32>,
    %c0_26 = arith.constant 0 : index
    %c256 = arith.constant 256 : index
    %49 = vector.load %arg9[%c0_26, %c256] : memref<2x512xf32, #tpu.memory_space<vmem>>, vector<1x256xf32>
    tpu.vector_store %arg9[%c0_26, %c256], %47 {strides = array<i32>} : memref<2x512xf32, #tpu.memory_space<vmem>>, vector<1x256xf32>,
    %c1 = arith.constant 1 : index
    %c0_27 = arith.constant 0 : index
    %c0_28 = arith.constant 0 : index
    %50 = vector.load %arg1[%c1, %c0_27, %c0_28] : memref<2x32x256xf32, #tpu.memory_space<vmem>>, vector<1x32x256xf32>
    %51 = vector.shape_cast %50 : vector<1x32x256xf32> to vector<32x256xf32>
    %cst_29 = arith.constant dense<0xFF800000> : vector<32xf32>
    %52 = vector.multi_reduction <maximumf>, %51, %cst_29 [1] : vector<32x256xf32> to vector<32xf32>
    %53 = vector.shape_cast %52 : vector<32xf32> to vector<32x1xf32>
    %cst_30 = arith.constant dense<0.000000e+00> : vector<32xf32>
    %54 = vector.multi_reduction <add>, %51, %cst_30 [1] : vector<32x256xf32> to vector<32xf32>
    %55 = vector.shape_cast %54 : vector<32xf32> to vector<32x1xf32>
    %cst_31 = arith.constant 3.906250e-03 : f32
    %56 = vector.broadcast %cst_31 : f32 to vector<32x1xf32>
    %57 = arith.mulf %55, %56 : vector<32x1xf32>
    %58 = vector.broadcast %53 : vector<32x1xf32> to vector<32x8xf32>
    %59 = arith.mulf %0, %58 : vector<32x8xf32>
    %cst_32 = arith.constant dense<0.000000e+00> : vector<8xf32>
    %60 = vector.multi_reduction <add>, %59, %cst_32 [0] : vector<32x8xf32> to vector<8xf32>
    %61 = vector.shape_cast %60 : vector<8xf32> to vector<1x8xf32>
    %62 = arith.addf %61, %1 : vector<1x8xf32>
    %cst_33 = arith.constant 0.000000e+00 : f32
    %63 = vector.broadcast %cst_33 : f32 to vector<1x8xf32>
    %64 = arith.maximumf %62, %63 : vector<1x8xf32>
    %65 = vector.broadcast %57 : vector<32x1xf32> to vector<32x8xf32>
    %66 = arith.mulf %0, %65 : vector<32x8xf32>
    %cst_34 = arith.constant dense<0.000000e+00> : vector<8xf32>
    %67 = vector.multi_reduction <add>, %66, %cst_34 [0] : vector<32x8xf32> to vector<8xf32>
    %68 = vector.shape_cast %67 : vector<8xf32> to vector<1x8xf32>
    %69 = arith.addf %68, %1 : vector<1x8xf32>
    %cst_35 = arith.constant 0.000000e+00 : f32
    %70 = vector.broadcast %cst_35 : f32 to vector<1x8xf32>
    %71 = arith.maximumf %69, %70 : vector<1x8xf32>
    %72 = arith.addf %64, %71 : vector<1x8xf32>
    %73 = vector.broadcast %72 : vector<1x8xf32> to vector<32x8xf32>
    %74 = arith.mulf %2, %73 : vector<32x8xf32>
    %cst_36 = arith.constant dense<0.000000e+00> : vector<32xf32>
    %75 = vector.multi_reduction <add>, %74, %cst_36 [1] : vector<32x8xf32> to vector<32xf32>
    %76 = vector.shape_cast %75 : vector<32xf32> to vector<32x1xf32>
    %cst_37 = arith.constant 2.000000e+00 : f32
    %77 = vector.broadcast %cst_37 : f32 to vector<32x1xf32>
    %78 = arith.mulf %77, %3 : vector<32x1xf32>
    %79 = arith.addf %76, %78 : vector<32x1xf32>
    %80 = arith.negf %79 : vector<32x1xf32>
    %81 = math.exp %80 : vector<32x1xf32>
    %cst_38 = arith.constant 1.000000e+00 : f32
    %82 = vector.broadcast %cst_38 : f32 to vector<32x1xf32>
    %83 = arith.addf %82, %81 : vector<32x1xf32>
    %84 = arith.divf %82, %83 : vector<32x1xf32>
    %85 = vector.broadcast %84 : vector<32x1xf32> to vector<32x256xf32>
    %86 = arith.mulf %51, %85 : vector<32x256xf32>
    %c1_39 = arith.constant 1 : index
    %c0_40 = arith.constant 0 : index
    %c0_41 = arith.constant 0 : index
    %87 = vector.load %arg8[%c1_39, %c0_40, %c0_41] : memref<2x32x256xf32, #tpu.memory_space<vmem>>, vector<1x32x256xf32>
    %88 = vector.shape_cast %87 : vector<1x32x256xf32> to vector<32x256xf32>
    %89 = vector.shape_cast %86 : vector<32x256xf32> to vector<1x32x256xf32>
    tpu.vector_store %arg8[%c1_39, %c0_40, %c0_41], %89 {strides = array<i32>} : memref<2x32x256xf32, #tpu.memory_space<vmem>>, vector<1x32x256xf32>,
    %cst_42 = arith.constant dense<0xFF800000> : vector<256xf32>
    %90 = vector.multi_reduction <maximumf>, %86, %cst_42 [0] : vector<32x256xf32> to vector<256xf32>
    %91 = vector.shape_cast %90 : vector<256xf32> to vector<1x256xf32>
    %cst_43 = arith.constant dense<0.000000e+00> : vector<256xf32>
    %92 = vector.multi_reduction <add>, %86, %cst_43 [0] : vector<32x256xf32> to vector<256xf32>
    %93 = vector.shape_cast %92 : vector<256xf32> to vector<1x256xf32>
    %c1_44 = arith.constant 1 : index
    %c0_45 = arith.constant 0 : index
    %94 = vector.load %arg9[%c1_44, %c0_45] : memref<2x512xf32, #tpu.memory_space<vmem>>, vector<1x256xf32>
    tpu.vector_store %arg9[%c1_44, %c0_45], %91 {strides = array<i32>} : memref<2x512xf32, #tpu.memory_space<vmem>>, vector<1x256xf32>,
    %c1_46 = arith.constant 1 : index
    %c256_47 = arith.constant 256 : index
    %95 = vector.load %arg9[%c1_46, %c256_47] : memref<2x512xf32, #tpu.memory_space<vmem>>, vector<1x256xf32>
    tpu.vector_store %arg9[%c1_46, %c256_47], %93 {strides = array<i32>} : memref<2x512xf32, #tpu.memory_space<vmem>>, vector<1x256xf32>,
    %c0_48 = arith.constant 0 : index
    %c0_49 = arith.constant 0 : index
    %96 = vector.load %arg9[%c0_48, %c0_49] : memref<2x512xf32, #tpu.memory_space<vmem>>, vector<2x512xf32>
    %97 = arith.truncf %96 : vector<2x512xf32> to vector<2x512xbf16>
    %c0_50 = arith.constant 0 : index
    %c0_51 = arith.constant 0 : index
    %98 = vector.load %arg6[%c0_50, %c0_51] : memref<512x256xbf16, #tpu.memory_space<vmem>>, vector<512x256xbf16>
    %cst_52 = arith.constant dense<0.000000e+00> : vector<2x256xf32>
    %99 = tpu.matmul %97, %98, %cst_52 {dimension_numbers = #tpu.dot_dimension_numbers<[1], [0], [0], [1], [0, 0, 1, 1], [], []>} : vector<2x512xbf16>, vector<512x256xbf16>, vector<2x256xf32> -> vector<2x256xf32>
    %c0_53 = arith.constant 0 : index
    %100 = memref.load %arg7[%c0_53] : memref<1xf32, #tpu.memory_space<smem>>
    %101 = vector.broadcast %100 : f32 to vector<2x256xf32>
    %102 = arith.addf %99, %101 : vector<2x256xf32>
    %103 = arith.negf %102 : vector<2x256xf32>
    %104 = math.exp %103 : vector<2x256xf32>
    %cst_54 = arith.constant 1.000000e+00 : f32
    %105 = vector.broadcast %cst_54 : f32 to vector<2x256xf32>
    %106 = arith.addf %105, %104 : vector<2x256xf32>
    %107 = arith.divf %105, %106 : vector<2x256xf32>
    %c0_55 = arith.constant 0 : index
    %c0_56 = arith.constant 0 : index
    %c0_57 = arith.constant 0 : index
    %108 = vector.load %arg8[%c0_55, %c0_56, %c0_57] : memref<2x32x256xf32, #tpu.memory_space<vmem>>, vector<1x32x256xf32>
    %109 = vector.shape_cast %108 : vector<1x32x256xf32> to vector<32x256xf32>
    %110 = vector.extract_strided_slice %107 {offsets = [0, 0], sizes = [1, 256], strides = [1, 1]} : vector<2x256xf32> to vector<1x256xf32>
    %111 = vector.broadcast %110 : vector<1x256xf32> to vector<32x256xf32>
    %112 = arith.mulf %109, %111 : vector<32x256xf32>
    %c0_58 = arith.constant 0 : index
    %c0_59 = arith.constant 0 : index
    %c0_60 = arith.constant 0 : index
    %113 = vector.load %arg8[%c0_58, %c0_59, %c0_60] : memref<2x32x256xf32, #tpu.memory_space<vmem>>, vector<1x32x256xf32>
    %114 = vector.shape_cast %113 : vector<1x32x256xf32> to vector<32x256xf32>
    %115 = vector.shape_cast %112 : vector<32x256xf32> to vector<1x32x256xf32>
    tpu.vector_store %arg8[%c0_58, %c0_59, %c0_60], %115 {strides = array<i32>} : memref<2x32x256xf32, #tpu.memory_space<vmem>>, vector<1x32x256xf32>,
    %c1_61 = arith.constant 1 : index
    %c0_62 = arith.constant 0 : index
    %c0_63 = arith.constant 0 : index
    %116 = vector.load %arg8[%c1_61, %c0_62, %c0_63] : memref<2x32x256xf32, #tpu.memory_space<vmem>>, vector<1x32x256xf32>
    %117 = vector.shape_cast %116 : vector<1x32x256xf32> to vector<32x256xf32>
    %118 = vector.extract_strided_slice %107 {offsets = [1, 0], sizes = [1, 256], strides = [1, 1]} : vector<2x256xf32> to vector<1x256xf32>
    %119 = vector.broadcast %118 : vector<1x256xf32> to vector<32x256xf32>
    %120 = arith.mulf %117, %119 : vector<32x256xf32>
    %c1_64 = arith.constant 1 : index
    %c0_65 = arith.constant 0 : index
    %c0_66 = arith.constant 0 : index
    %121 = vector.load %arg8[%c1_64, %c0_65, %c0_66] : memref<2x32x256xf32, #tpu.memory_space<vmem>>, vector<1x32x256xf32>
    %122 = vector.shape_cast %121 : vector<1x32x256xf32> to vector<32x256xf32>
    %123 = vector.shape_cast %120 : vector<32x256xf32> to vector<1x32x256xf32>
    tpu.vector_store %arg8[%c1_64, %c0_65, %c0_66], %123 {strides = array<i32>} : memref<2x32x256xf32, #tpu.memory_space<vmem>>, vector<1x32x256xf32>,
    return
  }
  func.func @transform_0(%arg0: i32) -> (i32, i32, i32) {
    %c0_i32 = arith.constant 0 : i32
    %c0_i32_0 = arith.constant 0 : i32
    %c0_i32_1 = arith.constant 0 : i32
    return %arg0, %c0_i32, %c0_i32_0 : i32, i32, i32
  }
  func.func @transform_1(%arg0: i32) -> (i32, i32) {
    %c0_i32 = arith.constant 0 : i32
    %c0_i32_0 = arith.constant 0 : i32
    %c0_i32_1 = arith.constant 0 : i32
    return %c0_i32, %c0_i32_0 : i32, i32
  }
  func.func @transform_2(%arg0: i32) -> (i32, i32) {
    %c0_i32 = arith.constant 0 : i32
    %c0_i32_0 = arith.constant 0 : i32
    %c0_i32_1 = arith.constant 0 : i32
    return %c0_i32, %c0_i32_0 : i32, i32
  }
  func.func @transform_3(%arg0: i32) -> (i32, i32) {
    %c0_i32 = arith.constant 0 : i32
    %c0_i32_0 = arith.constant 0 : i32
    %c0_i32_1 = arith.constant 0 : i32
    return %c0_i32, %c0_i32_0 : i32, i32
  }
  func.func @transform_4(%arg0: i32) -> (i32, i32) {
    %c0_i32 = arith.constant 0 : i32
    %c0_i32_0 = arith.constant 0 : i32
    %c0_i32_1 = arith.constant 0 : i32
    return %c0_i32, %c0_i32_0 : i32, i32
  }
  func.func @transform_5(%arg0: i32) -> (i32, i32) {
    %c0_i32 = arith.constant 0 : i32
    %c0_i32_0 = arith.constant 0 : i32
    %c0_i32_1 = arith.constant 0 : i32
    return %c0_i32, %c0_i32_0 : i32, i32
  }
  func.func @transform_6(%arg0: i32) -> i32 {
    %c0_i32 = arith.constant 0 : i32
    %c0_i32_0 = arith.constant 0 : i32
    return %c0_i32 : i32
  }
  func.func @transform_7(%arg0: i32) -> (i32, i32, i32) {
    %c0_i32 = arith.constant 0 : i32
    %c0_i32_0 = arith.constant 0 : i32
    %c0_i32_1 = arith.constant 0 : i32
    return %arg0, %c0_i32, %c0_i32_0 : i32, i32, i32
  }
}

</mosaic_0001>

<llo_original>
// kernel: tpu_custom_call.1
$region0: #{tpu_custom_call.1}
  #allocation0 [shape = 'u32[]', space=smem, size = 0x4, offset = 0x4, fixed_abs, tag = 'smem constant byte address 0x4 - core index']
  #allocation1 [shape = 'u32[144,128]{1,0:T(1,128)}', space=vmem, size = 0x12000, scoped, tag = 'internal scratch']
  #allocation2 [shape = 'f32[2,512]{1,0:T(2,128)}', space=vmem, size = 0x1000, scoped, tag = 'scratch operand']
  #allocation3 [shape = 'f32[1]{0:T(128)S(6)}', space=smem, size = 0x200, scoped, tag = 'scoped memory for tpu_custom_call.1']
  %s0 = inlined_call_operand.hbm [shape: f32[4,32,256], index: 0, kind: input, shape index: {}]
  %s1 = inlined_call_operand.vmem [shape: f32[32,8], index: 1, kind: input, shape index: {}]
  %s2 = inlined_call_operand.vmem [shape: f32[1,8], index: 2, kind: input, shape index: {}]
  %s3 = inlined_call_operand.vmem [shape: f32[32,8], index: 3, kind: input, shape index: {}]
  %s4 = inlined_call_operand.vmem [shape: f32[32,1], index: 4, kind: input, shape index: {}]
  %s5 = inlined_call_operand.hbm [shape: bf16[512,256], index: 5, kind: input, shape index: {}]
  %s6 = inlined_call_operand.<no memory space> [shape: f32[1], index: 6, kind: input, shape index: {}]
  %s7 = inlined_call_operand.hbm [shape: f32[4,32,256], index: 7, kind: output, shape index: {}]
  %s8 = sld [smem:[#allocation0]]
  $region69: #{tpu_custom_call.1} parent=0
    _
  %s10 = ssub.s32 1, %s8
  %s11 = scalar_select 0, %s10, %s8
  %12 = sst [smem:[#allocation3]] %s6
  $region1: #{tpu_custom_call.1} parent=0
    #allocation4 [shape = 'u8[131072]{0}', space=vmem, size = 0x20000, scoped, tag = 'input window, operand 0']
    #allocation5 [shape = 's32[2]{0}', space=sflag, size = 0x8, scoped, tag = 'scoped memory for tpu_custom_call.1']
    #allocation6 [shape = 's32[2]{0}', space=sflag, size = 0x8, scoped, tag = 'scoped memory for tpu_custom_call.1']
    #allocation7 [shape = 'u8[262144]{0}', space=vmem, size = 0x40000, scoped, tag = 'input window, operand 5, single buffered']
    #allocation8 [shape = 's32[1]{0}', space=sflag, size = 0x4, scoped, tag = 'scoped memory for tpu_custom_call.1']
    #allocation9 [shape = 'u8[131072]{0}', space=vmem, size = 0x20000, scoped, tag = 'output window, operand 0']
    %13 = vsyncpa [#allocation5], 0
    %s14 = scalar_lea.sflag [#allocation5], 1
    %15 = vsyncpa %s14, 0
    %16 = vsyncpa [#allocation8], 0
    %17 = vsyncpa [#allocation6], 0
    %s18 = scalar_lea.sflag [#allocation6], 1
    %19 = vsyncpa %s18, 0
    loop: start=0, step=1, limit=4
    $region2: #{tpu_custom_call.1} parent=1 // loop_pre_header
      _
    $region3: #{tpu_custom_call.1} parent=1 // loop_header
      %s21 = sphi 0, %s25
      %p22 = scmp.ge.s32.totalorder %s21, 4
      %s31 = sphi 0, %s33
      %s34 = sphi 0, %s31
      %s35 = sphi 0, %s34
      %s51 = sphi 0, %s35
      %s55 = sphi 0, %s55
      %s57 = sphi 0, %s55
      %s58 = sphi 0, %s57
      %s72 = sphi 0, %s58
      %s76 = sphi 0, %s76
      %s78 = sphi 0, %s76
      %s79 = sphi 0, %s78
      %s93 = sphi 0, %s79
      %s97 = sphi 0, %s97
      %s99 = sphi 0, %s97
      %s100 = sphi 0, %s99
      %s114 = sphi 0, %s100
      %s118 = sphi 0, %s118
      %s120 = sphi 0, %s118
      %s121 = sphi 0, %s120
      %s135 = sphi 0, %s121
      %s139 = sphi 0, %s139
      %s141 = sphi 0, %s139
      %s142 = sphi 0, %s141
      %s156 = sphi 0, %s142
      %s160 = sphi 0, %s160
      %s162 = sphi 0, %s160
      %s163 = sphi 0, %s162
      %s177 = sphi 0, %s163
      %s183 = sphi 0, %s185
      %s186 = sphi 0, %s183
      %s187 = sphi 0, %s186
      %s203 = sphi 0, %s187
    $region4: #{tpu_custom_call.1} parent=1 // loop_header_branch
      %24 = sbr.rel (%p22) target = $region8
    $region5: #{tpu_custom_call.1} parent=1 // loop_body
      %s26 = ssub.s32 %s21, 1
      %s27 = ssub.s32 %s21, 2
      %s28 = sadd.s32 %s21, 1
      %s29 = ssub.s32 %s21, %s28
      %p30 = scmp.eq.s32.totalorder %s29, 0
      %s32 = sadd.s32 %s31, 1
      %s33 = scalar_select %p30, %s31, %s32
      %p36 = pneg %p30
      %p37 = scmp.eq.s32.totalorder %s21, 1
      %p38 = por %p36, %p37
      %p39 = scmp.ne.s32.totalorder %s31, %s34
      %p40 = scmp.eq.s32.totalorder %s21, 0
      %p41 = por %p39, %p40
      %p42 = scmp.ne.s32.totalorder %s31, %s34
      %p43 = scmp.eq.s32.totalorder %s26, 1
      %p44 = por %p42, %p43
      %p45 = scmp.ne.s32.totalorder %s34, %s35
      %p46 = scmp.eq.s32.totalorder %s26, 0
      %p47 = por %p45, %p46
      %p48 = scmp.ne.s32.totalorder %s34, %s35
      %p49 = scmp.eq.s32.totalorder %s27, 1
      %p50 = por %p48, %p49
      %p52 = scmp.ne.s32.totalorder %s35, %s51
      %p53 = scmp.eq.s32.totalorder %s27, 0
      %p54 = por %p52, %p53
      %s56 = sadd.s32 %s55, 1
      %p59 = scmp.eq.s32.totalorder %s21, 1
      %p60 = scmp.ne.s32.totalorder %s55, %s57
      %p61 = scmp.eq.s32.totalorder %s21, 0
      %p62 = por %p60, %p61
      %p63 = scmp.ne.s32.totalorder %s55, %s57
      %p64 = scmp.eq.s32.totalorder %s26, 1
      %p65 = por %p63, %p64
      %p66 = scmp.ne.s32.totalorder %s57, %s58
      %p67 = scmp.eq.s32.totalorder %s26, 0
      %p68 = por %p66, %p67
      %p69 = scmp.ne.s32.totalorder %s57, %s58
      %p70 = scmp.eq.s32.totalorder %s27, 1
      %p71 = por %p69, %p70
      %p73 = scmp.ne.s32.totalorder %s58, %s72
      %p74 = scmp.eq.s32.totalorder %s27, 0
      %p75 = por %p73, %p74
      %s77 = sadd.s32 %s76, 1
      %p80 = scmp.eq.s32.totalorder %s21, 1
      %p81 = scmp.ne.s32.totalorder %s76, %s78
      %p82 = scmp.eq.s32.totalorder %s21, 0
      %p83 = por %p81, %p82
      %p84 = scmp.ne.s32.totalorder %s76, %s78
      %p85 = scmp.eq.s32.totalorder %s26, 1
      %p86 = por %p84, %p85
      %p87 = scmp.ne.s32.totalorder %s78, %s79
      %p88 = scmp.eq.s32.totalorder %s26, 0
      %p89 = por %p87, %p88
      %p90 = scmp.ne.s32.totalorder %s78, %s79
      %p91 = scmp.eq.s32.totalorder %s27, 1
      %p92 = por %p90, %p91
      %p94 = scmp.ne.s32.totalorder %s79, %s93
      %p95 = scmp.eq.s32.totalorder %s27, 0
      %p96 = por %p94, %p95
      %s98 = sadd.s32 %s97, 1
      %p101 = scmp.eq.s32.totalorder %s21, 1
      %p102 = scmp.ne.s32.totalorder %s97, %s99
      %p103 = scmp.eq.s32.totalorder %s21, 0
      %p104 = por %p102, %p103
      %p105 = scmp.ne.s32.totalorder %s97, %s99
      %p106 = scmp.eq.s32.totalorder %s26, 1
      %p107 = por %p105, %p106
      %p108 = scmp.ne.s32.totalorder %s99, %s100
      %p109 = scmp.eq.s32.totalorder %s26, 0
      %p110 = por %p108, %p109
      %p111 = scmp.ne.s32.totalorder %s99, %s100
      %p112 = scmp.eq.s32.totalorder %s27, 1
      %p113 = por %p111, %p112
      %p115 = scmp.ne.s32.totalorder %s100, %s114
      %p116 = scmp.eq.s32.totalorder %s27, 0
      %p117 = por %p115, %p116
      %s119 = sadd.s32 %s118, 1
      %p122 = scmp.eq.s32.totalorder %s21, 1
      %p123 = scmp.ne.s32.totalorder %s118, %s120
      %p124 = scmp.eq.s32.totalorder %s21, 0
      %p125 = por %p123, %p124
      %p126 = scmp.ne.s32.totalorder %s118, %s120
      %p127 = scmp.eq.s32.totalorder %s26, 1
      %p128 = por %p126, %p127
      %p129 = scmp.ne.s32.totalorder %s120, %s121
      %p130 = scmp.eq.s32.totalorder %s26, 0
      %p131 = por %p129, %p130
      %p132 = scmp.ne.s32.totalorder %s120, %s121
      %p133 = scmp.eq.s32.totalorder %s27, 1
      %p134 = por %p132, %p133
      %p136 = scmp.ne.s32.totalorder %s121, %s135
      %p137 = scmp.eq.s32.totalorder %s27, 0
      %p138 = por %p136, %p137
      %s140 = sadd.s32 %s139, 1
      %p143 = scmp.eq.s32.totalorder %s21, 1
      %p144 = scmp.ne.s32.totalorder %s139, %s141
      %p145 = scmp.eq.s32.totalorder %s21, 0
      %p146 = por %p144, %p145
      %p147 = scmp.ne.s32.totalorder %s139, %s141
      %p148 = scmp.eq.s32.totalorder %s26, 1
      %p149 = por %p147, %p148
      %p150 = scmp.ne.s32.totalorder %s141, %s142
      %p151 = scmp.eq.s32.totalorder %s26, 0
      %p152 = por %p150, %p151
      %p153 = scmp.ne.s32.totalorder %s141, %s142
      %p154 = scmp.eq.s32.totalorder %s27, 1
      %p155 = por %p153, %p154
      %p157 = scmp.ne.s32.totalorder %s142, %s156
      %p158 = scmp.eq.s32.totalorder %s27, 0
      %p159 = por %p157, %p158
      %s161 = sadd.s32 %s160, 1
      %p164 = scmp.eq.s32.totalorder %s21, 1
      %p165 = scmp.ne.s32.totalorder %s160, %s162
      %p166 = scmp.eq.s32.totalorder %s21, 0
      %p167 = por %p165, %p166
      %p168 = scmp.ne.s32.totalorder %s160, %s162
      %p169 = scmp.eq.s32.totalorder %s26, 1
      %p170 = por %p168, %p169
      %p171 = scmp.ne.s32.totalorder %s162, %s163
      %p172 = scmp.eq.s32.totalorder %s26, 0
      %p173 = por %p171, %p172
      %p174 = scmp.ne.s32.totalorder %s162, %s163
      %p175 = scmp.eq.s32.totalorder %s27, 1
      %p176 = por %p174, %p175
      %p178 = scmp.ne.s32.totalorder %s163, %s177
      %p179 = scmp.eq.s32.totalorder %s27, 0
      %p180 = por %p178, %p179
      %s181 = ssub.s32 %s21, %s28
      %p182 = scmp.eq.s32.totalorder %s181, 0
      %s184 = sadd.s32 %s183, 1
      %s185 = scalar_select %p182, %s183, %s184
      %p188 = pneg %p182
      %p189 = scmp.eq.s32.totalorder %s21, 1
      %p190 = por %p188, %p189
      %p191 = scmp.ne.s32.totalorder %s183, %s186
      %p192 = scmp.eq.s32.totalorder %s21, 0
      %p193 = por %p191, %p192
      %p194 = scmp.ne.s32.totalorder %s183, %s186
      %p195 = scmp.eq.s32.totalorder %s26, 1
      %p196 = por %p194, %p195
      %p197 = scmp.ne.s32.totalorder %s186, %s187
      %p198 = scmp.eq.s32.totalorder %s26, 0
      %p199 = por %p197, %p198
      %p200 = scmp.ne.s32.totalorder %s186, %s187
      %p201 = scmp.eq.s32.totalorder %s27, 1
      %p202 = por %p200, %p201
      %p204 = scmp.ne.s32.totalorder %s187, %s203
      %p205 = scmp.eq.s32.totalorder %s27, 0
      %p206 = por %p204, %p205
      %p207 = scmp.le.s32.totalorder 1, %s21
      %p208 = scmp.lt.s32.totalorder %s21, 3
      %p209 = pnand %p207, %p208
      %p210 = pneg %p209
      // Predicated region
      $region9: #{tpu_custom_call.1} parent=5 // pred_check
        _
      $region10: #{tpu_custom_call.1} parent=5 // pred_check_branch
        %212 = sbr.rel (%p209) target = $region12
      $region11: #{tpu_custom_call.1} parent=5 // pred_region
        %s213 = ssub.s32 %s21, 1
        // Predicated region
        $region13: #{tpu_custom_call.1} parent=11 // pred_check
          %p214 = pneg %p68
        $region14: #{tpu_custom_call.1} parent=11 // pred_check_branch
          %216 = sbr.rel (%p214) target = $region16
        $region15: #{tpu_custom_call.1} parent=11 // pred_region
          _
        $region16: #{tpu_custom_call.1} parent=11 // pred_fallthru
          _
        // Predicated region
        $region17: #{tpu_custom_call.1} parent=11 // pred_check
          %p217 = pneg %p89
        $region18: #{tpu_custom_call.1} parent=11 // pred_check_branch
          %219 = sbr.rel (%p217) target = $region20
        $region19: #{tpu_custom_call.1} parent=11 // pred_region
          _
        $region20: #{tpu_custom_call.1} parent=11 // pred_fallthru
          _
        // Predicated region
        $region21: #{tpu_custom_call.1} parent=11 // pred_check
          %p220 = pneg %p110
        $region22: #{tpu_custom_call.1} parent=11 // pred_check_branch
          %222 = sbr.rel (%p220) target = $region24
        $region23: #{tpu_custom_call.1} parent=11 // pred_region
          _
        $region24: #{tpu_custom_call.1} parent=11 // pred_fallthru
          _
        // Predicated region
        $region25: #{tpu_custom_call.1} parent=11 // pred_check
          %p223 = pneg %p131
        $region26: #{tpu_custom_call.1} parent=11 // pred_check_branch
          %225 = sbr.rel (%p223) target = $region28
        $region27: #{tpu_custom_call.1} parent=11 // pred_region
          _
        $region28: #{tpu_custom_call.1} parent=11 // pred_fallthru
          _
        // Predicated region
        $region29: #{tpu_custom_call.1} parent=11 // pred_check
          %p226 = pneg %p152
        $region30: #{tpu_custom_call.1} parent=11 // pred_check_branch
          %228 = sbr.rel (%p226) target = $region32
        $region31: #{tpu_custom_call.1} parent=11 // pred_region
          %s230 = ssub.s32 8192, 8192
          %231 = vsyncadd [#allocation8], %s230
          %s232 = sshll.u32 [#allocation7], 4
          %s233 = int_to_ptr.vmem [resolvable:$true] %s232
          %238 = dma.hbm_to_vmem [thread:$0]  %s5, 8192, %s233, [#allocation8], 128, 128, 8
        $region32: #{tpu_custom_call.1} parent=11 // pred_fallthru
          _
        // Predicated region
        $region33: #{tpu_custom_call.1} parent=11 // pred_check
          %p239 = pneg %p173
        $region34: #{tpu_custom_call.1} parent=11 // pred_check_branch
          %241 = sbr.rel (%p239) target = $region36
        $region35: #{tpu_custom_call.1} parent=11 // pred_region
          _
        $region36: #{tpu_custom_call.1} parent=11 // pred_fallthru
          _
      $region12: #{tpu_custom_call.1} parent=5 // pred_fallthru
        _
      %p242 = scmp.lt.s32.totalorder %s21, 2
      // Predicated region
      $region37: #{tpu_custom_call.1} parent=5 // pred_check
        %p243 = pneg %p242
      $region38: #{tpu_custom_call.1} parent=5 // pred_check_branch
        %245 = sbr.rel (%p243) target = $region40
      $region39: #{tpu_custom_call.1} parent=5 // pred_region
        // Predicated region
        $region41: #{tpu_custom_call.1} parent=39 // pred_check
          %p246 = pneg %p41
        $region42: #{tpu_custom_call.1} parent=39 // pred_check_branch
          %248 = sbr.rel (%p246) target = $region44
        $region43: #{tpu_custom_call.1} parent=39 // pred_region
          %s249 = sand.u32 %s31, 1
          %s250 = scalar_lea.sflag [#allocation5], %s249
          %s251 = sand.u32 %s31, 1
          %s252 = smul.addr %s251, 128
          %s253 = scalar_lea.vmem [#allocation4], %s252
          %s254 = smul.u32 2, %s21
          %s256 = ssub.s32 2048, 2048
          %257 = vsyncadd %s250, %s256
          %s258 = smul.addr %s254, 8
          %s259 = smul.addr %s258, 128
          %s260 = scalar_lea.hbm %s0, %s259
          %s261 = sshll.u32 %s253, 4
          %s262 = int_to_ptr.vmem [resolvable:$true] %s261
          %267 = dma.hbm_to_vmem [thread:$0]  %s260, 2048, %s262, %s250, 256, 256, 16
        $region44: #{tpu_custom_call.1} parent=39 // pred_fallthru
          _
      $region40: #{tpu_custom_call.1} parent=5 // pred_fallthru
        _
      %p268 = scmp.le.s32.totalorder 1, %s21
      %p269 = scmp.lt.s32.totalorder %s21, 3
      %p270 = pnand %p268, %p269
      %p271 = pneg %p270
      // Predicated region
      $region45: #{tpu_custom_call.1} parent=5 // pred_check
        _
      $region46: #{tpu_custom_call.1} parent=5 // pred_check_branch
        %273 = sbr.rel (%p270) target = $region48
      $region47: #{tpu_custom_call.1} parent=5 // pred_region
        %s274 = ssub.s32 %s21, 1
        %s275 = sand.u32 %s34, 1
        %s276 = scalar_lea.sflag [#allocation5], %s275
        %s277 = sand.u32 %s34, 1
        %s278 = smul.addr %s277, 128
        %s279 = scalar_lea.vmem [#allocation4], %s278
        // Predicated region
        $region49: #{tpu_custom_call.1} parent=47 // pred_check
          %p280 = pneg %p47
        $region50: #{tpu_custom_call.1} parent=47 // pred_check_branch
          %282 = sbr.rel (%p280) target = $region52
        $region51: #{tpu_custom_call.1} parent=47 // pred_region
          %283 = dma.done %s276, 2048
        $region52: #{tpu_custom_call.1} parent=47 // pred_fallthru
          _
        // Predicated region
        $region53: #{tpu_custom_call.1} parent=47 // pred_check
          %p284 = pneg %p152
        $region54: #{tpu_custom_call.1} parent=47 // pred_check_branch
          %286 = sbr.rel (%p284) target = $region56
        $region55: #{tpu_custom_call.1} parent=47 // pred_region
          %287 = dma.done [#allocation8], 8192
        $region56: #{tpu_custom_call.1} parent=47 // pred_fallthru
          _
        %s288 = sand.u32 %s34, 1
        %s289 = scalar_lea.sflag [#allocation5], %s288
        %s290 = sand.u32 %s34, 1
        %s291 = smul.addr %s290, 128
        %s292 = scalar_lea.vmem [#allocation4], %s291
        %p293 = pneg %p47
        %p294 = pneg %p44
        %p295 = pneg %p68
        %p296 = pneg %p65
        %p297 = pneg %p89
        %p298 = pneg %p86
        %p299 = pneg %p110
        %p300 = pneg %p107
        %p301 = pneg %p131
        %p302 = pneg %p128
        %p303 = pneg %p152
        %p304 = pneg %p149
        %p305 = pneg %p173
        %p306 = pneg %p170
        %p307 = pneg %p199
        %p308 = pneg %p196
        %s309 = sand.u32 %s186, 1
        %s310 = scalar_lea.sflag [#allocation6], %s309
        %s311 = sand.u32 %s186, 1
        %s312 = smul.addr %s311, 128
        %s313 = scalar_lea.vmem [#allocation9], %s312
        %s314 = smul.u32 2, %s26
        %s315 = smul.u32 2, %s26
        %v316 = vld [vmem:[%s1] sm:$0xff]
        %v317 = vld [vmem:[%s1 + $0x8] sm:$0xff]
        %v318 = vld [vmem:[%s1 + $0x10] sm:$0xff]
        %v319 = vld [vmem:[%s1 + $0x18] sm:$0xff]
        %v320 = vld [vmem:[%s2] sm:$0x1]
        %v321 = vld [vmem:[%s3] sm:$0xff]
        %v322 = vld [vmem:[%s3 + $0x8] sm:$0xff]
        %v323 = vld [vmem:[%s3 + $0x10] sm:$0xff]
        %v324 = vld [vmem:[%s3 + $0x18] sm:$0xff]
        %v325 = vld [vmem:[%s4] sm:$0xff]
        %v326 = vld [vmem:[%s4 + $0x8] sm:$0xff]
        %v327 = vld [vmem:[%s4 + $0x10] sm:$0xff]
        %v328 = vld [vmem:[%s4 + $0x18] sm:$0xff]
        %v329 = vld [vmem:[%s279] sm:$0xff]
        %v330 = vld [vmem:[%s279 + $0x8] sm:$0xff]
        %v331 = vld [vmem:[%s279 + $0x10] sm:$0xff]
        %v332 = vld [vmem:[%s279 + $0x18] sm:$0xff]
        %v333 = vld [vmem:[%s279 + $0x20] sm:$0xff]
        %v334 = vld [vmem:[%s279 + $0x28] sm:$0xff]
        %v335 = vld [vmem:[%s279 + $0x30] sm:$0xff]
        %v336 = vld [vmem:[%s279 + $0x38] sm:$0xff]
        %v337 = vmax.f32 %v329, %v330
        %338 = vmax.xlane.f32.xlu0 %v337
        %v339 = vpop.xlane.xlu0 %338
        %v340 = vmax.f32 %v331, %v332
        %341 = vmax.xlane.f32.xlu0 %v340
        %v342 = vpop.xlane.xlu0 %341
        %v343 = vmax.f32 %v333, %v334
        %344 = vmax.xlane.f32.xlu0 %v343
        %v345 = vpop.xlane.xlu0 %344
        %v346 = vmax.f32 %v335, %v336
        %347 = vmax.xlane.f32.xlu0 %v346
        %v348 = vpop.xlane.xlu0 %347
        %v349 = vadd.f32 %v329, %v330
        %350 = vadd.xlane.f32.xlu0 %v349
        %v351 = vpop.xlane.xlu0 %350
        %v352 = vadd.f32 %v331, %v332
        %353 = vadd.xlane.f32.xlu0 %v352
        %v354 = vpop.xlane.xlu0 %353
        %v355 = vadd.f32 %v333, %v334
        %356 = vadd.xlane.f32.xlu0 %v355
        %v357 = vpop.xlane.xlu0 %356
        %v358 = vadd.f32 %v335, %v336
        %359 = vadd.xlane.f32.xlu0 %v358
        %v360 = vpop.xlane.xlu0 %359
        %v361 = vmul.f32 %v351, 0.00390625
        %v362 = vmul.f32 %v354, 0.00390625
        %v363 = vmul.f32 %v357, 0.00390625
        %v364 = vmul.f32 %v360, 0.00390625
        %v365 = vmul.f32 %v316, %v339
        %v366 = vmul.f32 %v317, %v342
        %v367 = vmul.f32 %v318, %v345
        %v368 = vmul.f32 %v319, %v348
        %vm369 = vcmask 64512
        %v370 = vsel %vm369, %v365, 0.0
        %v371 = vsel %vm369, %v366, 0.0
        %v372 = vadd.f32 %v370, %v371
        %v373 = vsel %vm369, %v367, 0.0
        %v374 = vadd.f32 %v372, %v373
        %v375 = vsel %vm369, %v368, 0.0
        %v376 = vadd.f32 %v374, %v375
        %v377 = vrot.slane %v376, 4
        %v378 = vadd.f32 %v376, %v377
        %v379 = vrot.slane %v378, 2
        %v380 = vadd.f32 %v378, %v379
        %v381 = vrot.slane %v380, 1
        %v382 = vadd.f32 %v380, %v381
        %v383 = vadd.f32 %v382, %v320
        %v384 = vmax.f32 %v383, 0.0
        %v385 = vmul.f32 %v316, %v361
        %v386 = vmul.f32 %v317, %v362
        %v387 = vmul.f32 %v318, %v363
        %v388 = vmul.f32 %v319, %v364
        %v389 = vsel %vm369, %v385, 0.0
        %v390 = vsel %vm369, %v386, 0.0
        %v391 = vadd.f32 %v389, %v390
        %v392 = vsel %vm369, %v387, 0.0
        %v393 = vadd.f32 %v391, %v392
        %v394 = vsel %vm369, %v388, 0.0
        %v395 = vadd.f32 %v393, %v394
        %v396 = vrot.slane %v395, 4
        %v397 = vadd.f32 %v395, %v396
        %v398 = vrot.slane %v397, 2
        %v399 = vadd.f32 %v397, %v398
        %v400 = vrot.slane %v399, 1
        %v401 = vadd.f32 %v399, %v400
        %v402 = vadd.f32 %v401, %v320
        %v403 = vmax.f32 %v402, 0.0
        %v404 = vadd.f32 %v384, %v403
        %v405 = vlaneseq
        %v406 = vshrl.u32 %v405, 7
        %v407 = vsub.s32 0, %v406
        %v408 = vrot.slane %v404, %v407
        %v409 = vmul.f32 %v321, %v408
        %v410 = vmul.f32 %v322, %v408
        %v411 = vmul.f32 %v323, %v408
        %v412 = vmul.f32 %v324, %v408
        %v413 = vsel %vm369, %v409, 0.0
        %414 = vadd.xlane.f32.xlu0 %v413
        %v415 = vpop.xlane.xlu0 %414
        %v416 = vsel %vm369, %v410, 0.0
        %417 = vadd.xlane.f32.xlu0 %v416
        %v418 = vpop.xlane.xlu0 %417
        %v419 = vsel %vm369, %v411, 0.0
        %420 = vadd.xlane.f32.xlu0 %v419
        %v421 = vpop.xlane.xlu0 %420
        %v422 = vsel %vm369, %v412, 0.0
        %423 = vadd.xlane.f32.xlu0 %v422
        %v424 = vpop.xlane.xlu0 %423
        %v425 = vmul.f32 %v325, 2.0
        %v426 = vmul.f32 %v326, 2.0
        %v427 = vmul.f32 %v327, 2.0
        %v428 = vmul.f32 %v328, 2.0
        %v429 = vadd.f32 %v415, %v425
        %v430 = vadd.f32 %v418, %v426
        %v431 = vadd.f32 %v421, %v427
        %v432 = vadd.f32 %v424, %v428
        %v433 = vxor.u32 %v429, 2147483648
        %v434 = vxor.u32 %v430, 2147483648
        %v435 = vxor.u32 %v431, 2147483648
        %v436 = vxor.u32 %v432, 2147483648
        %v437 = vmul.f32 %v433, 1.442695
        %v438 = vpow.pop %v437
        %v439 = vmul.f32 %v434, 1.442695
        %v440 = vpow.pop %v439
        %v441 = vmul.f32 %v435, 1.442695
        %v442 = vpow.pop %v441
        %v443 = vmul.f32 %v436, 1.442695
        %v444 = vpow.pop %v443
        %v445 = vadd.f32 %v438, 1.0
        %v446 = vadd.f32 %v440, 1.0
        %v447 = vadd.f32 %v442, 1.0
        %v448 = vadd.f32 %v444, 1.0
        %v449 = vrcp.pop %v445
        %v450 = vmul.f32 1.0, %v449
        %v451 = vrcp.pop %v446
        %v452 = vmul.f32 1.0, %v451
        %v453 = vrcp.pop %v447
        %v454 = vmul.f32 1.0, %v453
        %v455 = vrcp.pop %v448
        %v456 = vmul.f32 1.0, %v455
        %458 = vset.pattern.permute.xlu0 0
        %459 = vperm.xlu0 %458, %v450
        %v460 = vpop.permute.xlu0 %459
        %463 = vset.pattern.permute.xlu0 0
        %464 = vperm.xlu0 %463, %v452
        %v465 = vpop.permute.xlu0 %464
        %468 = vset.pattern.permute.xlu0 0
        %469 = vperm.xlu0 %468, %v454
        %v470 = vpop.permute.xlu0 %469
        %473 = vset.pattern.permute.xlu0 0
        %474 = vperm.xlu0 %473, %v456
        %v475 = vpop.permute.xlu0 %474
        %v477 = vmul.f32 %v329, %v460
        %v478 = vmul.f32 %v330, %v460
        %v479 = vmul.f32 %v331, %v465
        %v480 = vmul.f32 %v332, %v465
        %v481 = vmul.f32 %v333, %v470
        %v482 = vmul.f32 %v334, %v470
        %v483 = vmul.f32 %v335, %v475
        %v484 = vmul.f32 %v336, %v475
        %485 = vst [vmem:[%s313] sm:$0xff] %v477
        %486 = vst [vmem:[%s313 + $0x8] sm:$0xff] %v478
        %487 = vst [vmem:[%s313 + $0x10] sm:$0xff] %v479
        %488 = vst [vmem:[%s313 + $0x18] sm:$0xff] %v480
        %489 = vst [vmem:[%s313 + $0x20] sm:$0xff] %v481
        %490 = vst [vmem:[%s313 + $0x28] sm:$0xff] %v482
        %491 = vst [vmem:[%s313 + $0x30] sm:$0xff] %v483
        %492 = vst [vmem:[%s313 + $0x38] sm:$0xff] %v484
        %v493 = vmax.f32 %v477, %v481
        %v494 = vmax.f32 %v479, %v483
        %v495 = vmax.f32 %v493, %v494
        %v496 = vrot.slane %v495, 4
        %v497 = vmax.f32 %v495, %v496
        %v498 = vrot.slane %v497, 2
        %v499 = vmax.f32 %v497, %v498
        %v500 = vrot.slane %v499, 1
        %v501 = vmax.f32 %v499, %v500
        %v502 = vmax.f32 %v478, %v482
        %v503 = vmax.f32 %v480, %v484
        %v504 = vmax.f32 %v502, %v503
        %v505 = vrot.slane %v504, 4
        %v506 = vmax.f32 %v504, %v505
        %v507 = vrot.slane %v506, 2
        %v508 = vmax.f32 %v506, %v507
        %v509 = vrot.slane %v508, 1
        %v510 = vmax.f32 %v508, %v509
        %v511 = vadd.f32 %v477, %v479
        %v512 = vadd.f32 %v511, %v481
        %v513 = vadd.f32 %v512, %v483
        %v514 = vrot.slane %v513, 4
        %v515 = vadd.f32 %v513, %v514
        %v516 = vrot.slane %v515, 2
        %v517 = vadd.f32 %v515, %v516
        %v518 = vrot.slane %v517, 1
        %v519 = vadd.f32 %v517, %v518
        %v520 = vadd.f32 %v478, %v480
        %v521 = vadd.f32 %v520, %v482
        %v522 = vadd.f32 %v521, %v484
        %v523 = vrot.slane %v522, 4
        %v524 = vadd.f32 %v522, %v523
        %v525 = vrot.slane %v524, 2
        %v526 = vadd.f32 %v524, %v525
        %v527 = vrot.slane %v526, 1
        %v528 = vadd.f32 %v526, %v527
        %v531 = vcombine.low %v501, %v510
        %v533 = vunpack.c.l.s4 1966171168
        %v534 = vunpack.c.0.s8 %v533
        %v535 = vlaneseq
        %v536 = vshrl.u32 %v535, 7
        %v537 = vsub.s32 %v534, %v536
        %v538 = vrot.slane %v531, %v537
        %v540 = vunpack.c.l.s4 1966171168
        %v541 = vunpack.c.0.s8 %v540
        %v542 = vlaneseq
        %v543 = vshrl.u32 %v542, 7
        %v544 = vsub.s32 %v541, %v543
        %v545 = vrot.slane %v538, %v544
        %v547 = vlaneseq
        %vm548 = vcmp.ge.s32.totalorder %v547, 0
        %vm549 = vcmp.lt.s32.totalorder %v547, 256
        %vm550 = vmand %vm548, %vm549
        %551 = vst.msk [vmem:[#allocation2] ss:$2 sm:$0x3] %vm550, %v545
        %v554 = vcombine.low %v519, %v528
        %v556 = vunpack.c.l.s4 1966171168
        %v557 = vunpack.c.0.s8 %v556
        %v558 = vlaneseq
        %v559 = vshrl.u32 %v558, 7
        %v560 = vsub.s32 %v557, %v559
        %v561 = vrot.slane %v554, %v560
        %v563 = vunpack.c.l.s4 1966171168
        %v564 = vunpack.c.0.s8 %v563
        %v565 = vlaneseq
        %v566 = vshrl.u32 %v565, 7
        %v567 = vsub.s32 %v564, %v566
        %v568 = vrot.slane %v561, %v567
        %s570 = scalar_lea.vmem [#allocation2], 4
        %571 = vst.msk [vmem:[%s570] ss:$2 sm:$0x3] %vm550, %v568
        %s572 = scalar_lea.vmem %s279, 64 [#allocation4]
        %v573 = vld [vmem:[%s572] sm:$0xff]
        %v574 = vld [vmem:[%s572 + $0x8] sm:$0xff]
        %v575 = vld [vmem:[%s572 + $0x10] sm:$0xff]
        %v576 = vld [vmem:[%s572 + $0x18] sm:$0xff]
        %v577 = vld [vmem:[%s572 + $0x20] sm:$0xff]
        %v578 = vld [vmem:[%s572 + $0x28] sm:$0xff]
        %v579 = vld [vmem:[%s572 + $0x30] sm:$0xff]
        %v580 = vld [vmem:[%s572 + $0x38] sm:$0xff]
        %v581 = vmax.f32 %v573, %v574
        %582 = vmax.xlane.f32.xlu0 %v581
        %v583 = vpop.xlane.xlu0 %582
        %v584 = vmax.f32 %v575, %v576
        %585 = vmax.xlane.f32.xlu0 %v584
        %v586 = vpop.xlane.xlu0 %585
        %v587 = vmax.f32 %v577, %v578
        %588 = vmax.xlane.f32.xlu0 %v587
        %v589 = vpop.xlane.xlu0 %588
        %v590 = vmax.f32 %v579, %v580
        %591 = vmax.xlane.f32.xlu0 %v590
        %v592 = vpop.xlane.xlu0 %591
        %v593 = vadd.f32 %v573, %v574
        %594 = vadd.xlane.f32.xlu0 %v593
        %v595 = vpop.xlane.xlu0 %594
        %v596 = vadd.f32 %v575, %v576
        %597 = vadd.xlane.f32.xlu0 %v596
        %v598 = vpop.xlane.xlu0 %597
        %v599 = vadd.f32 %v577, %v578
        %600 = vadd.xlane.f32.xlu0 %v599
        %v601 = vpop.xlane.xlu0 %600
        %v602 = vadd.f32 %v579, %v580
        %603 = vadd.xlane.f32.xlu0 %v602
        %v604 = vpop.xlane.xlu0 %603
        %v605 = vmul.f32 %v595, 0.00390625
        %v606 = vmul.f32 %v598, 0.00390625
        %v607 = vmul.f32 %v601, 0.00390625
        %v608 = vmul.f32 %v604, 0.00390625
        %v609 = vmul.f32 %v316, %v583
        %v610 = vmul.f32 %v317, %v586
        %v611 = vmul.f32 %v318, %v589
        %v612 = vmul.f32 %v319, %v592
        %v613 = vsel %vm369, %v609, 0.0
        %v614 = vsel %vm369, %v610, 0.0
        %v615 = vadd.f32 %v613, %v614
        %v616 = vsel %vm369, %v611, 0.0
        %v617 = vadd.f32 %v615, %v616
        %v618 = vsel %vm369, %v612, 0.0
        %v619 = vadd.f32 %v617, %v618
        %v620 = vrot.slane %v619, 4
        %v621 = vadd.f32 %v619, %v620
        %v622 = vrot.slane %v621, 2
        %v623 = vadd.f32 %v621, %v622
        %v624 = vrot.slane %v623, 1
        %v625 = vadd.f32 %v623, %v624
        %v626 = vadd.f32 %v625, %v320
        %v627 = vmax.f32 %v626, 0.0
        %v628 = vmul.f32 %v316, %v605
        %v629 = vmul.f32 %v317, %v606
        %v630 = vmul.f32 %v318, %v607
        %v631 = vmul.f32 %v319, %v608
        %v632 = vsel %vm369, %v628, 0.0
        %v633 = vsel %vm369, %v629, 0.0
        %v634 = vadd.f32 %v632, %v633
        %v635 = vsel %vm369, %v630, 0.0
        %v636 = vadd.f32 %v634, %v635
        %v637 = vsel %vm369, %v631, 0.0
        %v638 = vadd.f32 %v636, %v637
        %v639 = vrot.slane %v638, 4
        %v640 = vadd.f32 %v638, %v639
        %v641 = vrot.slane %v640, 2
        %v642 = vadd.f32 %v640, %v641
        %v643 = vrot.slane %v642, 1
        %v644 = vadd.f32 %v642, %v643
        %v645 = vadd.f32 %v644, %v320
        %v646 = vmax.f32 %v645, 0.0
        %v647 = vadd.f32 %v627, %v646
        %v648 = vlaneseq
        %v649 = vshrl.u32 %v648, 7
        %v650 = vsub.s32 0, %v649
        %v651 = vrot.slane %v647, %v650
        %v652 = vmul.f32 %v321, %v651
        %v653 = vmul.f32 %v322, %v651
        %v654 = vmul.f32 %v323, %v651
        %v655 = vmul.f32 %v324, %v651
        %v656 = vsel %vm369, %v652, 0.0
        %657 = vadd.xlane.f32.xlu0 %v656
        %v658 = vpop.xlane.xlu0 %657
        %v659 = vsel %vm369, %v653, 0.0
        %660 = vadd.xlane.f32.xlu0 %v659
        %v661 = vpop.xlane.xlu0 %660
        %v662 = vsel %vm369, %v654, 0.0
        %663 = vadd.xlane.f32.xlu0 %v662
        %v664 = vpop.xlane.xlu0 %663
        %v665 = vsel %vm369, %v655, 0.0
        %666 = vadd.xlane.f32.xlu0 %v665
        %v667 = vpop.xlane.xlu0 %666
        %v668 = vadd.f32 %v658, %v425
        %v669 = vadd.f32 %v661, %v426
        %v670 = vadd.f32 %v664, %v427
        %v671 = vadd.f32 %v667, %v428
        %v672 = vxor.u32 %v668, 2147483648
        %v673 = vxor.u32 %v669, 2147483648
        %v674 = vxor.u32 %v670, 2147483648
        %v675 = vxor.u32 %v671, 2147483648
        %v676 = vmul.f32 %v672, 1.442695
        %v677 = vpow.pop %v676
        %v678 = vmul.f32 %v673, 1.442695
        %v679 = vpow.pop %v678
        %v680 = vmul.f32 %v674, 1.442695
        %v681 = vpow.pop %v680
        %v682 = vmul.f32 %v675, 1.442695
        %v683 = vpow.pop %v682
        %v684 = vadd.f32 %v677, 1.0
        %v685 = vadd.f32 %v679, 1.0
        %v686 = vadd.f32 %v681, 1.0
        %v687 = vadd.f32 %v683, 1.0
        %v688 = vrcp.pop %v684
        %v689 = vmul.f32 1.0, %v688
        %v690 = vrcp.pop %v685
        %v691 = vmul.f32 1.0, %v690
        %v692 = vrcp.pop %v686
        %v693 = vmul.f32 1.0, %v692
        %v694 = vrcp.pop %v687
        %v695 = vmul.f32 1.0, %v694
        %697 = vset.pattern.permute.xlu0 0
        %698 = vperm.xlu0 %697, %v689
        %v699 = vpop.permute.xlu0 %698
        %702 = vset.pattern.permute.xlu0 0
        %703 = vperm.xlu0 %702, %v691
        %v704 = vpop.permute.xlu0 %703
        %707 = vset.pattern.permute.xlu0 0
        %708 = vperm.xlu0 %707, %v693
        %v709 = vpop.permute.xlu0 %708
        %712 = vset.pattern.permute.xlu0 0
        %713 = vperm.xlu0 %712, %v695
        %v714 = vpop.permute.xlu0 %713
        %v716 = vmul.f32 %v573, %v699
        %v717 = vmul.f32 %v574, %v699
        %v718 = vmul.f32 %v575, %v704
        %v719 = vmul.f32 %v576, %v704
        %v720 = vmul.f32 %v577, %v709
        %v721 = vmul.f32 %v578, %v709
        %v722 = vmul.f32 %v579, %v714
        %v723 = vmul.f32 %v580, %v714
        %s724 = scalar_lea.vmem %s313, 64 [#allocation9]
        %725 = vst [vmem:[%s724] sm:$0xff] %v716
        %726 = vst [vmem:[%s724 + $0x8] sm:$0xff] %v717
        %727 = vst [vmem:[%s724 + $0x10] sm:$0xff] %v718
        %728 = vst [vmem:[%s724 + $0x18] sm:$0xff] %v719
        %729 = vst [vmem:[%s724 + $0x20] sm:$0xff] %v720
        %730 = vst [vmem:[%s724 + $0x28] sm:$0xff] %v721
        %731 = vst [vmem:[%s724 + $0x30] sm:$0xff] %v722
        %732 = vst [vmem:[%s724 + $0x38] sm:$0xff] %v723
        %v733 = vmax.f32 %v716, %v720
        %v734 = vmax.f32 %v718, %v722
        %v735 = vmax.f32 %v733, %v734
        %v736 = vrot.slane %v735, 4
        %v737 = vmax.f32 %v735, %v736
        %v738 = vrot.slane %v737, 2
        %v739 = vmax.f32 %v737, %v738
        %v740 = vrot.slane %v739, 1
        %v741 = vmax.f32 %v739, %v740
        %v742 = vmax.f32 %v717, %v721
        %v743 = vmax.f32 %v719, %v723
        %v744 = vmax.f32 %v742, %v743
        %v745 = vrot.slane %v744, 4
        %v746 = vmax.f32 %v744, %v745
        %v747 = vrot.slane %v746, 2
        %v748 = vmax.f32 %v746, %v747
        %v749 = vrot.slane %v748, 1
        %v750 = vmax.f32 %v748, %v749
        %v751 = vadd.f32 %v716, %v718
        %v752 = vadd.f32 %v751, %v720
        %v753 = vadd.f32 %v752, %v722
        %v754 = vrot.slane %v753, 4
        %v755 = vadd.f32 %v753, %v754
        %v756 = vrot.slane %v755, 2
        %v757 = vadd.f32 %v755, %v756
        %v758 = vrot.slane %v757, 1
        %v759 = vadd.f32 %v757, %v758
        %v760 = vadd.f32 %v717, %v719
        %v761 = vadd.f32 %v760, %v721
        %v762 = vadd.f32 %v761, %v723
        %v763 = vrot.slane %v762, 4
        %v764 = vadd.f32 %v762, %v763
        %v765 = vrot.slane %v764, 2
        %v766 = vadd.f32 %v764, %v765
        %v767 = vrot.slane %v766, 1
        %v768 = vadd.f32 %v766, %v767
        %v771 = vcombine.low %v741, %v750
        %v773 = vunpack.c.l.s4 1966171168
        %v774 = vunpack.c.0.s8 %v773
        %v775 = vlaneseq
        %v776 = vshrl.u32 %v775, 7
        %v777 = vsub.s32 %v774, %v776
        %v778 = vrot.slane %v771, %v777
        %v780 = vunpack.c.l.s4 1966171168
        %v781 = vunpack.c.0.s8 %v780
        %v782 = vlaneseq
        %v783 = vshrl.u32 %v782, 7
        %v784 = vsub.s32 %v781, %v783
        %v785 = vrot.slane %v778, %v784
        %s787 = scalar_lea.vmem [#allocation2], 1
        %788 = vst.msk [vmem:[%s787] ss:$2 sm:$0x3] %vm550, %v785
        %v791 = vcombine.low %v759, %v768
        %v793 = vunpack.c.l.s4 1966171168
        %v794 = vunpack.c.0.s8 %v793
        %v795 = vlaneseq
        %v796 = vshrl.u32 %v795, 7
        %v797 = vsub.s32 %v794, %v796
        %v798 = vrot.slane %v791, %v797
        %v800 = vunpack.c.l.s4 1966171168
        %v801 = vunpack.c.0.s8 %v800
        %v802 = vlaneseq
        %v803 = vshrl.u32 %v802, 7
        %v804 = vsub.s32 %v801, %v803
        %v805 = vrot.slane %v798, %v804
        %s807 = scalar_lea.vmem [#allocation2], 5
        %808 = vst.msk [vmem:[%s807] ss:$2 sm:$0x3] %vm550, %v805
        %v809 = vld [vmem:[#allocation2] sm:$0xff]
        %v811 = vcombine.high %v809, %v809
        %v813 = vunpack.c.l.s4 1983009808
        %v814 = vunpack.c.0.s8 %v813
        %v815 = vlaneseq
        %v816 = vshrl.u32 %v815, 7
        %v817 = vsub.s32 %v814, %v816
        %v818 = vrot.slane %v809, %v817
        %v820 = vunpack.c.l.s4 1983009808
        %v821 = vunpack.c.0.s8 %v820
        %v822 = vlaneseq
        %v823 = vshrl.u32 %v822, 7
        %v824 = vsub.s32 %v821, %v823
        %v825 = vrot.slane %v811, %v824
        %v826 = vcombine.high %v818, %v818
        %v827 = vcombine.high %v825, %v825
        %v832 = vpack.c.bf16 %v818, %v818
        %v833 = vpack.c.bf16 %v826, %v826
        %v834 = vpack.c.bf16 %v825, %v825
        %v835 = vpack.c.bf16 %v827, %v827
        %v836 = vld [vmem:[#allocation7] sm:$0xff]
        %v837 = vld [vmem:[#allocation7 + $0x8] sm:$0xff]
        %v838 = vld [vmem:[#allocation7 + $0x10] sm:$0xff]
        %v839 = vld [vmem:[#allocation7 + $0x18] sm:$0xff]
        %v840 = vld [vmem:[#allocation7 + $0x20] sm:$0xff]
        %v841 = vld [vmem:[#allocation7 + $0x28] sm:$0xff]
        %v842 = vld [vmem:[#allocation7 + $0x30] sm:$0xff]
        %v843 = vld [vmem:[#allocation7 + $0x38] sm:$0xff]
        %v844 = vld [vmem:[#allocation7 + $0x40] sm:$0xff]
        %v845 = vld [vmem:[#allocation7 + $0x48] sm:$0xff]
        %v846 = vld [vmem:[#allocation7 + $0x50] sm:$0xff]
        %v847 = vld [vmem:[#allocation7 + $0x58] sm:$0xff]
        %v848 = vld [vmem:[#allocation7 + $0x60] sm:$0xff]
        %v849 = vld [vmem:[#allocation7 + $0x68] sm:$0xff]
        %v850 = vld [vmem:[#allocation7 + $0x70] sm:$0xff]
        %v851 = vld [vmem:[#allocation7 + $0x78] sm:$0xff]
        %v852 = vld [vmem:[#allocation7 + $0x80] sm:$0xff]
        %v853 = vld [vmem:[#allocation7 + $0x88] sm:$0xff]
        %v854 = vld [vmem:[#allocation7 + $0x90] sm:$0xff]
        %v855 = vld [vmem:[#allocation7 + $0x98] sm:$0xff]
        %v856 = vld [vmem:[#allocation7 + $0xa0] sm:$0xff]
        %v857 = vld [vmem:[#allocation7 + $0xa8] sm:$0xff]
        %v858 = vld [vmem:[#allocation7 + $0xb0] sm:$0xff]
        %v859 = vld [vmem:[#allocation7 + $0xb8] sm:$0xff]
        %v860 = vld [vmem:[#allocation7 + $0xc0] sm:$0xff]
        %v861 = vld [vmem:[#allocation7 + $0xc8] sm:$0xff]
        %v862 = vld [vmem:[#allocation7 + $0xd0] sm:$0xff]
        %v863 = vld [vmem:[#allocation7 + $0xd8] sm:$0xff]
        %v864 = vld [vmem:[#allocation7 + $0xe0] sm:$0xff]
        %v865 = vld [vmem:[#allocation7 + $0xe8] sm:$0xff]
        %v866 = vld [vmem:[#allocation7 + $0xf0] sm:$0xff]
        %v867 = vld [vmem:[#allocation7 + $0xf8] sm:$0xff]
        %v868 = vld [vmem:[#allocation7 + $0x100] sm:$0xff]
        %v869 = vld [vmem:[#allocation7 + $0x108] sm:$0xff]
        %v870 = vld [vmem:[#allocation7 + $0x110] sm:$0xff]
        %v871 = vld [vmem:[#allocation7 + $0x118] sm:$0xff]
        %v872 = vld [vmem:[#allocation7 + $0x120] sm:$0xff]
        %v873 = vld [vmem:[#allocation7 + $0x128] sm:$0xff]
        %v874 = vld [vmem:[#allocation7 + $0x130] sm:$0xff]
        %v875 = vld [vmem:[#allocation7 + $0x138] sm:$0xff]
        %v876 = vld [vmem:[#allocation7 + $0x140] sm:$0xff]
        %v877 = vld [vmem:[#allocation7 + $0x148] sm:$0xff]
        %v878 = vld [vmem:[#allocation7 + $0x150] sm:$0xff]
        %v879 = vld [vmem:[#allocation7 + $0x158] sm:$0xff]
        %v880 = vld [vmem:[#allocation7 + $0x160] sm:$0xff]
        %v881 = vld [vmem:[#allocation7 + $0x168] sm:$0xff]
        %v882 = vld [vmem:[#allocation7 + $0x170] sm:$0xff]
        %v883 = vld [vmem:[#allocation7 + $0x178] sm:$0xff]
        %v884 = vld [vmem:[#allocation7 + $0x180] sm:$0xff]
        %v885 = vld [vmem:[#allocation7 + $0x188] sm:$0xff]
        %v886 = vld [vmem:[#allocation7 + $0x190] sm:$0xff]
        %v887 = vld [vmem:[#allocation7 + $0x198] sm:$0xff]
        %v888 = vld [vmem:[#allocation7 + $0x1a0] sm:$0xff]
        %v889 = vld [vmem:[#allocation7 + $0x1a8] sm:$0xff]
        %v890 = vld [vmem:[#allocation7 + $0x1b0] sm:$0xff]
        %v891 = vld [vmem:[#allocation7 + $0x1b8] sm:$0xff]
        %v892 = vld [vmem:[#allocation7 + $0x1c0] sm:$0xff]
        %v893 = vld [vmem:[#allocation7 + $0x1c8] sm:$0xff]
        %v894 = vld [vmem:[#allocation7 + $0x1d0] sm:$0xff]
        %v895 = vld [vmem:[#allocation7 + $0x1d8] sm:$0xff]
        %v896 = vld [vmem:[#allocation7 + $0x1e0] sm:$0xff]
        %v897 = vld [vmem:[#allocation7 + $0x1e8] sm:$0xff]
        %v898 = vld [vmem:[#allocation7 + $0x1f0] sm:$0xff]
        %v899 = vld [vmem:[#allocation7 + $0x1f8] sm:$0xff]
        %s900 = sld [smem:[#allocation3]]
        %v901 = vstv %s900
        %v966 = vunpack.c.l.b16 %v836
        %v967 = vunpack.c.h.b16 %v836
        %v968 = vunpack.c.l.b16 %v837
        %v969 = vunpack.c.h.b16 %v837
        %v970 = vunpack.c.l.b16 %v838
        %v971 = vunpack.c.h.b16 %v838
        %v972 = vunpack.c.l.b16 %v839
        %v973 = vunpack.c.h.b16 %v839
        %v974 = vunpack.c.l.b16 %v840
        %v975 = vunpack.c.h.b16 %v840
        %v976 = vunpack.c.l.b16 %v841
        %v977 = vunpack.c.h.b16 %v841
        %v978 = vunpack.c.l.b16 %v842
        %v979 = vunpack.c.h.b16 %v842
        %v980 = vunpack.c.l.b16 %v843
        %v981 = vunpack.c.h.b16 %v843
        %v982 = vunpack.c.l.b16 %v844
        %v983 = vunpack.c.h.b16 %v844
        %v984 = vunpack.c.l.b16 %v845
        %v985 = vunpack.c.h.b16 %v845
        %v986 = vunpack.c.l.b16 %v846
        %v987 = vunpack.c.h.b16 %v846
        %v988 = vunpack.c.l.b16 %v847
        %v989 = vunpack.c.h.b16 %v847
        %v990 = vunpack.c.l.b16 %v848
        %v991 = vunpack.c.h.b16 %v848
        %v992 = vunpack.c.l.b16 %v849
        %v993 = vunpack.c.h.b16 %v849
        %v994 = vunpack.c.l.b16 %v850
        %v995 = vunpack.c.h.b16 %v850
        %v996 = vunpack.c.l.b16 %v851
        %v997 = vunpack.c.h.b16 %v851
        %v998 = vunpack.c.l.b16 %v852
        %v999 = vunpack.c.h.b16 %v852
        %v1000 = vunpack.c.l.b16 %v853
        %v1001 = vunpack.c.h.b16 %v853
        %v1002 = vunpack.c.l.b16 %v854
        %v1003 = vunpack.c.h.b16 %v854
        %v1004 = vunpack.c.l.b16 %v855
        %v1005 = vunpack.c.h.b16 %v855
        %v1006 = vunpack.c.l.b16 %v856
        %v1007 = vunpack.c.h.b16 %v856
        %v1008 = vunpack.c.l.b16 %v857
        %v1009 = vunpack.c.h.b16 %v857
        %v1010 = vunpack.c.l.b16 %v858
        %v1011 = vunpack.c.h.b16 %v858
        %v1012 = vunpack.c.l.b16 %v859
        %v1013 = vunpack.c.h.b16 %v859
        %v1014 = vunpack.c.l.b16 %v860
        %v1015 = vunpack.c.h.b16 %v860
        %v1016 = vunpack.c.l.b16 %v861
        %v1017 = vunpack.c.h.b16 %v861
        %v1018 = vunpack.c.l.b16 %v862
        %v1019 = vunpack.c.h.b16 %v862
        %v1020 = vunpack.c.l.b16 %v863
        %v1021 = vunpack.c.h.b16 %v863
        %v1022 = vunpack.c.l.b16 %v864
        %v1023 = vunpack.c.h.b16 %v864
        %v1024 = vunpack.c.l.b16 %v865
        %v1025 = vunpack.c.h.b16 %v865
        %v1026 = vunpack.c.l.b16 %v866
        %v1027 = vunpack.c.h.b16 %v866
        %v1028 = vunpack.c.l.b16 %v867
        %v1029 = vunpack.c.h.b16 %v867
        %v1030 = vunpack.c.l.b16 %v868
        %v1031 = vunpack.c.h.b16 %v868
        %v1032 = vunpack.c.l.b16 %v869
        %v1033 = vunpack.c.h.b16 %v869
        %v1034 = vunpack.c.l.b16 %v870
        %v1035 = vunpack.c.h.b16 %v870
        %v1036 = vunpack.c.l.b16 %v871
        %v1037 = vunpack.c.h.b16 %v871
        %v1038 = vunpack.c.l.b16 %v872
        %v1039 = vunpack.c.h.b16 %v872
        %v1040 = vunpack.c.l.b16 %v873
        %v1041 = vunpack.c.h.b16 %v873
        %v1042 = vunpack.c.l.b16 %v874
        %v1043 = vunpack.c.h.b16 %v874
        %v1044 = vunpack.c.l.b16 %v875
        %v1045 = vunpack.c.h.b16 %v875
        %v1046 = vunpack.c.l.b16 %v876
        %v1047 = vunpack.c.h.b16 %v876
        %v1048 = vunpack.c.l.b16 %v877
        %v1049 = vunpack.c.h.b16 %v877
        %v1050 = vunpack.c.l.b16 %v878
        %v1051 = vunpack.c.h.b16 %v878
        %v1052 = vunpack.c.l.b16 %v879
        %v1053 = vunpack.c.h.b16 %v879
        %v1054 = vunpack.c.l.b16 %v880
        %v1055 = vunpack.c.h.b16 %v880
        %v1056 = vunpack.c.l.b16 %v881
        %v1057 = vunpack.c.h.b16 %v881
        %v1058 = vunpack.c.l.b16 %v882
        %v1059 = vunpack.c.h.b16 %v882
        %v1060 = vunpack.c.l.b16 %v883
        %v1061 = vunpack.c.h.b16 %v883
        %v1062 = vunpack.c.l.b16 %v884
        %v1063 = vunpack.c.h.b16 %v884
        %v1064 = vunpack.c.l.b16 %v885
        %v1065 = vunpack.c.h.b16 %v885
        %v1066 = vunpack.c.l.b16 %v886
        %v1067 = vunpack.c.h.b16 %v886
        %v1068 = vunpack.c.l.b16 %v887
        %v1069 = vunpack.c.h.b16 %v887
        %v1070 = vunpack.c.l.b16 %v888
        %v1071 = vunpack.c.h.b16 %v888
        %v1072 = vunpack.c.l.b16 %v889
        %v1073 = vunpack.c.h.b16 %v889
        %v1074 = vunpack.c.l.b16 %v890
        %v1075 = vunpack.c.h.b16 %v890
        %v1076 = vunpack.c.l.b16 %v891
        %v1077 = vunpack.c.h.b16 %v891
        %v1078 = vunpack.c.l.b16 %v892
        %v1079 = vunpack.c.h.b16 %v892
        %v1080 = vunpack.c.l.b16 %v893
        %v1081 = vunpack.c.h.b16 %v893
        %v1082 = vunpack.c.l.b16 %v894
        %v1083 = vunpack.c.h.b16 %v894
        %v1084 = vunpack.c.l.b16 %v895
        %v1085 = vunpack.c.h.b16 %v895
        %v1086 = vunpack.c.l.b16 %v896
        %v1087 = vunpack.c.h.b16 %v896
        %v1088 = vunpack.c.l.b16 %v897
        %v1089 = vunpack.c.h.b16 %v897
        %v1090 = vunpack.c.l.b16 %v898
        %v1091 = vunpack.c.h.b16 %v898
        %v1092 = vunpack.c.l.b16 %v899
        %v1093 = vunpack.c.h.b16 %v899
        %v1094 = vpack.c.b16 %v968, %v966
        %v1095 = vpack.c.b16 %v969, %v967
        %v1096 = vpack.c.b16 %v972, %v970
        %v1097 = vpack.c.b16 %v973, %v971
        %v1098 = vpack.c.b16 %v976, %v974
        %v1099 = vpack.c.b16 %v977, %v975
        %v1100 = vpack.c.b16 %v980, %v978
        %v1101 = vpack.c.b16 %v981, %v979
        %v1102 = vpack.c.b16 %v984, %v982
        %v1103 = vpack.c.b16 %v985, %v983
        %v1104 = vpack.c.b16 %v988, %v986
        %v1105 = vpack.c.b16 %v989, %v987
        %v1106 = vpack.c.b16 %v992, %v990
        %v1107 = vpack.c.b16 %v993, %v991
        %v1108 = vpack.c.b16 %v996, %v994
        %v1109 = vpack.c.b16 %v997, %v995
        %v1110 = vpack.c.b16 %v1000, %v998
        %v1111 = vpack.c.b16 %v1001, %v999
        %v1112 = vpack.c.b16 %v1004, %v1002
        %v1113 = vpack.c.b16 %v1005, %v1003
        %v1114 = vpack.c.b16 %v1008, %v1006
        %v1115 = vpack.c.b16 %v1009, %v1007
        %v1116 = vpack.c.b16 %v1012, %v1010
        %v1117 = vpack.c.b16 %v1013, %v1011
        %v1118 = vpack.c.b16 %v1016, %v1014
        %v1119 = vpack.c.b16 %v1017, %v1015
        %v1120 = vpack.c.b16 %v1020, %v1018
        %v1121 = vpack.c.b16 %v1021, %v1019
        %v1122 = vpack.c.b16 %v1024, %v1022
        %v1123 = vpack.c.b16 %v1025, %v1023
        %v1124 = vpack.c.b16 %v1028, %v1026
        %v1125 = vpack.c.b16 %v1029, %v1027
        %v1126 = vpack.c.b16 %v1032, %v1030
        %v1127 = vpack.c.b16 %v1033, %v1031
        %v1128 = vpack.c.b16 %v1036, %v1034
        %v1129 = vpack.c.b16 %v1037, %v1035
        %v1130 = vpack.c.b16 %v1040, %v1038
        %v1131 = vpack.c.b16 %v1041, %v1039
        %v1132 = vpack.c.b16 %v1044, %v1042
        %v1133 = vpack.c.b16 %v1045, %v1043
        %v1134 = vpack.c.b16 %v1048, %v1046
        %v1135 = vpack.c.b16 %v1049, %v1047
        %v1136 = vpack.c.b16 %v1052, %v1050
        %v1137 = vpack.c.b16 %v1053, %v1051
        %v1138 = vpack.c.b16 %v1056, %v1054
        %v1139 = vpack.c.b16 %v1057, %v1055
        %v1140 = vpack.c.b16 %v1060, %v1058
        %v1141 = vpack.c.b16 %v1061, %v1059
        %v1142 = vpack.c.b16 %v1064, %v1062
        %v1143 = vpack.c.b16 %v1065, %v1063
        %v1144 = vpack.c.b16 %v1068, %v1066
        %v1145 = vpack.c.b16 %v1069, %v1067
        %v1146 = vpack.c.b16 %v1072, %v1070
        %v1147 = vpack.c.b16 %v1073, %v1071
        %v1148 = vpack.c.b16 %v1076, %v1074
        %v1149 = vpack.c.b16 %v1077, %v1075
        %v1150 = vpack.c.b16 %v1080, %v1078
        %v1151 = vpack.c.b16 %v1081, %v1079
        %v1152 = vpack.c.b16 %v1084, %v1082
        %v1153 = vpack.c.b16 %v1085, %v1083
        %v1154 = vpack.c.b16 %v1088, %v1086
        %v1155 = vpack.c.b16 %v1089, %v1087
        %v1156 = vpack.c.b16 %v1092, %v1090
        %v1157 = vpack.c.b16 %v1093, %v1091
        %1222 = vmatprep.subr.bf16.mxu0 %v1095
        %1223 = vmatpush1.bf16.msra.mxu0 %v1094
        %1224 = vmatprep.subr.bf16.mxu0 %v1097
        %1225 = vmatpush1.bf16.msra.mxu0 %v1096
        %1226 = vmatprep.subr.bf16.mxu0 %v1099
        %1227 = vmatpush1.bf16.msra.mxu0 %v1098
        %1228 = vmatprep.subr.bf16.mxu0 %v1101
        %1229 = vmatpush1.bf16.msra.mxu0 %v1100
        %1230 = vmatprep.subr.bf16.mxu0 %v1103
        %1231 = vmatpush1.bf16.msra.mxu0 %v1102
        %1232 = vmatprep.subr.bf16.mxu0 %v1105
        %1233 = vmatpush1.bf16.msra.mxu0 %v1104
        %1234 = vmatprep.subr.bf16.mxu0 %v1107
        %1235 = vmatpush1.bf16.msra.mxu0 %v1106
        %1236 = vmatprep.subr.bf16.mxu0 %v1109
        %1237 = vmatpush1.bf16.msra.mxu0 %v1108
        %1238 = vmatprep.subr.bf16.mxu0 %v1111
        %1239 = vmatpush1.bf16.msra.mxu0 %v1110
        %1240 = vmatprep.subr.bf16.mxu0 %v1113
        %1241 = vmatpush1.bf16.msra.mxu0 %v1112
        %1242 = vmatprep.subr.bf16.mxu0 %v1115
        %1243 = vmatpush1.bf16.msra.mxu0 %v1114
        %1244 = vmatprep.subr.bf16.mxu0 %v1117
        %1245 = vmatpush1.bf16.msra.mxu0 %v1116
        %1246 = vmatprep.subr.bf16.mxu0 %v1119
        %1247 = vmatpush1.bf16.msra.mxu0 %v1118
        %1248 = vmatprep.subr.bf16.mxu0 %v1121
        %1249 = vmatpush1.bf16.msra.mxu0 %v1120
        %1250 = vmatprep.subr.bf16.mxu0 %v1123
        %1251 = vmatpush1.bf16.msra.mxu0 %v1122
        %1252 = vmatprep.subr.bf16.mxu0 %v1125
        %1253 = vmatpush1.bf16.msra.mxu0 %v1124
        %1254 = vmatprep.mubr.bf16.mxu0 %v833
        %1255 = vmatmul.mubr.bf16.gmra.mrb[0].mxu0 %v832
        %v1256 = vpop.f32.mrb[0].mxu0
        %v1257 = vadd.f32 %v901, %v1256
        %v1258 = vpop.f32.mrb[0].mxu0
        %v1259 = vadd.f32 %v901, %v1258
        %v1260 = vpop.f32.mrb[0].mxu0
        %v1261 = vpop.f32.mrb[0].mxu0
        %1262 = vdwg.mxu0
        %1263 = vmatprep.subr.bf16.mxu0 %v1127
        %1264 = vmatpush1.bf16.msra.mxu0 %v1126
        %1265 = vmatprep.subr.bf16.mxu0 %v1129
        %1266 = vmatpush1.bf16.msra.mxu0 %v1128
        %1267 = vmatprep.subr.bf16.mxu0 %v1131
        %1268 = vmatpush1.bf16.msra.mxu0 %v1130
        %1269 = vmatprep.subr.bf16.mxu0 %v1133
        %1270 = vmatpush1.bf16.msra.mxu0 %v1132
        %1271 = vmatprep.subr.bf16.mxu0 %v1135
        %1272 = vmatpush1.bf16.msra.mxu0 %v1134
        %1273 = vmatprep.subr.bf16.mxu0 %v1137
        %1274 = vmatpush1.bf16.msra.mxu0 %v1136
        %1275 = vmatprep.subr.bf16.mxu0 %v1139
        %1276 = vmatpush1.bf16.msra.mxu0 %v1138
        %1277 = vmatprep.subr.bf16.mxu0 %v1141
        %1278 = vmatpush1.bf16.msra.mxu0 %v1140
        %1279 = vmatprep.subr.bf16.mxu0 %v1143
        %1280 = vmatpush1.bf16.msra.mxu0 %v1142
        %1281 = vmatprep.subr.bf16.mxu0 %v1145
        %1282 = vmatpush1.bf16.msra.mxu0 %v1144
        %1283 = vmatprep.subr.bf16.mxu0 %v1147
        %1284 = vmatpush1.bf16.msra.mxu0 %v1146
        %1285 = vmatprep.subr.bf16.mxu0 %v1149
        %1286 = vmatpush1.bf16.msra.mxu0 %v1148
        %1287 = vmatprep.subr.bf16.mxu0 %v1151
        %1288 = vmatpush1.bf16.msra.mxu0 %v1150
        %1289 = vmatprep.subr.bf16.mxu0 %v1153
        %1290 = vmatpush1.bf16.msra.mxu0 %v1152
        %1291 = vmatprep.subr.bf16.mxu0 %v1155
        %1292 = vmatpush1.bf16.msra.mxu0 %v1154
        %1293 = vmatprep.subr.bf16.mxu0 %v1157
        %1294 = vmatpush1.bf16.msra.mxu0 %v1156
        %1295 = vmatprep.mubr.bf16.mxu0 %v835
        %1296 = vmatmul.mubr.bf16.gmra.mrb[0].mxu0 %v834
        %v1297 = vpop.f32.mrb[0].mxu0
        %v1298 = vadd.f32 %v1257, %v1297
        %v1299 = vpop.f32.mrb[0].mxu0
        %v1300 = vadd.f32 %v1259, %v1299
        %v1301 = vpop.f32.mrb[0].mxu0
        %v1302 = vpop.f32.mrb[0].mxu0
        %1303 = vdwg.mxu0
        %v1304 = vxor.u32 %v1298, 2147483648
        %v1305 = vxor.u32 %v1300, 2147483648
        %v1306 = vmul.f32 %v1304, 1.442695
        %v1307 = vpow.pop %v1306
        %v1308 = vmul.f32 %v1305, 1.442695
        %v1309 = vpow.pop %v1308
        %v1310 = vadd.f32 %v1307, 1.0
        %v1311 = vadd.f32 %v1309, 1.0
        %v1312 = vrcp.pop %v1310
        %v1313 = vmul.f32 1.0, %v1312
        %v1314 = vrcp.pop %v1311
        %v1315 = vmul.f32 1.0, %v1314
        %v1316 = vld [vmem:[%s313] sm:$0xff]
        %v1317 = vld [vmem:[%s313 + $0x8] sm:$0xff]
        %v1318 = vld [vmem:[%s313 + $0x10] sm:$0xff]
        %v1319 = vld [vmem:[%s313 + $0x18] sm:$0xff]
        %v1320 = vld [vmem:[%s313 + $0x20] sm:$0xff]
        %v1321 = vld [vmem:[%s313 + $0x28] sm:$0xff]
        %v1322 = vld [vmem:[%s313 + $0x30] sm:$0xff]
        %v1323 = vld [vmem:[%s313 + $0x38] sm:$0xff]
        %v1324 = vlaneseq
        %v1325 = vshrl.u32 %v1324, 7
        %v1326 = vsub.s32 0, %v1325
        %v1327 = vrot.slane %v1313, %v1326
        %v1328 = vlaneseq
        %v1329 = vshrl.u32 %v1328, 7
        %v1330 = vsub.s32 0, %v1329
        %v1331 = vrot.slane %v1315, %v1330
        %v1332 = vmul.f32 %v1316, %v1327
        %v1333 = vmul.f32 %v1317, %v1331
        %v1334 = vmul.f32 %v1318, %v1327
        %v1335 = vmul.f32 %v1319, %v1331
        %v1336 = vmul.f32 %v1320, %v1327
        %v1337 = vmul.f32 %v1321, %v1331
        %v1338 = vmul.f32 %v1322, %v1327
        %v1339 = vmul.f32 %v1323, %v1331
        %1340 = vst [vmem:[%s313] sm:$0xff] %v1332
        %1341 = vst [vmem:[%s313 + $0x8] sm:$0xff] %v1333
        %1342 = vst [vmem:[%s313 + $0x10] sm:$0xff] %v1334
        %1343 = vst [vmem:[%s313 + $0x18] sm:$0xff] %v1335
        %1344 = vst [vmem:[%s313 + $0x20] sm:$0xff] %v1336
        %1345 = vst [vmem:[%s313 + $0x28] sm:$0xff] %v1337
        %1346 = vst [vmem:[%s313 + $0x30] sm:$0xff] %v1338
        %1347 = vst [vmem:[%s313 + $0x38] sm:$0xff] %v1339
        %v1348 = vld [vmem:[%s724] sm:$0xff]
        %v1349 = vld [vmem:[%s724 + $0x8] sm:$0xff]
        %v1350 = vld [vmem:[%s724 + $0x10] sm:$0xff]
        %v1351 = vld [vmem:[%s724 + $0x18] sm:$0xff]
        %v1352 = vld [vmem:[%s724 + $0x20] sm:$0xff]
        %v1353 = vld [vmem:[%s724 + $0x28] sm:$0xff]
        %v1354 = vld [vmem:[%s724 + $0x30] sm:$0xff]
        %v1355 = vld [vmem:[%s724 + $0x38] sm:$0xff]
        %v1356 = vlaneseq
        %v1357 = vshrl.u32 %v1356, 7
        %v1358 = vsub.s32 1, %v1357
        %v1359 = vrot.slane %v1313, %v1358
        %v1360 = vlaneseq
        %v1361 = vshrl.u32 %v1360, 7
        %v1362 = vsub.s32 1, %v1361
        %v1363 = vrot.slane %v1315, %v1362
        %v1364 = vmul.f32 %v1348, %v1359
        %v1365 = vmul.f32 %v1349, %v1363
        %v1366 = vmul.f32 %v1350, %v1359
        %v1367 = vmul.f32 %v1351, %v1363
        %v1368 = vmul.f32 %v1352, %v1359
        %v1369 = vmul.f32 %v1353, %v1363
        %v1370 = vmul.f32 %v1354, %v1359
        %v1371 = vmul.f32 %v1355, %v1363
        %1372 = vst [vmem:[%s724] sm:$0xff] %v1364
        %1373 = vst [vmem:[%s724 + $0x8] sm:$0xff] %v1365
        %1374 = vst [vmem:[%s724 + $0x10] sm:$0xff] %v1366
        %1375 = vst [vmem:[%s724 + $0x18] sm:$0xff] %v1367
        %1376 = vst [vmem:[%s724 + $0x20] sm:$0xff] %v1368
        %1377 = vst [vmem:[%s724 + $0x28] sm:$0xff] %v1369
        %1378 = vst [vmem:[%s724 + $0x30] sm:$0xff] %v1370
        %1379 = vst [vmem:[%s724 + $0x38] sm:$0xff] %v1371
        %s1380 = sand.u32 %s186, 1
        %s1381 = scalar_lea.sflag [#allocation6], %s1380
        %s1382 = sand.u32 %s186, 1
        %s1383 = smul.addr %s1382, 128
        %s1384 = scalar_lea.vmem [#allocation9], %s1383
        // Predicated region
        $region57: #{tpu_custom_call.1} parent=47 // pred_check
          %p1385 = pneg %p196
        $region58: #{tpu_custom_call.1} parent=47 // pred_check_branch
          %1387 = sbr.rel (%p1385) target = $region60
        $region59: #{tpu_custom_call.1} parent=47 // pred_region
          %s1388 = smul.u32 2, %s26
          %s1390 = ssub.s32 2048, 2048
          %1391 = vsyncadd %s1381, %s1390
          %s1392 = smul.addr %s1388, 8
          %s1393 = smul.addr %s1392, 128
          %s1394 = scalar_lea.hbm %s7, %s1393
          %s1395 = sshll.u32 %s1384, 4
          %s1396 = int_to_ptr.vmem [resolvable:$true] %s1395
          %1401 = dma.vmem_to_hbm [thread:$0]  %s1396, 2048, %s1394, %s1381, 256, 256, 16
        $region60: #{tpu_custom_call.1} parent=47 // pred_fallthru
          _
      $region48: #{tpu_custom_call.1} parent=5 // pred_fallthru
        _
      %p1402 = scmp.le.s32.totalorder 2, %s21
      // Predicated region
      $region61: #{tpu_custom_call.1} parent=5 // pred_check
        %p1403 = pneg %p1402
      $region62: #{tpu_custom_call.1} parent=5 // pred_check_branch
        %1405 = sbr.rel (%p1403) target = $region64
      $region63: #{tpu_custom_call.1} parent=5 // pred_region
        %s1406 = ssub.s32 %s21, 2
        // Predicated region
        $region65: #{tpu_custom_call.1} parent=63 // pred_check
          %p1407 = pneg %p202
        $region66: #{tpu_custom_call.1} parent=63 // pred_check_branch
          %1409 = sbr.rel (%p1407) target = $region68
        $region67: #{tpu_custom_call.1} parent=63 // pred_region
          %s1410 = sand.u32 %s187, 1
          %s1411 = scalar_lea.sflag [#allocation6], %s1410
          %s1412 = sand.u32 %s187, 1
          %s1413 = smul.addr %s1412, 128
          %s1414 = scalar_lea.vmem [#allocation9], %s1413
          %1415 = dma.done %s1411, 2048
        $region68: #{tpu_custom_call.1} parent=63 // pred_fallthru
          _
      $region64: #{tpu_custom_call.1} parent=5 // pred_fallthru
        _
    $region6: #{tpu_custom_call.1} parent=1 // loop_footer
      %s25 = sadd.s32 1, %s21
    $region7: #{tpu_custom_call.1} parent=1 // loop_footer_branch
      %20 = sbr.rel target = $region3
    $region8: #{tpu_custom_call.1} parent=1 // loop_exit
      _
    %1416 = vsyncpa [#allocation5], 1
    %s1417 = scalar_lea.sflag [#allocation5], 1
    %1418 = vsyncpa %s1417, 1
    %1419 = vsyncpa [#allocation8], 1
    %1420 = vsyncpa [#allocation6], 1
    %s1421 = scalar_lea.sflag [#allocation6], 1
    %1422 = vsyncpa %s1421, 1

// kernel: tpu_custom_call.1
$region0: #{tpu_custom_call.1}
  #allocation0 [shape = 'u32[]', space=smem, size = 0x4, offset = 0x4, fixed_abs, tag = 'smem constant byte address 0x4 - core index']
  #allocation1 [shape = 'u32[144,128]{1,0:T(1,128)}', space=vmem, size = 0x12000, scoped, tag = 'internal scratch']
  #allocation2 [shape = 'f32[2,512]{1,0:T(2,128)}', space=vmem, size = 0x1000, scoped, tag = 'scratch operand']
  #allocation3 [shape = 'f32[1]{0:T(128)S(6)}', space=smem, size = 0x200, scoped, tag = 'scoped memory for tpu_custom_call.1']
  %s0 = inlined_call_operand.hbm [shape: f32[4,32,256], index: 0, kind: input, shape index: {}]
  %s1 = inlined_call_operand.vmem [shape: f32[32,8], index: 1, kind: input, shape index: {}]
  %s2 = inlined_call_operand.vmem [shape: f32[1,8], index: 2, kind: input, shape index: {}]
  %s3 = inlined_call_operand.vmem [shape: f32[32,8], index: 3, kind: input, shape index: {}]
  %s4 = inlined_call_operand.vmem [shape: f32[32,1], index: 4, kind: input, shape index: {}]
  %s5 = inlined_call_operand.hbm [shape: bf16[512,256], index: 5, kind: input, shape index: {}]
  %s6 = inlined_call_operand.<no memory space> [shape: f32[1], index: 6, kind: input, shape index: {}]
  %s7 = inlined_call_operand.hbm [shape: f32[4,32,256], index: 7, kind: output, shape index: {}]
  %s8 = sld [smem:[#allocation0]]
  $region69: #{tpu_custom_call.1} parent=0
    _
  %s10 = ssub.s32 1, %s8
  %s11 = scalar_select 0, %s10, %s8
  %12 = sst [smem:[#allocation3]] %s6
  $region1: #{tpu_custom_call.1} parent=0
    #allocation4 [shape = 'u8[131072]{0}', space=vmem, size = 0x20000, scoped, tag = 'input window, operand 0']
    #allocation5 [shape = 's32[2]{0}', space=sflag, size = 0x8, scoped, tag = 'scoped memory for tpu_custom_call.1']
    #allocation6 [shape = 's32[2]{0}', space=sflag, size = 0x8, scoped, tag = 'scoped memory for tpu_custom_call.1']
    #allocation7 [shape = 'u8[262144]{0}', space=vmem, size = 0x40000, scoped, tag = 'input window, operand 5, single buffered']
    #allocation8 [shape = 's32[1]{0}', space=sflag, size = 0x4, scoped, tag = 'scoped memory for tpu_custom_call.1']
    #allocation9 [shape = 'u8[131072]{0}', space=vmem, size = 0x20000, scoped, tag = 'output window, operand 0']
    %13 = vsyncpa [#allocation5], 0
    %s14 = scalar_lea.sflag [#allocation5], 1
    %15 = vsyncpa %s14, 0
    %16 = vsyncpa [#allocation8], 0
    %17 = vsyncpa [#allocation6], 0
    %s18 = scalar_lea.sflag [#allocation6], 1
    %19 = vsyncpa %s18, 0
    loop: start=0, step=1, limit=4
    $region2: #{tpu_custom_call.1} parent=1 // loop_pre_header
      _
    $region3: #{tpu_custom_call.1} parent=1 // loop_header
      %s21 = sphi 0, %s25
      %p22 = scmp.ge.s32.totalorder %s21, 4
      %s31 = sphi 0, %s33
      %s34 = sphi 0, %s31
      %s35 = sphi 0, %s34
      %s51 = sphi 0, %s35
      %s55 = sphi 0, %s55
      %s57 = sphi 0, %s55
      %s58 = sphi 0, %s57
      %s72 = sphi 0, %s58
      %s76 = sphi 0, %s76
      %s78 = sphi 0, %s76
      %s79 = sphi 0, %s78
      %s93 = sphi 0, %s79
      %s97 = sphi 0, %s97
      %s99 = sphi 0, %s97
      %s100 = sphi 0, %s99
      %s114 = sphi 0, %s100
      %s118 = sphi 0, %s118
      %s120 = sphi 0, %s118
      %s121 = sphi 0, %s120
      %s135 = sphi 0, %s121
      %s139 = sphi 0, %s139
      %s141 = sphi 0, %s139
      %s142 = sphi 0, %s141
      %s156 = sphi 0, %s142
      %s160 = sphi 0, %s160
      %s162 = sphi 0, %s160
      %s163 = sphi 0, %s162
      %s177 = sphi 0, %s163
      %s183 = sphi 0, %s185
      %s186 = sphi 0, %s183
      %s187 = sphi 0, %s186
      %s203 = sphi 0, %s187
    $region4: #{tpu_custom_call.1} parent=1 // loop_header_branch
      %24 = sbr.rel (%p22) target = $region8
    $region5: #{tpu_custom_call.1} parent=1 // loop_body
      %s26 = ssub.s32 %s21, 1
      %s27 = ssub.s32 %s21, 2
      %s28 = sadd.s32 %s21, 1
      %s29 = ssub.s32 %s21, %s28
      %p30 = scmp.eq.s32.totalorder %s29, 0
      %s32 = sadd.s32 %s31, 1
      %s33 = scalar_select %p30, %s31, %s32
      %p36 = pneg %p30
      %p37 = scmp.eq.s32.totalorder %s21, 1
      %p38 = por %p36, %p37
      %p39 = scmp.ne.s32.totalorder %s31, %s34
      %p40 = scmp.eq.s32.totalorder %s21, 0
      %p41 = por %p39, %p40
      %p42 = scmp.ne.s32.totalorder %s31, %s34
      %p43 = scmp.eq.s32.totalorder %s26, 1
      %p44 = por %p42, %p43
      %p45 = scmp.ne.s32.totalorder %s34, %s35
      %p46 = scmp.eq.s32.totalorder %s26, 0
      %p47 = por %p45, %p46
      %p48 = scmp.ne.s32.totalorder %s34, %s35
      %p49 = scmp.eq.s32.totalorder %s27, 1
      %p50 = por %p48, %p49
      %p52 = scmp.ne.s32.totalorder %s35, %s51
      %p53 = scmp.eq.s32.totalorder %s27, 0
      %p54 = por %p52, %p53
      %s56 = sadd.s32 %s55, 1
      %p59 = scmp.eq.s32.totalorder %s21, 1
      %p60 = scmp.ne.s32.totalorder %s55, %s57
      %p61 = scmp.eq.s32.totalorder %s21, 0
      %p62 = por %p60, %p61
      %p63 = scmp.ne.s32.totalorder %s55, %s57
      %p64 = scmp.eq.s32.totalorder %s26, 1
      %p65 = por %p63, %p64
      %p66 = scmp.ne.s32.totalorder %s57, %s58
      %p67 = scmp.eq.s32.totalorder %s26, 0
      %p68 = por %p66, %p67
      %p69 = scmp.ne.s32.totalorder %s57, %s58
      %p70 = scmp.eq.s32.totalorder %s27, 1
      %p71 = por %p69, %p70
      %p73 = scmp.ne.s32.totalorder %s58, %s72
      %p74 = scmp.eq.s32.totalorder %s27, 0
      %p75 = por %p73, %p74
      %s77 = sadd.s32 %s76, 1
      %p80 = scmp.eq.s32.totalorder %s21, 1
      %p81 = scmp.ne.s32.totalorder %s76, %s78
      %p82 = scmp.eq.s32.totalorder %s21, 0
      %p83 = por %p81, %p82
      %p84 = scmp.ne.s32.totalorder %s76, %s78
      %p85 = scmp.eq.s32.totalorder %s26, 1
      %p86 = por %p84, %p85
      %p87 = scmp.ne.s32.totalorder %s78, %s79
      %p88 = scmp.eq.s32.totalorder %s26, 0
      %p89 = por %p87, %p88
      %p90 = scmp.ne.s32.totalorder %s78, %s79
      %p91 = scmp.eq.s32.totalorder %s27, 1
      %p92 = por %p90, %p91
      %p94 = scmp.ne.s32.totalorder %s79, %s93
      %p95 = scmp.eq.s32.totalorder %s27, 0
      %p96 = por %p94, %p95
      %s98 = sadd.s32 %s97, 1
      %p101 = scmp.eq.s32.totalorder %s21, 1
      %p102 = scmp.ne.s32.totalorder %s97, %s99
      %p103 = scmp.eq.s32.totalorder %s21, 0
      %p104 = por %p102, %p103
      %p105 = scmp.ne.s32.totalorder %s97, %s99
      %p106 = scmp.eq.s32.totalorder %s26, 1
      %p107 = por %p105, %p106
      %p108 = scmp.ne.s32.totalorder %s99, %s100
      %p109 = scmp.eq.s32.totalorder %s26, 0
      %p110 = por %p108, %p109
      %p111 = scmp.ne.s32.totalorder %s99, %s100
      %p112 = scmp.eq.s32.totalorder %s27, 1
      %p113 = por %p111, %p112
      %p115 = scmp.ne.s32.totalorder %s100, %s114
      %p116 = scmp.eq.s32.totalorder %s27, 0
      %p117 = por %p115, %p116
      %s119 = sadd.s32 %s118, 1
      %p122 = scmp.eq.s32.totalorder %s21, 1
      %p123 = scmp.ne.s32.totalorder %s118, %s120
      %p124 = scmp.eq.s32.totalorder %s21, 0
      %p125 = por %p123, %p124
      %p126 = scmp.ne.s32.totalorder %s118, %s120
      %p127 = scmp.eq.s32.totalorder %s26, 1
      %p128 = por %p126, %p127
      %p129 = scmp.ne.s32.totalorder %s120, %s121
      %p130 = scmp.eq.s32.totalorder %s26, 0
      %p131 = por %p129, %p130
      %p132 = scmp.ne.s32.totalorder %s120, %s121
      %p133 = scmp.eq.s32.totalorder %s27, 1
      %p134 = por %p132, %p133
      %p136 = scmp.ne.s32.totalorder %s121, %s135
      %p137 = scmp.eq.s32.totalorder %s27, 0
      %p138 = por %p136, %p137
      %s140 = sadd.s32 %s139, 1
      %p143 = scmp.eq.s32.totalorder %s21, 1
      %p144 = scmp.ne.s32.totalorder %s139, %s141
      %p145 = scmp.eq.s32.totalorder %s21, 0
      %p146 = por %p144, %p145
      %p147 = scmp.ne.s32.totalorder %s139, %s141
      %p148 = scmp.eq.s32.totalorder %s26, 1
      %p149 = por %p147, %p148
      %p150 = scmp.ne.s32.totalorder %s141, %s142
      %p151 = scmp.eq.s32.totalorder %s26, 0
      %p152 = por %p150, %p151
      %p153 = scmp.ne.s32.totalorder %s141, %s142
      %p154 = scmp.eq.s32.totalorder %s27, 1
      %p155 = por %p153, %p154
      %p157 = scmp.ne.s32.totalorder %s142, %s156
      %p158 = scmp.eq.s32.totalorder %s27, 0
      %p159 = por %p157, %p158
      %s161 = sadd.s32 %s160, 1
      %p164 = scmp.eq.s32.totalorder %s21, 1
      %p165 = scmp.ne.s32.totalorder %s160, %s162
      %p166 = scmp.eq.s32.totalorder %s21, 0
      %p167 = por %p165, %p166
      %p168 = scmp.ne.s32.totalorder %s160, %s162
      %p169 = scmp.eq.s32.totalorder %s26, 1
      %p170 = por %p168, %p169
      %p171 = scmp.ne.s32.totalorder %s162, %s163
      %p172 = scmp.eq.s32.totalorder %s26, 0
      %p173 = por %p171, %p172
      %p174 = scmp.ne.s32.totalorder %s162, %s163
      %p175 = scmp.eq.s32.totalorder %s27, 1
      %p176 = por %p174, %p175
      %p178 = scmp.ne.s32.totalorder %s163, %s177
      %p179 = scmp.eq.s32.totalorder %s27, 0
      %p180 = por %p178, %p179
      %s181 = ssub.s32 %s21, %s28
      %p182 = scmp.eq.s32.totalorder %s181, 0
      %s184 = sadd.s32 %s183, 1
      %s185 = scalar_select %p182, %s183, %s184
      %p188 = pneg %p182
      %p189 = scmp.eq.s32.totalorder %s21, 1
      %p190 = por %p188, %p189
      %p191 = scmp.ne.s32.totalorder %s183, %s186
      %p192 = scmp.eq.s32.totalorder %s21, 0
      %p193 = por %p191, %p192
      %p194 = scmp.ne.s32.totalorder %s183, %s186
      %p195 = scmp.eq.s32.totalorder %s26, 1
      %p196 = por %p194, %p195
      %p197 = scmp.ne.s32.totalorder %s186, %s187
      %p198 = scmp.eq.s32.totalorder %s26, 0
      %p199 = por %p197, %p198
      %p200 = scmp.ne.s32.totalorder %s186, %s187
      %p201 = scmp.eq.s32.totalorder %s27, 1
      %p202 = por %p200, %p201
      %p204 = scmp.ne.s32.totalorder %s187, %s203
      %p205 = scmp.eq.s32.totalorder %s27, 0
      %p206 = por %p204, %p205
      %p207 = scmp.le.s32.totalorder 1, %s21
      %p208 = scmp.lt.s32.totalorder %s21, 3
      %p209 = pnand %p207, %p208
      %p210 = pneg %p209
      // Predicated region
      $region9: #{tpu_custom_call.1} parent=5 // pred_check
        _
      $region10: #{tpu_custom_call.1} parent=5 // pred_check_branch
        %212 = sbr.rel (%p209) target = $region12
      $region11: #{tpu_custom_call.1} parent=5 // pred_region
        %s213 = ssub.s32 %s21, 1
        // Predicated region
        $region13: #{tpu_custom_call.1} parent=11 // pred_check
          %p214 = pneg %p68
        $region14: #{tpu_custom_call.1} parent=11 // pred_check_branch
          %216 = sbr.rel (%p214) target = $region16
        $region15: #{tpu_custom_call.1} parent=11 // pred_region
          _
        $region16: #{tpu_custom_call.1} parent=11 // pred_fallthru
          _
        // Predicated region
        $region17: #{tpu_custom_call.1} parent=11 // pred_check
          %p217 = pneg %p89
        $region18: #{tpu_custom_call.1} parent=11 // pred_check_branch
          %219 = sbr.rel (%p217) target = $region20
        $region19: #{tpu_custom_call.1} parent=11 // pred_region
          _
        $region20: #{tpu_custom_call.1} parent=11 // pred_fallthru
          _
        // Predicated region
        $region21: #{tpu_custom_call.1} parent=11 // pred_check
          %p220 = pneg %p110
        $region22: #{tpu_custom_call.1} parent=11 // pred_check_branch
          %222 = sbr.rel (%p220) target = $region24
        $region23: #{tpu_custom_call.1} parent=11 // pred_region
          _
        $region24: #{tpu_custom_call.1} parent=11 // pred_fallthru
          _
        // Predicated region
        $region25: #{tpu_custom_call.1} parent=11 // pred_check
          %p223 = pneg %p131
        $region26: #{tpu_custom_call.1} parent=11 // pred_check_branch
          %225 = sbr.rel (%p223) target = $region28
        $region27: #{tpu_custom_call.1} parent=11 // pred_region
          _
        $region28: #{tpu_custom_call.1} parent=11 // pred_fallthru
          _
        // Predicated region
        $region29: #{tpu_custom_call.1} parent=11 // pred_check
          %p226 = pneg %p152
        $region30: #{tpu_custom_call.1} parent=11 // pred_check_branch
          %228 = sbr.rel (%p226) target = $region32
        $region31: #{tpu_custom_call.1} parent=11 // pred_region
          %s230 = ssub.s32 8192, 8192
          %231 = vsyncadd [#allocation8], %s230
          %s232 = sshll.u32 [#allocation7], 4
          %s233 = int_to_ptr.vmem [resolvable:$true] %s232
          %238 = dma.hbm_to_vmem [thread:$0]  %s5, 8192, %s233, [#allocation8], 128, 128, 8
        $region32: #{tpu_custom_call.1} parent=11 // pred_fallthru
          _
        // Predicated region
        $region33: #{tpu_custom_call.1} parent=11 // pred_check
          %p239 = pneg %p173
        $region34: #{tpu_custom_call.1} parent=11 // pred_check_branch
          %241 = sbr.rel (%p239) target = $region36
        $region35: #{tpu_custom_call.1} parent=11 // pred_region
          _
        $region36: #{tpu_custom_call.1} parent=11 // pred_fallthru
          _
      $region12: #{tpu_custom_call.1} parent=5 // pred_fallthru
        _
      %p242 = scmp.lt.s32.totalorder %s21, 2
      // Predicated region
      $region37: #{tpu_custom_call.1} parent=5 // pred_check
        %p243 = pneg %p242
      $region38: #{tpu_custom_call.1} parent=5 // pred_check_branch
        %245 = sbr.rel (%p243) target = $region40
      $region39: #{tpu_custom_call.1} parent=5 // pred_region
        // Predicated region
        $region41: #{tpu_custom_call.1} parent=39 // pred_check
          %p246 = pneg %p41
        $region42: #{tpu_custom_call.1} parent=39 // pred_check_branch
          %248 = sbr.rel (%p246) target = $region44
        $region43: #{tpu_custom_call.1} parent=39 // pred_region
          %s249 = sand.u32 %s31, 1
          %s250 = scalar_lea.sflag [#allocation5], %s249
          %s251 = sand.u32 %s31, 1
          %s252 = smul.addr %s251, 128
          %s253 = scalar_lea.vmem [#allocation4], %s252
          %s254 = smul.u32 2, %s21
          %s256 = ssub.s32 2048, 2048
          %257 = vsyncadd %s250, %s256
          %s258 = smul.addr %s254, 8
          %s259 = smul.addr %s258, 128
          %s260 = scalar_lea.hbm %s0, %s259
          %s261 = sshll.u32 %s253, 4
          %s262 = int_to_ptr.vmem [resolvable:$true] %s261
          %267 = dma.hbm_to_vmem [thread:$0]  %s260, 2048, %s262, %s250, 256, 256, 16
        $region44: #{tpu_custom_call.1} parent=39 // pred_fallthru
          _
      $region40: #{tpu_custom_call.1} parent=5 // pred_fallthru
        _
      %p268 = scmp.le.s32.totalorder 1, %s21
      %p269 = scmp.lt.s32.totalorder %s21, 3
      %p270 = pnand %p268, %p269
      %p271 = pneg %p270
      // Predicated region
      $region45: #{tpu_custom_call.1} parent=5 // pred_check
        _
      $region46: #{tpu_custom_call.1} parent=5 // pred_check_branch
        %273 = sbr.rel (%p270) target = $region48
      $region47: #{tpu_custom_call.1} parent=5 // pred_region
        %s274 = ssub.s32 %s21, 1
        %s275 = sand.u32 %s34, 1
        %s276 = scalar_lea.sflag [#allocation5], %s275
        %s277 = sand.u32 %s34, 1
        %s278 = smul.addr %s277, 128
        %s279 = scalar_lea.vmem [#allocation4], %s278
        // Predicated region
        $region49: #{tpu_custom_call.1} parent=47 // pred_check
          %p280 = pneg %p47
        $region50: #{tpu_custom_call.1} parent=47 // pred_check_branch
          %282 = sbr.rel (%p280) target = $region52
        $region51: #{tpu_custom_call.1} parent=47 // pred_region
          %283 = dma.done %s276, 2048
        $region52: #{tpu_custom_call.1} parent=47 // pred_fallthru
          _
        // Predicated region
        $region53: #{tpu_custom_call.1} parent=47 // pred_check
          %p284 = pneg %p152
        $region54: #{tpu_custom_call.1} parent=47 // pred_check_branch
          %286 = sbr.rel (%p284) target = $region56
        $region55: #{tpu_custom_call.1} parent=47 // pred_region
          %287 = dma.done [#allocation8], 8192
        $region56: #{tpu_custom_call.1} parent=47 // pred_fallthru
          _
        %s288 = sand.u32 %s34, 1
        %s289 = scalar_lea.sflag [#allocation5], %s288
        %s290 = sand.u32 %s34, 1
        %s291 = smul.addr %s290, 128
        %s292 = scalar_lea.vmem [#allocation4], %s291
        %p293 = pneg %p47
        %p294 = pneg %p44
        %p295 = pneg %p68
        %p296 = pneg %p65
        %p297 = pneg %p89
        %p298 = pneg %p86
        %p299 = pneg %p110
        %p300 = pneg %p107
        %p301 = pneg %p131
        %p302 = pneg %p128
        %p303 = pneg %p152
        %p304 = pneg %p149
        %p305 = pneg %p173
        %p306 = pneg %p170
        %p307 = pneg %p199
        %p308 = pneg %p196
        %s309 = sand.u32 %s186, 1
        %s310 = scalar_lea.sflag [#allocation6], %s309
        %s311 = sand.u32 %s186, 1
        %s312 = smul.addr %s311, 128
        %s313 = scalar_lea.vmem [#allocation9], %s312
        %s314 = smul.u32 2, %s26
        %s315 = smul.u32 2, %s26
        %v316 = vld [vmem:[%s1] sm:$0xff]
        %v317 = vld [vmem:[%s1 + $0x8] sm:$0xff]
        %v318 = vld [vmem:[%s1 + $0x10] sm:$0xff]
        %v319 = vld [vmem:[%s1 + $0x18] sm:$0xff]
        %v320 = vld [vmem:[%s2] sm:$0x1]
        %v321 = vld [vmem:[%s3] sm:$0xff]
        %v322 = vld [vmem:[%s3 + $0x8] sm:$0xff]
        %v323 = vld [vmem:[%s3 + $0x10] sm:$0xff]
        %v324 = vld [vmem:[%s3 + $0x18] sm:$0xff]
        %v325 = vld [vmem:[%s4] sm:$0xff]
        %v326 = vld [vmem:[%s4 + $0x8] sm:$0xff]
        %v327 = vld [vmem:[%s4 + $0x10] sm:$0xff]
        %v328 = vld [vmem:[%s4 + $0x18] sm:$0xff]
        %v329 = vld [vmem:[%s279] sm:$0xff]
        %v330 = vld [vmem:[%s279 + $0x8] sm:$0xff]
        %v331 = vld [vmem:[%s279 + $0x10] sm:$0xff]
        %v332 = vld [vmem:[%s279 + $0x18] sm:$0xff]
        %v333 = vld [vmem:[%s279 + $0x20] sm:$0xff]
        %v334 = vld [vmem:[%s279 + $0x28] sm:$0xff]
        %v335 = vld [vmem:[%s279 + $0x30] sm:$0xff]
        %v336 = vld [vmem:[%s279 + $0x38] sm:$0xff]
        %v337 = vmax.f32 %v329, %v330
        %338 = vmax.xlane.f32.xlu0 %v337
        %v339 = vpop.xlane.xlu0 %338
        %v340 = vmax.f32 %v331, %v332
        %341 = vmax.xlane.f32.xlu0 %v340
        %v342 = vpop.xlane.xlu0 %341
        %v343 = vmax.f32 %v333, %v334
        %344 = vmax.xlane.f32.xlu0 %v343
        %v345 = vpop.xlane.xlu0 %344
        %v346 = vmax.f32 %v335, %v336
        %347 = vmax.xlane.f32.xlu0 %v346
        %v348 = vpop.xlane.xlu0 %347
        %v349 = vadd.f32 %v329, %v330
        %350 = vadd.xlane.f32.xlu0 %v349
        %v351 = vpop.xlane.xlu0 %350
        %v352 = vadd.f32 %v331, %v332
        %353 = vadd.xlane.f32.xlu0 %v352
        %v354 = vpop.xlane.xlu0 %353
        %v355 = vadd.f32 %v333, %v334
        %356 = vadd.xlane.f32.xlu0 %v355
        %v357 = vpop.xlane.xlu0 %356
        %v358 = vadd.f32 %v335, %v336
        %359 = vadd.xlane.f32.xlu0 %v358
        %v360 = vpop.xlane.xlu0 %359
        %v361 = vmul.f32 %v351, 0.00390625
        %v362 = vmul.f32 %v354, 0.00390625
        %v363 = vmul.f32 %v357, 0.00390625
        %v364 = vmul.f32 %v360, 0.00390625
        %v365 = vmul.f32 %v316, %v339
        %v366 = vmul.f32 %v317, %v342
        %v367 = vmul.f32 %v318, %v345
        %v368 = vmul.f32 %v319, %v348
        %vm369 = vcmask 64512
        %v370 = vsel %vm369, %v365, 0.0
        %v371 = vsel %vm369, %v366, 0.0
        %v372 = vadd.f32 %v370, %v371
        %v373 = vsel %vm369, %v367, 0.0
        %v374 = vadd.f32 %v372, %v373
        %v375 = vsel %vm369, %v368, 0.0
        %v376 = vadd.f32 %v374, %v375
        %v377 = vrot.slane %v376, 4
        %v378 = vadd.f32 %v376, %v377
        %v379 = vrot.slane %v378, 2
        %v380 = vadd.f32 %v378, %v379
        %v381 = vrot.slane %v380, 1
        %v382 = vadd.f32 %v380, %v381
        %v383 = vadd.f32 %v382, %v320
        %v384 = vmax.f32 %v383, 0.0
        %v385 = vmul.f32 %v316, %v361
        %v386 = vmul.f32 %v317, %v362
        %v387 = vmul.f32 %v318, %v363
        %v388 = vmul.f32 %v319, %v364
        %v389 = vsel %vm369, %v385, 0.0
        %v390 = vsel %vm369, %v386, 0.0
        %v391 = vadd.f32 %v389, %v390
        %v392 = vsel %vm369, %v387, 0.0
        %v393 = vadd.f32 %v391, %v392
        %v394 = vsel %vm369, %v388, 0.0
        %v395 = vadd.f32 %v393, %v394
        %v396 = vrot.slane %v395, 4
        %v397 = vadd.f32 %v395, %v396
        %v398 = vrot.slane %v397, 2
        %v399 = vadd.f32 %v397, %v398
        %v400 = vrot.slane %v399, 1
        %v401 = vadd.f32 %v399, %v400
        %v402 = vadd.f32 %v401, %v320
        %v403 = vmax.f32 %v402, 0.0
        %v404 = vadd.f32 %v384, %v403
        %v405 = vlaneseq
        %v406 = vshrl.u32 %v405, 7
        %v407 = vsub.s32 0, %v406
        %v408 = vrot.slane %v404, %v407
        %v409 = vmul.f32 %v321, %v408
        %v410 = vmul.f32 %v322, %v408
        %v411 = vmul.f32 %v323, %v408
        %v412 = vmul.f32 %v324, %v408
        %v413 = vsel %vm369, %v409, 0.0
        %414 = vadd.xlane.f32.xlu0 %v413
        %v415 = vpop.xlane.xlu0 %414
        %v416 = vsel %vm369, %v410, 0.0
        %417 = vadd.xlane.f32.xlu0 %v416
        %v418 = vpop.xlane.xlu0 %417
        %v419 = vsel %vm369, %v411, 0.0
        %420 = vadd.xlane.f32.xlu0 %v419
        %v421 = vpop.xlane.xlu0 %420
        %v422 = vsel %vm369, %v412, 0.0
        %423 = vadd.xlane.f32.xlu0 %v422
        %v424 = vpop.xlane.xlu0 %423
        %v425 = vmul.f32 %v325, 2.0
        %v426 = vmul.f32 %v326, 2.0
        %v427 = vmul.f32 %v327, 2.0
        %v428 = vmul.f32 %v328, 2.0
        %v429 = vadd.f32 %v415, %v425
        %v430 = vadd.f32 %v418, %v426
        %v431 = vadd.f32 %v421, %v427
        %v432 = vadd.f32 %v424, %v428
        %v433 = vxor.u32 %v429, 2147483648
        %v434 = vxor.u32 %v430, 2147483648
        %v435 = vxor.u32 %v431, 2147483648
        %v436 = vxor.u32 %v432, 2147483648
        %v437 = vmul.f32 %v433, 1.442695
        %v438 = vpow.pop %v437
        %v439 = vmul.f32 %v434, 1.442695
        %v440 = vpow.pop %v439
        %v441 = vmul.f32 %v435, 1.442695
        %v442 = vpow.pop %v441
        %v443 = vmul.f32 %v436, 1.442695
        %v444 = vpow.pop %v443
        %v445 = vadd.f32 %v438, 1.0
        %v446 = vadd.f32 %v440, 1.0
        %v447 = vadd.f32 %v442, 1.0
        %v448 = vadd.f32 %v444, 1.0
        %v449 = vrcp.pop %v445
        %v450 = vmul.f32 1.0, %v449
        %v451 = vrcp.pop %v446
        %v452 = vmul.f32 1.0, %v451
        %v453 = vrcp.pop %v447
        %v454 = vmul.f32 1.0, %v453
        %v455 = vrcp.pop %v448
        %v456 = vmul.f32 1.0, %v455
        %458 = vset.pattern.permute.xlu0 0
        %459 = vperm.xlu0 %458, %v450
        %v460 = vpop.permute.xlu0 %459
        %463 = vset.pattern.permute.xlu0 0
        %464 = vperm.xlu0 %463, %v452
        %v465 = vpop.permute.xlu0 %464
        %468 = vset.pattern.permute.xlu0 0
        %469 = vperm.xlu0 %468, %v454
        %v470 = vpop.permute.xlu0 %469
        %473 = vset.pattern.permute.xlu0 0
        %474 = vperm.xlu0 %473, %v456
        %v475 = vpop.permute.xlu0 %474
        %v477 = vmul.f32 %v329, %v460
        %v478 = vmul.f32 %v330, %v460
        %v479 = vmul.f32 %v331, %v465
        %v480 = vmul.f32 %v332, %v465
        %v481 = vmul.f32 %v333, %v470
        %v482 = vmul.f32 %v334, %v470
        %v483 = vmul.f32 %v335, %v475
        %v484 = vmul.f32 %v336, %v475
        %485 = vst [vmem:[%s313] sm:$0xff] %v477
        %486 = vst [vmem:[%s313 + $0x8] sm:$0xff] %v478
        %487 = vst [vmem:[%s313 + $0x10] sm:$0xff] %v479
        %488 = vst [vmem:[%s313 + $0x18] sm:$0xff] %v480
        %489 = vst [vmem:[%s313 + $0x20] sm:$0xff] %v481
        %490 = vst [vmem:[%s313 + $0x28] sm:$0xff] %v482
        %491 = vst [vmem:[%s313 + $0x30] sm:$0xff] %v483
        %492 = vst [vmem:[%s313 + $0x38] sm:$0xff] %v484
        %v493 = vmax.f32 %v477, %v481
        %v494 = vmax.f32 %v479, %v483
        %v495 = vmax.f32 %v493, %v494
        %v496 = vrot.slane %v495, 4
        %v497 = vmax.f32 %v495, %v496
        %v498 = vrot.slane %v497, 2
        %v499 = vmax.f32 %v497, %v498
        %v500 = vrot.slane %v499, 1
        %v501 = vmax.f32 %v499, %v500
        %v502 = vmax.f32 %v478, %v482
        %v503 = vmax.f32 %v480, %v484
        %v504 = vmax.f32 %v502, %v503
        %v505 = vrot.slane %v504, 4
        %v506 = vmax.f32 %v504, %v505
        %v507 = vrot.slane %v506, 2
        %v508 = vmax.f32 %v506, %v507
        %v509 = vrot.slane %v508, 1
        %v510 = vmax.f32 %v508, %v509
        %v511 = vadd.f32 %v477, %v479
        %v512 = vadd.f32 %v511, %v481
        %v513 = vadd.f32 %v512, %v483
        %v514 = vrot.slane %v513, 4
        %v515 = vadd.f32 %v513, %v514
        %v516 = vrot.slane %v515, 2
        %v517 = vadd.f32 %v515, %v516
        %v518 = vrot.slane %v517, 1
        %v519 = vadd.f32 %v517, %v518
        %v520 = vadd.f32 %v478, %v480
        %v521 = vadd.f32 %v520, %v482
        %v522 = vadd.f32 %v521, %v484
        %v523 = vrot.slane %v522, 4
        %v524 = vadd.f32 %v522, %v523
        %v525 = vrot.slane %v524, 2
        %v526 = vadd.f32 %v524, %v525
        %v527 = vrot.slane %v526, 1
        %v528 = vadd.f32 %v526, %v527
        %v531 = vcombine.low %v501, %v510
        %v533 = vunpack.c.l.s4 1966171168
        %v534 = vunpack.c.0.s8 %v533
        %v535 = vlaneseq
        %v536 = vshrl.u32 %v535, 7
        %v537 = vsub.s32 %v534, %v536
        %v538 = vrot.slane %v531, %v537
        %v540 = vunpack.c.l.s4 1966171168
        %v541 = vunpack.c.0.s8 %v540
        %v542 = vlaneseq
        %v543 = vshrl.u32 %v542, 7
        %v544 = vsub.s32 %v541, %v543
        %v545 = vrot.slane %v538, %v544
        %v547 = vlaneseq
        %vm548 = vcmp.ge.s32.totalorder %v547, 0
        %vm549 = vcmp.lt.s32.totalorder %v547, 256
        %vm550 = vmand %vm548, %vm549
        %551 = vst.msk [vmem:[#allocation2] ss:$2 sm:$0x3] %vm550, %v545
        %v554 = vcombine.low %v519, %v528
        %v556 = vunpack.c.l.s4 1966171168
        %v557 = vunpack.c.0.s8 %v556
        %v558 = vlaneseq
        %v559 = vshrl.u32 %v558, 7
        %v560 = vsub.s32 %v557, %v559
        %v561 = vrot.slane %v554, %v560
        %v563 = vunpack.c.l.s4 1966171168
        %v564 = vunpack.c.0.s8 %v563
        %v565 = vlaneseq
        %v566 = vshrl.u32 %v565, 7
        %v567 = vsub.s32 %v564, %v566
        %v568 = vrot.slane %v561, %v567
        %s570 = scalar_lea.vmem [#allocation2], 4
        %571 = vst.msk [vmem:[%s570] ss:$2 sm:$0x3] %vm550, %v568
        %s572 = scalar_lea.vmem %s279, 64 [#allocation4]
        %v573 = vld [vmem:[%s572] sm:$0xff]
        %v574 = vld [vmem:[%s572 + $0x8] sm:$0xff]
        %v575 = vld [vmem:[%s572 + $0x10] sm:$0xff]
        %v576 = vld [vmem:[%s572 + $0x18] sm:$0xff]
        %v577 = vld [vmem:[%s572 + $0x20] sm:$0xff]
        %v578 = vld [vmem:[%s572 + $0x28] sm:$0xff]
        %v579 = vld [vmem:[%s572 + $0x30] sm:$0xff]
        %v580 = vld [vmem:[%s572 + $0x38] sm:$0xff]
        %v581 = vmax.f32 %v573, %v574
        %582 = vmax.xlane.f32.xlu0 %v581
        %v583 = vpop.xlane.xlu0 %582
        %v584 = vmax.f32 %v575, %v576
        %585 = vmax.xlane.f32.xlu0 %v584
        %v586 = vpop.xlane.xlu0 %585
        %v587 = vmax.f32 %v577, %v578
        %588 = vmax.xlane.f32.xlu0 %v587
        %v589 = vpop.xlane.xlu0 %588
        %v590 = vmax.f32 %v579, %v580
        %591 = vmax.xlane.f32.xlu0 %v590
        %v592 = vpop.xlane.xlu0 %591
        %v593 = vadd.f32 %v573, %v574
        %594 = vadd.xlane.f32.xlu0 %v593
        %v595 = vpop.xlane.xlu0 %594
        %v596 = vadd.f32 %v575, %v576
        %597 = vadd.xlane.f32.xlu0 %v596
        %v598 = vpop.xlane.xlu0 %597
        %v599 = vadd.f32 %v577, %v578
        %600 = vadd.xlane.f32.xlu0 %v599
        %v601 = vpop.xlane.xlu0 %600
        %v602 = vadd.f32 %v579, %v580
        %603 = vadd.xlane.f32.xlu0 %v602
        %v604 = vpop.xlane.xlu0 %603
        %v605 = vmul.f32 %v595, 0.00390625
        %v606 = vmul.f32 %v598, 0.00390625
        %v607 = vmul.f32 %v601, 0.00390625
        %v608 = vmul.f32 %v604, 0.00390625
        %v609 = vmul.f32 %v316, %v583
        %v610 = vmul.f32 %v317, %v586
        %v611 = vmul.f32 %v318, %v589
        %v612 = vmul.f32 %v319, %v592
        %v613 = vsel %vm369, %v609, 0.0
        %v614 = vsel %vm369, %v610, 0.0
        %v615 = vadd.f32 %v613, %v614
        %v616 = vsel %vm369, %v611, 0.0
        %v617 = vadd.f32 %v615, %v616
        %v618 = vsel %vm369, %v612, 0.0
        %v619 = vadd.f32 %v617, %v618
        %v620 = vrot.slane %v619, 4
        %v621 = vadd.f32 %v619, %v620
        %v622 = vrot.slane %v621, 2
        %v623 = vadd.f32 %v621, %v622
        %v624 = vrot.slane %v623, 1
        %v625 = vadd.f32 %v623, %v624
        %v626 = vadd.f32 %v625, %v320
        %v627 = vmax.f32 %v626, 0.0
        %v628 = vmul.f32 %v316, %v605
        %v629 = vmul.f32 %v317, %v606
        %v630 = vmul.f32 %v318, %v607
        %v631 = vmul.f32 %v319, %v608
        %v632 = vsel %vm369, %v628, 0.0
        %v633 = vsel %vm369, %v629, 0.0
        %v634 = vadd.f32 %v632, %v633
        %v635 = vsel %vm369, %v630, 0.0
        %v636 = vadd.f32 %v634, %v635
        %v637 = vsel %vm369, %v631, 0.0
        %v638 = vadd.f32 %v636, %v637
        %v639 = vrot.slane %v638, 4
        %v640 = vadd.f32 %v638, %v639
        %v641 = vrot.slane %v640, 2
        %v642 = vadd.f32 %v640, %v641
        %v643 = vrot.slane %v642, 1
        %v644 = vadd.f32 %v642, %v643
        %v645 = vadd.f32 %v644, %v320
        %v646 = vmax.f32 %v645, 0.0
        %v647 = vadd.f32 %v627, %v646
        %v648 = vlaneseq
        %v649 = vshrl.u32 %v648, 7
        %v650 = vsub.s32 0, %v649
        %v651 = vrot.slane %v647, %v650
        %v652 = vmul.f32 %v321, %v651
        %v653 = vmul.f32 %v322, %v651
        %v654 = vmul.f32 %v323, %v651
        %v655 = vmul.f32 %v324, %v651
        %v656 = vsel %vm369, %v652, 0.0
        %657 = vadd.xlane.f32.xlu0 %v656
        %v658 = vpop.xlane.xlu0 %657
        %v659 = vsel %vm369, %v653, 0.0
        %660 = vadd.xlane.f32.xlu0 %v659
        %v661 = vpop.xlane.xlu0 %660
        %v662 = vsel %vm369, %v654, 0.0
        %663 = vadd.xlane.f32.xlu0 %v662
        %v664 = vpop.xlane.xlu0 %663
        %v665 = vsel %vm369, %v655, 0.0
        %666 = vadd.xlane.f32.xlu0 %v665
        %v667 = vpop.xlane.xlu0 %666
        %v668 = vadd.f32 %v658, %v425
        %v669 = vadd.f32 %v661, %v426
        %v670 = vadd.f32 %v664, %v427
        %v671 = vadd.f32 %v667, %v428
        %v672 = vxor.u32 %v668, 2147483648
        %v673 = vxor.u32 %v669, 2147483648
        %v674 = vxor.u32 %v670, 2147483648
        %v675 = vxor.u32 %v671, 2147483648
        %v676 = vmul.f32 %v672, 1.442695
        %v677 = vpow.pop %v676
        %v678 = vmul.f32 %v673, 1.442695
        %v679 = vpow.pop %v678
        %v680 = vmul.f32 %v674, 1.442695
        %v681 = vpow.pop %v680
        %v682 = vmul.f32 %v675, 1.442695
        %v683 = vpow.pop %v682
        %v684 = vadd.f32 %v677, 1.0
        %v685 = vadd.f32 %v679, 1.0
        %v686 = vadd.f32 %v681, 1.0
        %v687 = vadd.f32 %v683, 1.0
        %v688 = vrcp.pop %v684
        %v689 = vmul.f32 1.0, %v688
        %v690 = vrcp.pop %v685
        %v691 = vmul.f32 1.0, %v690
        %v692 = vrcp.pop %v686
        %v693 = vmul.f32 1.0, %v692
        %v694 = vrcp.pop %v687
        %v695 = vmul.f32 1.0, %v694
        %697 = vset.pattern.permute.xlu0 0
        %698 = vperm.xlu0 %697, %v689
        %v699 = vpop.permute.xlu0 %698
        %702 = vset.pattern.permute.xlu0 0
        %703 = vperm.xlu0 %702, %v691
        %v704 = vpop.permute.xlu0 %703
        %707 = vset.pattern.permute.xlu0 0
        %708 = vperm.xlu0 %707, %v693
        %v709 = vpop.permute.xlu0 %708
        %712 = vset.pattern.permute.xlu0 0
        %713 = vperm.xlu0 %712, %v695
        %v714 = vpop.permute.xlu0 %713
        %v716 = vmul.f32 %v573, %v699
        %v717 = vmul.f32 %v574, %v699
        %v718 = vmul.f32 %v575, %v704
        %v719 = vmul.f32 %v576, %v704
        %v720 = vmul.f32 %v577, %v709
        %v721 = vmul.f32 %v578, %v709
        %v722 = vmul.f32 %v579, %v714
        %v723 = vmul.f32 %v580, %v714
        %s724 = scalar_lea.vmem %s313, 64 [#allocation9]
        %725 = vst [vmem:[%s724] sm:$0xff] %v716
        %726 = vst [vmem:[%s724 + $0x8] sm:$0xff] %v717
        %727 = vst [vmem:[%s724 + $0x10] sm:$0xff] %v718
        %728 = vst [vmem:[%s724 + $0x18] sm:$0xff] %v719
        %729 = vst [vmem:[%s724 + $0x20] sm:$0xff] %v720
        %730 = vst [vmem:[%s724 + $0x28] sm:$0xff] %v721
        %731 = vst [vmem:[%s724 + $0x30] sm:$0xff] %v722
        %732 = vst [vmem:[%s724 + $0x38] sm:$0xff] %v723
        %v733 = vmax.f32 %v716, %v720
        %v734 = vmax.f32 %v718, %v722
        %v735 = vmax.f32 %v733, %v734
        %v736 = vrot.slane %v735, 4
        %v737 = vmax.f32 %v735, %v736
        %v738 = vrot.slane %v737, 2
        %v739 = vmax.f32 %v737, %v738
        %v740 = vrot.slane %v739, 1
        %v741 = vmax.f32 %v739, %v740
        %v742 = vmax.f32 %v717, %v721
        %v743 = vmax.f32 %v719, %v723
        %v744 = vmax.f32 %v742, %v743
        %v745 = vrot.slane %v744, 4
        %v746 = vmax.f32 %v744, %v745
        %v747 = vrot.slane %v746, 2
        %v748 = vmax.f32 %v746, %v747
        %v749 = vrot.slane %v748, 1
        %v750 = vmax.f32 %v748, %v749
        %v751 = vadd.f32 %v716, %v718
        %v752 = vadd.f32 %v751, %v720
        %v753 = vadd.f32 %v752, %v722
        %v754 = vrot.slane %v753, 4
        %v755 = vadd.f32 %v753, %v754
        %v756 = vrot.slane %v755, 2
        %v757 = vadd.f32 %v755, %v756
        %v758 = vrot.slane %v757, 1
        %v759 = vadd.f32 %v757, %v758
        %v760 = vadd.f32 %v717, %v719
        %v761 = vadd.f32 %v760, %v721
        %v762 = vadd.f32 %v761, %v723
        %v763 = vrot.slane %v762, 4
        %v764 = vadd.f32 %v762, %v763
        %v765 = vrot.slane %v764, 2
        %v766 = vadd.f32 %v764, %v765
        %v767 = vrot.slane %v766, 1
        %v768 = vadd.f32 %v766, %v767
        %v771 = vcombine.low %v741, %v750
        %v773 = vunpack.c.l.s4 1966171168
        %v774 = vunpack.c.0.s8 %v773
        %v775 = vlaneseq
        %v776 = vshrl.u32 %v775, 7
        %v777 = vsub.s32 %v774, %v776
        %v778 = vrot.slane %v771, %v777
        %v780 = vunpack.c.l.s4 1966171168
        %v781 = vunpack.c.0.s8 %v780
        %v782 = vlaneseq
        %v783 = vshrl.u32 %v782, 7
        %v784 = vsub.s32 %v781, %v783
        %v785 = vrot.slane %v778, %v784
        %s787 = scalar_lea.vmem [#allocation2], 1
        %788 = vst.msk [vmem:[%s787] ss:$2 sm:$0x3] %vm550, %v785
        %v791 = vcombine.low %v759, %v768
        %v793 = vunpack.c.l.s4 1966171168
        %v794 = vunpack.c.0.s8 %v793
        %v795 = vlaneseq
        %v796 = vshrl.u32 %v795, 7
        %v797 = vsub.s32 %v794, %v796
        %v798 = vrot.slane %v791, %v797
        %v800 = vunpack.c.l.s4 1966171168
        %v801 = vunpack.c.0.s8 %v800
        %v802 = vlaneseq
        %v803 = vshrl.u32 %v802, 7
        %v804 = vsub.s32 %v801, %v803
        %v805 = vrot.slane %v798, %v804
        %s807 = scalar_lea.vmem [#allocation2], 5
        %808 = vst.msk [vmem:[%s807] ss:$2 sm:$0x3] %vm550, %v805
        %v809 = vld [vmem:[#allocation2] sm:$0xff]
        %v811 = vcombine.high %v809, %v809
        %v813 = vunpack.c.l.s4 1983009808
        %v814 = vunpack.c.0.s8 %v813
        %v815 = vlaneseq
        %v816 = vshrl.u32 %v815, 7
        %v817 = vsub.s32 %v814, %v816
        %v818 = vrot.slane %v809, %v817
        %v820 = vunpack.c.l.s4 1983009808
        %v821 = vunpack.c.0.s8 %v820
        %v822 = vlaneseq
        %v823 = vshrl.u32 %v822, 7
        %v824 = vsub.s32 %v821, %v823
        %v825 = vrot.slane %v811, %v824
        %v826 = vcombine.high %v818, %v818
        %v827 = vcombine.high %v825, %v825
        %v832 = vpack.c.bf16 %v818, %v818
        %v833 = vpack.c.bf16 %v826, %v826
        %v834 = vpack.c.bf16 %v825, %v825
        %v835 = vpack.c.bf16 %v827, %v827
        %v836 = vld [vmem:[#allocation7] sm:$0xff]
        %v837 = vld [vmem:[#allocation7 + $0x8] sm:$0xff]
        %v838 = vld [vmem:[#allocation7 + $0x10] sm:$0xff]
        %v839 = vld [vmem:[#allocation7 + $0x18] sm:$0xff]
        %v840 = vld [vmem:[#allocation7 + $0x20] sm:$0xff]
        %v841 = vld [vmem:[#allocation7 + $0x28] sm:$0xff]
        %v842 = vld [vmem:[#allocation7 + $0x30] sm:$0xff]
        %v843 = vld [vmem:[#allocation7 + $0x38] sm:$0xff]
        %v844 = vld [vmem:[#allocation7 + $0x40] sm:$0xff]
        %v845 = vld [vmem:[#allocation7 + $0x48] sm:$0xff]
        %v846 = vld [vmem:[#allocation7 + $0x50] sm:$0xff]
        %v847 = vld [vmem:[#allocation7 + $0x58] sm:$0xff]
        %v848 = vld [vmem:[#allocation7 + $0x60] sm:$0xff]
        %v849 = vld [vmem:[#allocation7 + $0x68] sm:$0xff]
        %v850 = vld [vmem:[#allocation7 + $0x70] sm:$0xff]
        %v851 = vld [vmem:[#allocation7 + $0x78] sm:$0xff]
        %v852 = vld [vmem:[#allocation7 + $0x80] sm:$0xff]
        %v853 = vld [vmem:[#allocation7 + $0x88] sm:$0xff]
        %v854 = vld [vmem:[#allocation7 + $0x90] sm:$0xff]
        %v855 = vld [vmem:[#allocation7 + $0x98] sm:$0xff]
        %v856 = vld [vmem:[#allocation7 + $0xa0] sm:$0xff]
        %v857 = vld [vmem:[#allocation7 + $0xa8] sm:$0xff]
        %v858 = vld [vmem:[#allocation7 + $0xb0] sm:$0xff]
        %v859 = vld [vmem:[#allocation7 + $0xb8] sm:$0xff]
        %v860 = vld [vmem:[#allocation7 + $0xc0] sm:$0xff]
        %v861 = vld [vmem:[#allocation7 + $0xc8] sm:$0xff]
        %v862 = vld [vmem:[#allocation7 + $0xd0] sm:$0xff]
        %v863 = vld [vmem:[#allocation7 + $0xd8] sm:$0xff]
        %v864 = vld [vmem:[#allocation7 + $0xe0] sm:$0xff]
        %v865 = vld [vmem:[#allocation7 + $0xe8] sm:$0xff]
        %v866 = vld [vmem:[#allocation7 + $0xf0] sm:$0xff]
        %v867 = vld [vmem:[#allocation7 + $0xf8] sm:$0xff]
        %v868 = vld [vmem:[#allocation7 + $0x100] sm:$0xff]
        %v869 = vld [vmem:[#allocation7 + $0x108] sm:$0xff]
        %v870 = vld [vmem:[#allocation7 + $0x110] sm:$0xff]
        %v871 = vld [vmem:[#allocation7 + $0x118] sm:$0xff]
        %v872 = vld [vmem:[#allocation7 + $0x120] sm:$0xff]
        %v873 = vld [vmem:[#allocation7 + $0x128] sm:$0xff]
        %v874 = vld [vmem:[#allocation7 + $0x130] sm:$0xff]
        %v875 = vld [vmem:[#allocation7 + $0x138] sm:$0xff]
        %v876 = vld [vmem:[#allocation7 + $0x140] sm:$0xff]
        %v877 = vld [vmem:[#allocation7 + $0x148] sm:$0xff]
        %v878 = vld [vmem:[#allocation7 + $0x150] sm:$0xff]
        %v879 = vld [vmem:[#allocation7 + $0x158] sm:$0xff]
        %v880 = vld [vmem:[#allocation7 + $0x160] sm:$0xff]
        %v881 = vld [vmem:[#allocation7 + $0x168] sm:$0xff]
        %v882 = vld [vmem:[#allocation7 + $0x170] sm:$0xff]
        %v883 = vld [vmem:[#allocation7 + $0x178] sm:$0xff]
        %v884 = vld [vmem:[#allocation7 + $0x180] sm:$0xff]
        %v885 = vld [vmem:[#allocation7 + $0x188] sm:$0xff]
        %v886 = vld [vmem:[#allocation7 + $0x190] sm:$0xff]
        %v887 = vld [vmem:[#allocation7 + $0x198] sm:$0xff]
        %v888 = vld [vmem:[#allocation7 + $0x1a0] sm:$0xff]
        %v889 = vld [vmem:[#allocation7 + $0x1a8] sm:$0xff]
        %v890 = vld [vmem:[#allocation7 + $0x1b0] sm:$0xff]
        %v891 = vld [vmem:[#allocation7 + $0x1b8] sm:$0xff]
        %v892 = vld [vmem:[#allocation7 + $0x1c0] sm:$0xff]
        %v893 = vld [vmem:[#allocation7 + $0x1c8] sm:$0xff]
        %v894 = vld [vmem:[#allocation7 + $0x1d0] sm:$0xff]
        %v895 = vld [vmem:[#allocation7 + $0x1d8] sm:$0xff]
        %v896 = vld [vmem:[#allocation7 + $0x1e0] sm:$0xff]
        %v897 = vld [vmem:[#allocation7 + $0x1e8] sm:$0xff]
        %v898 = vld [vmem:[#allocation7 + $0x1f0] sm:$0xff]
        %v899 = vld [vmem:[#allocation7 + $0x1f8] sm:$0xff]
        %s900 = sld [smem:[#allocation3]]
        %v901 = vstv %s900
        %v966 = vunpack.c.l.b16 %v836
        %v967 = vunpack.c.h.b16 %v836
        %v968 = vunpack.c.l.b16 %v837
        %v969 = vunpack.c.h.b16 %v837
        %v970 = vunpack.c.l.b16 %v838
        %v971 = vunpack.c.h.b16 %v838
        %v972 = vunpack.c.l.b16 %v839
        %v973 = vunpack.c.h.b16 %v839
        %v974 = vunpack.c.l.b16 %v840
        %v975 = vunpack.c.h.b16 %v840
        %v976 = vunpack.c.l.b16 %v841
        %v977 = vunpack.c.h.b16 %v841
        %v978 = vunpack.c.l.b16 %v842
        %v979 = vunpack.c.h.b16 %v842
        %v980 = vunpack.c.l.b16 %v843
        %v981 = vunpack.c.h.b16 %v843
        %v982 = vunpack.c.l.b16 %v844
        %v983 = vunpack.c.h.b16 %v844
        %v984 = vunpack.c.l.b16 %v845
        %v985 = vunpack.c.h.b16 %v845
        %v986 = vunpack.c.l.b16 %v846
        %v987 = vunpack.c.h.b16 %v846
        %v988 = vunpack.c.l.b16 %v847
        %v989 = vunpack.c.h.b16 %v847
        %v990 = vunpack.c.l.b16 %v848
        %v991 = vunpack.c.h.b16 %v848
        %v992 = vunpack.c.l.b16 %v849
        %v993 = vunpack.c.h.b16 %v849
        %v994 = vunpack.c.l.b16 %v850
        %v995 = vunpack.c.h.b16 %v850
        %v996 = vunpack.c.l.b16 %v851
        %v997 = vunpack.c.h.b16 %v851
        %v998 = vunpack.c.l.b16 %v852
        %v999 = vunpack.c.h.b16 %v852
        %v1000 = vunpack.c.l.b16 %v853
        %v1001 = vunpack.c.h.b16 %v853
        %v1002 = vunpack.c.l.b16 %v854
        %v1003 = vunpack.c.h.b16 %v854
        %v1004 = vunpack.c.l.b16 %v855
        %v1005 = vunpack.c.h.b16 %v855
        %v1006 = vunpack.c.l.b16 %v856
        %v1007 = vunpack.c.h.b16 %v856
        %v1008 = vunpack.c.l.b16 %v857
        %v1009 = vunpack.c.h.b16 %v857
        %v1010 = vunpack.c.l.b16 %v858
        %v1011 = vunpack.c.h.b16 %v858
        %v1012 = vunpack.c.l.b16 %v859
        %v1013 = vunpack.c.h.b16 %v859
        %v1014 = vunpack.c.l.b16 %v860
        %v1015 = vunpack.c.h.b16 %v860
        %v1016 = vunpack.c.l.b16 %v861
        %v1017 = vunpack.c.h.b16 %v861
        %v1018 = vunpack.c.l.b16 %v862
        %v1019 = vunpack.c.h.b16 %v862
        %v1020 = vunpack.c.l.b16 %v863
        %v1021 = vunpack.c.h.b16 %v863
        %v1022 = vunpack.c.l.b16 %v864
        %v1023 = vunpack.c.h.b16 %v864
        %v1024 = vunpack.c.l.b16 %v865
        %v1025 = vunpack.c.h.b16 %v865
        %v1026 = vunpack.c.l.b16 %v866
        %v1027 = vunpack.c.h.b16 %v866
        %v1028 = vunpack.c.l.b16 %v867
        %v1029 = vunpack.c.h.b16 %v867
        %v1030 = vunpack.c.l.b16 %v868
        %v1031 = vunpack.c.h.b16 %v868
        %v1032 = vunpack.c.l.b16 %v869
        %v1033 = vunpack.c.h.b16 %v869
        %v1034 = vunpack.c.l.b16 %v870
        %v1035 = vunpack.c.h.b16 %v870
        %v1036 = vunpack.c.l.b16 %v871
        %v1037 = vunpack.c.h.b16 %v871
        %v1038 = vunpack.c.l.b16 %v872
        %v1039 = vunpack.c.h.b16 %v872
        %v1040 = vunpack.c.l.b16 %v873
        %v1041 = vunpack.c.h.b16 %v873
        %v1042 = vunpack.c.l.b16 %v874
        %v1043 = vunpack.c.h.b16 %v874
        %v1044 = vunpack.c.l.b16 %v875
        %v1045 = vunpack.c.h.b16 %v875
        %v1046 = vunpack.c.l.b16 %v876
        %v1047 = vunpack.c.h.b16 %v876
        %v1048 = vunpack.c.l.b16 %v877
        %v1049 = vunpack.c.h.b16 %v877
        %v1050 = vunpack.c.l.b16 %v878
        %v1051 = vunpack.c.h.b16 %v878
        %v1052 = vunpack.c.l.b16 %v879
        %v1053 = vunpack.c.h.b16 %v879
        %v1054 = vunpack.c.l.b16 %v880
        %v1055 = vunpack.c.h.b16 %v880
        %v1056 = vunpack.c.l.b16 %v881
        %v1057 = vunpack.c.h.b16 %v881
        %v1058 = vunpack.c.l.b16 %v882
        %v1059 = vunpack.c.h.b16 %v882
        %v1060 = vunpack.c.l.b16 %v883
        %v1061 = vunpack.c.h.b16 %v883
        %v1062 = vunpack.c.l.b16 %v884
        %v1063 = vunpack.c.h.b16 %v884
        %v1064 = vunpack.c.l.b16 %v885
        %v1065 = vunpack.c.h.b16 %v885
        %v1066 = vunpack.c.l.b16 %v886
        %v1067 = vunpack.c.h.b16 %v886
        %v1068 = vunpack.c.l.b16 %v887
        %v1069 = vunpack.c.h.b16 %v887
        %v1070 = vunpack.c.l.b16 %v888
        %v1071 = vunpack.c.h.b16 %v888
        %v1072 = vunpack.c.l.b16 %v889
        %v1073 = vunpack.c.h.b16 %v889
        %v1074 = vunpack.c.l.b16 %v890
        %v1075 = vunpack.c.h.b16 %v890
        %v1076 = vunpack.c.l.b16 %v891
        %v1077 = vunpack.c.h.b16 %v891
        %v1078 = vunpack.c.l.b16 %v892
        %v1079 = vunpack.c.h.b16 %v892
        %v1080 = vunpack.c.l.b16 %v893
        %v1081 = vunpack.c.h.b16 %v893
        %v1082 = vunpack.c.l.b16 %v894
        %v1083 = vunpack.c.h.b16 %v894
        %v1084 = vunpack.c.l.b16 %v895
        %v1085 = vunpack.c.h.b16 %v895
        %v1086 = vunpack.c.l.b16 %v896
        %v1087 = vunpack.c.h.b16 %v896
        %v1088 = vunpack.c.l.b16 %v897
        %v1089 = vunpack.c.h.b16 %v897
        %v1090 = vunpack.c.l.b16 %v898
        %v1091 = vunpack.c.h.b16 %v898
        %v1092 = vunpack.c.l.b16 %v899
        %v1093 = vunpack.c.h.b16 %v899
        %v1094 = vpack.c.b16 %v968, %v966
        %v1095 = vpack.c.b16 %v969, %v967
        %v1096 = vpack.c.b16 %v972, %v970
        %v1097 = vpack.c.b16 %v973, %v971
        %v1098 = vpack.c.b16 %v976, %v974
        %v1099 = vpack.c.b16 %v977, %v975
        %v1100 = vpack.c.b16 %v980, %v978
        %v1101 = vpack.c.b16 %v981, %v979
        %v1102 = vpack.c.b16 %v984, %v982
        %v1103 = vpack.c.b16 %v985, %v983
        %v1104 = vpack.c.b16 %v988, %v986
        %v1105 = vpack.c.b16 %v989, %v987
        %v1106 = vpack.c.b16 %v992, %v990
        %v1107 = vpack.c.b16 %v993, %v991
        %v1108 = vpack.c.b16 %v996, %v994
        %v1109 = vpack.c.b16 %v997, %v995
        %v1110 = vpack.c.b16 %v1000, %v998
        %v1111 = vpack.c.b16 %v1001, %v999
        %v1112 = vpack.c.b16 %v1004, %v1002
        %v1113 = vpack.c.b16 %v1005, %v1003
        %v1114 = vpack.c.b16 %v1008, %v1006
        %v1115 = vpack.c.b16 %v1009, %v1007
        %v1116 = vpack.c.b16 %v1012, %v1010
        %v1117 = vpack.c.b16 %v1013, %v1011
        %v1118 = vpack.c.b16 %v1016, %v1014
        %v1119 = vpack.c.b16 %v1017, %v1015
        %v1120 = vpack.c.b16 %v1020, %v1018
        %v1121 = vpack.c.b16 %v1021, %v1019
        %v1122 = vpack.c.b16 %v1024, %v1022
        %v1123 = vpack.c.b16 %v1025, %v1023
        %v1124 = vpack.c.b16 %v1028, %v1026
        %v1125 = vpack.c.b16 %v1029, %v1027
        %v1126 = vpack.c.b16 %v1032, %v1030
        %v1127 = vpack.c.b16 %v1033, %v1031
        %v1128 = vpack.c.b16 %v1036, %v1034
        %v1129 = vpack.c.b16 %v1037, %v1035
        %v1130 = vpack.c.b16 %v1040, %v1038
        %v1131 = vpack.c.b16 %v1041, %v1039
        %v1132 = vpack.c.b16 %v1044, %v1042
        %v1133 = vpack.c.b16 %v1045, %v1043
        %v1134 = vpack.c.b16 %v1048, %v1046
        %v1135 = vpack.c.b16 %v1049, %v1047
        %v1136 = vpack.c.b16 %v1052, %v1050
        %v1137 = vpack.c.b16 %v1053, %v1051
        %v1138 = vpack.c.b16 %v1056, %v1054
        %v1139 = vpack.c.b16 %v1057, %v1055
        %v1140 = vpack.c.b16 %v1060, %v1058
        %v1141 = vpack.c.b16 %v1061, %v1059
        %v1142 = vpack.c.b16 %v1064, %v1062
        %v1143 = vpack.c.b16 %v1065, %v1063
        %v1144 = vpack.c.b16 %v1068, %v1066
        %v1145 = vpack.c.b16 %v1069, %v1067
        %v1146 = vpack.c.b16 %v1072, %v1070
        %v1147 = vpack.c.b16 %v1073, %v1071
        %v1148 = vpack.c.b16 %v1076, %v1074
        %v1149 = vpack.c.b16 %v1077, %v1075
        %v1150 = vpack.c.b16 %v1080, %v1078
        %v1151 = vpack.c.b16 %v1081, %v1079
        %v1152 = vpack.c.b16 %v1084, %v1082
        %v1153 = vpack.c.b16 %v1085, %v1083
        %v1154 = vpack.c.b16 %v1088, %v1086
        %v1155 = vpack.c.b16 %v1089, %v1087
        %v1156 = vpack.c.b16 %v1092, %v1090
        %v1157 = vpack.c.b16 %v1093, %v1091
        %1222 = vmatprep.subr.bf16.mxu0 %v1095
        %1223 = vmatpush1.bf16.msra.mxu0 %v1094
        %1224 = vmatprep.subr.bf16.mxu0 %v1097
        %1225 = vmatpush1.bf16.msra.mxu0 %v1096
        %1226 = vmatprep.subr.bf16.mxu0 %v1099
        %1227 = vmatpush1.bf16.msra.mxu0 %v1098
        %1228 = vmatprep.subr.bf16.mxu0 %v1101
        %1229 = vmatpush1.bf16.msra.mxu0 %v1100
        %1230 = vmatprep.subr.bf16.mxu0 %v1103
        %1231 = vmatpush1.bf16.msra.mxu0 %v1102
        %1232 = vmatprep.subr.bf16.mxu0 %v1105
        %1233 = vmatpush1.bf16.msra.mxu0 %v1104
        %1234 = vmatprep.subr.bf16.mxu0 %v1107
        %1235 = vmatpush1.bf16.msra.mxu0 %v1106
        %1236 = vmatprep.subr.bf16.mxu0 %v1109
        %1237 = vmatpush1.bf16.msra.mxu0 %v1108
        %1238 = vmatprep.subr.bf16.mxu0 %v1111
        %1239 = vmatpush1.bf16.msra.mxu0 %v1110
        %1240 = vmatprep.subr.bf16.mxu0 %v1113
        %1241 = vmatpush1.bf16.msra.mxu0 %v1112
        %1242 = vmatprep.subr.bf16.mxu0 %v1115
        %1243 = vmatpush1.bf16.msra.mxu0 %v1114
        %1244 = vmatprep.subr.bf16.mxu0 %v1117
        %1245 = vmatpush1.bf16.msra.mxu0 %v1116
        %1246 = vmatprep.subr.bf16.mxu0 %v1119
        %1247 = vmatpush1.bf16.msra.mxu0 %v1118
        %1248 = vmatprep.subr.bf16.mxu0 %v1121
        %1249 = vmatpush1.bf16.msra.mxu0 %v1120
        %1250 = vmatprep.subr.bf16.mxu0 %v1123
        %1251 = vmatpush1.bf16.msra.mxu0 %v1122
        %1252 = vmatprep.subr.bf16.mxu0 %v1125
        %1253 = vmatpush1.bf16.msra.mxu0 %v1124
        %1254 = vmatprep.mubr.bf16.mxu0 %v833
        %1255 = vmatmul.mubr.bf16.gmra.mrb[0].mxu0 %v832
        %v1256 = vpop.f32.mrb[0].mxu0
        %v1257 = vadd.f32 %v901, %v1256
        %v1258 = vpop.f32.mrb[0].mxu0
        %v1259 = vadd.f32 %v901, %v1258
        %v1260 = vpop.f32.mrb[0].mxu0
        %v1261 = vpop.f32.mrb[0].mxu0
        %1262 = vdwg.mxu0
        %1263 = vmatprep.subr.bf16.mxu0 %v1127
        %1264 = vmatpush1.bf16.msra.mxu0 %v1126
        %1265 = vmatprep.subr.bf16.mxu0 %v1129
        %1266 = vmatpush1.bf16.msra.mxu0 %v1128
        %1267 = vmatprep.subr.bf16.mxu0 %v1131
        %1268 = vmatpush1.bf16.msra.mxu0 %v1130
        %1269 = vmatprep.subr.bf16.mxu0 %v1133
        %1270 = vmatpush1.bf16.msra.mxu0 %v1132
        %1271 = vmatprep.subr.bf16.mxu0 %v1135
        %1272 = vmatpush1.bf16.msra.mxu0 %v1134
        %1273 = vmatprep.subr.bf16.mxu0 %v1137
        %1274 = vmatpush1.bf16.msra.mxu0 %v1136
        %1275 = vmatprep.subr.bf16.mxu0 %v1139
        %1276 = vmatpush1.bf16.msra.mxu0 %v1138
        %1277 = vmatprep.subr.bf16.mxu0 %v1141
        %1278 = vmatpush1.bf16.msra.mxu0 %v1140
        %1279 = vmatprep.subr.bf16.mxu0 %v1143
        %1280 = vmatpush1.bf16.msra.mxu0 %v1142
        %1281 = vmatprep.subr.bf16.mxu0 %v1145
        %1282 = vmatpush1.bf16.msra.mxu0 %v1144
        %1283 = vmatprep.subr.bf16.mxu0 %v1147
        %1284 = vmatpush1.bf16.msra.mxu0 %v1146
        %1285 = vmatprep.subr.bf16.mxu0 %v1149
        %1286 = vmatpush1.bf16.msra.mxu0 %v1148
        %1287 = vmatprep.subr.bf16.mxu0 %v1151
        %1288 = vmatpush1.bf16.msra.mxu0 %v1150
        %1289 = vmatprep.subr.bf16.mxu0 %v1153
        %1290 = vmatpush1.bf16.msra.mxu0 %v1152
        %1291 = vmatprep.subr.bf16.mxu0 %v1155
        %1292 = vmatpush1.bf16.msra.mxu0 %v1154
        %1293 = vmatprep.subr.bf16.mxu0 %v1157
        %1294 = vmatpush1.bf16.msra.mxu0 %v1156
        %1295 = vmatprep.mubr.bf16.mxu0 %v835
        %1296 = vmatmul.mubr.bf16.gmra.mrb[0].mxu0 %v834
        %v1297 = vpop.f32.mrb[0].mxu0
        %v1298 = vadd.f32 %v1257, %v1297
        %v1299 = vpop.f32.mrb[0].mxu0
        %v1300 = vadd.f32 %v1259, %v1299
        %v1301 = vpop.f32.mrb[0].mxu0
        %v1302 = vpop.f32.mrb[0].mxu0
        %1303 = vdwg.mxu0
        %v1304 = vxor.u32 %v1298, 2147483648
        %v1305 = vxor.u32 %v1300, 2147483648
        %v1306 = vmul.f32 %v1304, 1.442695
        %v1307 = vpow.pop %v1306
        %v1308 = vmul.f32 %v1305, 1.442695
        %v1309 = vpow.pop %v1308
        %v1310 = vadd.f32 %v1307, 1.0
        %v1311 = vadd.f32 %v1309, 1.0
        %v1312 = vrcp.pop %v1310
        %v1313 = vmul.f32 1.0, %v1312
        %v1314 = vrcp.pop %v1311
        %v1315 = vmul.f32 1.0, %v1314
        %v1316 = vld [vmem:[%s313] sm:$0xff]
        %v1317 = vld [vmem:[%s313 + $0x8] sm:$0xff]
        %v1318 = vld [vmem:[%s313 + $0x10] sm:$0xff]
        %v1319 = vld [vmem:[%s313 + $0x18] sm:$0xff]
        %v1320 = vld [vmem:[%s313 + $0x20] sm:$0xff]
        %v1321 = vld [vmem:[%s313 + $0x28] sm:$0xff]
        %v1322 = vld [vmem:[%s313 + $0x30] sm:$0xff]
        %v1323 = vld [vmem:[%s313 + $0x38] sm:$0xff]
        %v1324 = vlaneseq
        %v1325 = vshrl.u32 %v1324, 7
        %v1326 = vsub.s32 0, %v1325
        %v1327 = vrot.slane %v1313, %v1326
        %v1328 = vlaneseq
        %v1329 = vshrl.u32 %v1328, 7
        %v1330 = vsub.s32 0, %v1329
        %v1331 = vrot.slane %v1315, %v1330
        %v1332 = vmul.f32 %v1316, %v1327
        %v1333 = vmul.f32 %v1317, %v1331
        %v1334 = vmul.f32 %v1318, %v1327
        %v1335 = vmul.f32 %v1319, %v1331
        %v1336 = vmul.f32 %v1320, %v1327
        %v1337 = vmul.f32 %v1321, %v1331
        %v1338 = vmul.f32 %v1322, %v1327
        %v1339 = vmul.f32 %v1323, %v1331
        %1340 = vst [vmem:[%s313] sm:$0xff] %v1332
        %1341 = vst [vmem:[%s313 + $0x8] sm:$0xff] %v1333
        %1342 = vst [vmem:[%s313 + $0x10] sm:$0xff] %v1334
        %1343 = vst [vmem:[%s313 + $0x18] sm:$0xff] %v1335
        %1344 = vst [vmem:[%s313 + $0x20] sm:$0xff] %v1336
        %1345 = vst [vmem:[%s313 + $0x28] sm:$0xff] %v1337
        %1346 = vst [vmem:[%s313 + $0x30] sm:$0xff] %v1338
        %1347 = vst [vmem:[%s313 + $0x38] sm:$0xff] %v1339
        %v1348 = vld [vmem:[%s724] sm:$0xff]
        %v1349 = vld [vmem:[%s724 + $0x8] sm:$0xff]
        %v1350 = vld [vmem:[%s724 + $0x10] sm:$0xff]
        %v1351 = vld [vmem:[%s724 + $0x18] sm:$0xff]
        %v1352 = vld [vmem:[%s724 + $0x20] sm:$0xff]
        %v1353 = vld [vmem:[%s724 + $0x28] sm:$0xff]
        %v1354 = vld [vmem:[%s724 + $0x30] sm:$0xff]
        %v1355 = vld [vmem:[%s724 + $0x38] sm:$0xff]
        %v1356 = vlaneseq
        %v1357 = vshrl.u32 %v1356, 7
        %v1358 = vsub.s32 1, %v1357
        %v1359 = vrot.slane %v1313, %v1358
        %v1360 = vlaneseq
        %v1361 = vshrl.u32 %v1360, 7
        %v1362 = vsub.s32 1, %v1361
        %v1363 = vrot.slane %v1315, %v1362
        %v1364 = vmul.f32 %v1348, %v1359
        %v1365 = vmul.f32 %v1349, %v1363
        %v1366 = vmul.f32 %v1350, %v1359
        %v1367 = vmul.f32 %v1351, %v1363
        %v1368 = vmul.f32 %v1352, %v1359
        %v1369 = vmul.f32 %v1353, %v1363
        %v1370 = vmul.f32 %v1354, %v1359
        %v1371 = vmul.f32 %v1355, %v1363
        %1372 = vst [vmem:[%s724] sm:$0xff] %v1364
        %1373 = vst [vmem:[%s724 + $0x8] sm:$0xff] %v1365
        %1374 = vst [vmem:[%s724 + $0x10] sm:$0xff] %v1366
        %1375 = vst [vmem:[%s724 + $0x18] sm:$0xff] %v1367
        %1376 = vst [vmem:[%s724 + $0x20] sm:$0xff] %v1368
        %1377 = vst [vmem:[%s724 + $0x28] sm:$0xff] %v1369
        %1378 = vst [vmem:[%s724 + $0x30] sm:$0xff] %v1370
        %1379 = vst [vmem:[%s724 + $0x38] sm:$0xff] %v1371
        %s1380 = sand.u32 %s186, 1
        %s1381 = scalar_lea.sflag [#allocation6], %s1380
        %s1382 = sand.u32 %s186, 1
        %s1383 = smul.addr %s1382, 128
        %s1384 = scalar_lea.vmem [#allocation9], %s1383
        // Predicated region
        $region57: #{tpu_custom_call.1} parent=47 // pred_check
          %p1385 = pneg %p196
        $region58: #{tpu_custom_call.1} parent=47 // pred_check_branch
          %1387 = sbr.rel (%p1385) target = $region60
        $region59: #{tpu_custom_call.1} parent=47 // pred_region
          %s1388 = smul.u32 2, %s26
          %s1390 = ssub.s32 2048, 2048
          %1391 = vsyncadd %s1381, %s1390
          %s1392 = smul.addr %s1388, 8
          %s1393 = smul.addr %s1392, 128
          %s1394 = scalar_lea.hbm %s7, %s1393
          %s1395 = sshll.u32 %s1384, 4
          %s1396 = int_to_ptr.vmem [resolvable:$true] %s1395
          %1401 = dma.vmem_to_hbm [thread:$0]  %s1396, 2048, %s1394, %s1381, 256, 256, 16
        $region60: #{tpu_custom_call.1} parent=47 // pred_fallthru
          _
      $region48: #{tpu_custom_call.1} parent=5 // pred_fallthru
        _
      %p1402 = scmp.le.s32.totalorder 2, %s21
      // Predicated region
      $region61: #{tpu_custom_call.1} parent=5 // pred_check
        %p1403 = pneg %p1402
      $region62: #{tpu_custom_call.1} parent=5 // pred_check_branch
        %1405 = sbr.rel (%p1403) target = $region64
      $region63: #{tpu_custom_call.1} parent=5 // pred_region
        %s1406 = ssub.s32 %s21, 2
        // Predicated region
        $region65: #{tpu_custom_call.1} parent=63 // pred_check
          %p1407 = pneg %p202
        $region66: #{tpu_custom_call.1} parent=63 // pred_check_branch
          %1409 = sbr.rel (%p1407) target = $region68
        $region67: #{tpu_custom_call.1} parent=63 // pred_region
          %s1410 = sand.u32 %s187, 1
          %s1411 = scalar_lea.sflag [#allocation6], %s1410
          %s1412 = sand.u32 %s187, 1
          %s1413 = smul.addr %s1412, 128
          %s1414 = scalar_lea.vmem [#allocation9], %s1413
          %1415 = dma.done %s1411, 2048
        $region68: #{tpu_custom_call.1} parent=63 // pred_fallthru
          _
      $region64: #{tpu_custom_call.1} parent=5 // pred_fallthru
        _
    $region6: #{tpu_custom_call.1} parent=1 // loop_footer
      %s25 = sadd.s32 1, %s21
    $region7: #{tpu_custom_call.1} parent=1 // loop_footer_branch
      %20 = sbr.rel target = $region3
    $region8: #{tpu_custom_call.1} parent=1 // loop_exit
      _
    %1416 = vsyncpa [#allocation5], 1
    %s1417 = scalar_lea.sflag [#allocation5], 1
    %1418 = vsyncpa %s1417, 1
    %1419 = vsyncpa [#allocation8], 1
    %1420 = vsyncpa [#allocation6], 1
    %s1421 = scalar_lea.sflag [#allocation6], 1
    %1422 = vsyncpa %s1421, 1

</llo_original>
